<compile_context>
chip_gen: v7x
topology: tpu7x:2x2x1
jax: 0.10.0
libtpu: 0.0.40
codegen_flags: <defaults>
</compile_context>

<pallas_src>
import functools

import jax
import jax.numpy as jnp
from jax import lax
from jax.experimental import pallas as pl
from jax.experimental.pallas import tpu as pltpu


def _stack_taps(t, stk_ref, masks_ref, shifts, c):
    """Write the 9 shifted+masked copies of t (c, HW) into stk_ref (9*c, HW).

    Spatial shifts are static lane rolls of the flattened H*W axis (XLU op);
    zero padding at the image border is applied via a precomputed per-tap mask.
    All scratch stores are sublane-aligned (offsets are multiples of c, c%8==0)
    and lane-dense.
    """
    for k, s in enumerate(shifts):
        v = t if s == 0 else pltpu.roll(t, shift=s, axis=1)
        stk_ref[k * c:(k + 1) * c, :] = v * masks_ref[k:k + 1, :]


def ra_kernel(x_ref, y_ref, masks_ref, w1_ref, sh1_ref,
              wA_ref, shA_ref, wB_ref, shB_ref, wC_ref, shC_ref,
              wD_ref, bD_ref, out_ref, stk_ref, *, cmid, shifts):
    yv = y_ref[0]                                      # (1, HW), lane-dense

    # a = sigmoid(-y)  (numerically stable form)
    e = jnp.exp(-jnp.abs(yv))
    r = 1.0 / (1.0 + e)
    a = jnp.where(yv >= 0.0, e * r, r)

    # convert: 1x1 conv (BN scale pre-folded into w1) + shift + ReLU, then
    # reverse-attention gating (a broadcast over the channel/sublane axis).
    t = jnp.dot(w1_ref[...], x_ref[0], preferred_element_type=jnp.float32)   # (C, HW)
    t = jnp.maximum(t + sh1_ref[...], 0.0) * a

    # three (conv3x3 + BN + ReLU) stages, each as a single K = 9*C matmul
    for w_ref, sh_ref in ((wA_ref, shA_ref), (wB_ref, shB_ref), (wC_ref, shC_ref)):
        _stack_taps(t, stk_ref, masks_ref, shifts, cmid)
        t = jnp.dot(w_ref[...], stk_ref[...], preferred_element_type=jnp.float32)
        t = jnp.maximum(t + sh_ref[...], 0.0)

    # final conv3x3 (C -> 1 channel): elementwise multiply + cross-sublane reduce
    _stack_taps(t, stk_ref, masks_ref, shifts, cmid)
    d = jnp.sum(stk_ref[...] * wD_ref[...], axis=0, keepdims=True) + bD_ref[...]

    out_ref[0] = yv + d                                # (1, HW), unmasked store


def make_params(key, in_channel, out_channel):
    """Weights mirroring the PyTorch module (eval-mode BatchNorm).

    Conv weights: kaiming-normal, zero bias (per weight_init).  BatchNorm stats
    are randomized (so the scale/shift folding is actually exercised) and
    reduced to per-channel (scale, shift) pairs.
    """
    C = out_channel
    eps = 1e-5
    kconv, kbn = jax.random.split(key, 2)
    kw = jax.random.split(kconv, 5)
    kb = jax.random.split(kbn, 4)

    def kaiming(k, shape, fan_in):
        return jax.random.normal(k, shape, jnp.float32) * jnp.sqrt(2.0 / fan_in)

    def bn_fold(k):
        kg, kbeta, km, kv = jax.random.split(k, 4)
        gamma = 1.0 + 0.1 * jax.random.normal(kg, (C,), jnp.float32)
        beta = 0.1 * jax.random.normal(kbeta, (C,), jnp.float32)
        mean = 0.1 * jax.random.normal(km, (C,), jnp.float32)
        var = 1.0 + 0.1 * jax.random.uniform(kv, (C,), jnp.float32)
        scale = gamma / jnp.sqrt(var + eps)
        shift = beta - mean * scale
        return scale, shift

    w1 = kaiming(kw[0], (in_channel, C), in_channel)          # 1x1 conv, (Cin, Cout)
    wA = kaiming(kw[1], (3, 3, C, C), 9 * C)                  # HWIO
    wB = kaiming(kw[2], (3, 3, C, C), 9 * C)
    wC = kaiming(kw[3], (3, 3, C, C), 9 * C)
    wD = kaiming(kw[4], (3, 3, C, 1), 9 * C)
    s1, h1 = bn_fold(kb[0])
    sA, hA = bn_fold(kb[1])
    sB, hB = bn_fold(kb[2])
    sC, hC = bn_fold(kb[3])

    return dict(w1=w1, scale1=s1, shift1=h1,
                wA=wA, scaleA=sA, shiftA=hA,
                wB=wB, scaleB=sB, shiftB=hB,
                wC=wC, scaleC=sC, shiftC=hC,
                wD=wD, bD=jnp.float32(0.0))


def ra_forward(x_nchw, y_nchw, params):
    B, Cin, H, W = x_nchw.shape
    C = params["w1"].shape[1]
    HW = H * W

    # NCHW -> channel-major with spatial flattened onto lanes (pure reshape).
    x = x_nchw.reshape(B, Cin, HW).astype(jnp.float32)
    y = y_nchw.reshape(B, 1, HW).astype(jnp.float32)

    # ---- host-side weight prep: fold BN scale, channel-major matmul layout ----
    w1 = (params["w1"].T * params["scale1"][:, None]).astype(jnp.float32)     # (C, Cin)
    sh1 = params["shift1"].reshape(C, 1).astype(jnp.float32)

    def pack3x3(w_hwio, scale):
        # (3,3,Ci,Co) HWIO -> (Co, 9*Ci) with column order (dy, dx, ci); BN scale folded.
        co, ci = w_hwio.shape[3], w_hwio.shape[2]
        w = jnp.transpose(w_hwio, (3, 0, 1, 2)).reshape(co, 9 * ci)
        return (w * scale[:, None]).astype(jnp.float32)

    wA = pack3x3(params["wA"], params["scaleA"])
    shA = params["shiftA"].reshape(C, 1).astype(jnp.float32)
    wB = pack3x3(params["wB"], params["scaleB"])
    shB = params["shiftB"].reshape(C, 1).astype(jnp.float32)
    wC = pack3x3(params["wC"], params["scaleC"])
    shC = params["shiftC"].reshape(C, 1).astype(jnp.float32)
    wD = params["wD"].reshape(9 * C, 1).astype(jnp.float32)                   # (9C, 1)
    bD = jnp.full((1, 1), params["bD"], jnp.float32)

    # ---- 3x3 tap bookkeeping: lane-roll amounts + zero-padding boundary masks ----
    hh = jnp.arange(H).reshape(H, 1)
    ww = jnp.arange(W).reshape(1, W)
    mask_rows, shifts = [], []
    for dyi in range(3):
        for dxi in range(3):
            dy, dx = dyi - 1, dxi - 1
            m = ((hh + dy >= 0) & (hh + dy < H) & (ww + dx >= 0) & (ww + dx < W))
            mask_rows.append(m.astype(jnp.float32).reshape(HW))
            shifts.append((-(dy * W + dx)) % HW)   # result[p] = t[p + dy*W + dx]
    masks = jnp.stack(mask_rows)                   # (9, HW)
    shifts = tuple(shifts)

    kern = functools.partial(ra_kernel, cmid=C, shifts=shifts)

    def const(shape):
        return pl.BlockSpec(shape, lambda b, _n=len(shape): (0,) * _n)

    out = pl.pallas_call(
        kern,
        out_shape=jax.ShapeDtypeStruct((B, 1, HW), jnp.float32),
        grid=(B,),
        in_specs=[
            pl.BlockSpec((1, Cin, HW), lambda b: (b, 0, 0)),     # x  (Cin, HW)
            pl.BlockSpec((1, 1, HW), lambda b: (b, 0, 0)),       # y  (1, HW)
            const((9, HW)),                                      # tap masks
            const((C, Cin)), const((C, 1)),                      # convert + shift
            const((C, 9 * C)), const((C, 1)),                    # conv A + shift
            const((C, 9 * C)), const((C, 1)),                    # conv B + shift
            const((C, 9 * C)), const((C, 1)),                    # conv C + shift
            const((9 * C, 1)), const((1, 1)),                    # conv D + bias
        ],
        out_specs=pl.BlockSpec((1, 1, HW), lambda b: (b, 0, 0)),
        scratch_shapes=[pltpu.VMEM((9 * C, HW), jnp.float32)],   # im2col stack
        compiler_params=pltpu.CompilerParams(dimension_semantics=("parallel",)),
    )(x, y, masks, w1, sh1, wA, shA, wB, shB, wC, shC, wD, bD)

    return out.reshape(B, 1, H, W)


def ra_reference(x_nchw, y_nchw, params):
    """Pure-JAX reference (lax.conv, HIGHEST precision) mirroring the PyTorch module."""
    dn = ("NHWC", "HWIO", "NHWC")
    xh = jnp.transpose(x_nchw, (0, 2, 3, 1)).astype(jnp.float32)
    yh = jnp.transpose(y_nchw, (0, 2, 3, 1)).astype(jnp.float32)
    a = jax.nn.sigmoid(-yh)

    t = jnp.einsum("bhwc,cd->bhwd", xh, params["w1"],
                   precision=lax.Precision.HIGHEST)
    t = jnp.maximum(t * params["scale1"] + params["shift1"], 0.0)
    t = t * a

    def c3(v, w):
        return lax.conv_general_dilated(v, w, (1, 1), "SAME", dimension_numbers=dn,
                                        precision=lax.Precision.HIGHEST)

    for wk, sk, hk in (("wA", "scaleA", "shiftA"),
                       ("wB", "scaleB", "shiftB"),
                       ("wC", "scaleC", "shiftC")):
        t = jnp.maximum(c3(t, params[wk]) * params[sk] + params[hk], 0.0)
    d = c3(t, params["wD"]) + params["bD"]
    return jnp.transpose(yh + d, (0, 3, 1, 2))


if __name__ == "__main__":
    key = jax.random.PRNGKey(0)
    B, Cin, C, H, W = 2, 4, 16, 16, 16
    kx, ky, kp = jax.random.split(key, 3)
    x = jax.random.normal(kx, (B, Cin, H, W), jnp.float32)
    y = jax.random.normal(ky, (B, 1, H, W), jnp.float32)
    params = make_params(kp, Cin, C)

    out = jax.block_until_ready(ra_forward(x, y, params))
    ref = ra_reference(x, y, params)

    assert out.shape == (B, 1, H, W), out.shape
    max_err = float(jnp.max(jnp.abs(out - ref)))
    assert jnp.allclose(out, ref, atol=1e-3, rtol=1e-3), max_err
    print("KERNEL_OK")
</pallas_src>

<mosaic_0001>
module attributes {stable_mosaic.version = 11 : i64} {
  func.func @ra_kernel(%arg0: i32, %arg1: memref<1x4x256xf32, #tpu.memory_space<vmem>>, %arg2: memref<1x1x256xf32, #tpu.memory_space<vmem>>, %arg3: memref<9x256xf32, #tpu.memory_space<vmem>>, %arg4: memref<16x4xf32, #tpu.memory_space<vmem>>, %arg5: memref<16x1xf32, #tpu.memory_space<vmem>>, %arg6: memref<16x144xf32, #tpu.memory_space<vmem>>, %arg7: memref<16x1xf32, #tpu.memory_space<vmem>>, %arg8: memref<16x144xf32, #tpu.memory_space<vmem>>, %arg9: memref<16x1xf32, #tpu.memory_space<vmem>>, %arg10: memref<16x144xf32, #tpu.memory_space<vmem>>, %arg11: memref<16x1xf32, #tpu.memory_space<vmem>>, %arg12: memref<144x1xf32, #tpu.memory_space<vmem>>, %arg13: memref<1x1xf32, #tpu.memory_space<vmem>>, %arg14: memref<1x1x256xf32, #tpu.memory_space<vmem>>, %arg15: memref<144x256xf32, #tpu.memory_space<vmem>>) attributes {dimension_semantics = [#tpu.dimension_semantics<parallel>], iteration_bounds = array<i64: 2>, scalar_prefetch = 0 : i64, scratch_operands = 1 : i64, tpu.core_type = #tpu.core_type<tc>, window_params = [{transform_indices = @transform_0, window_bounds = array<i64: 1, 4, 256>}, {transform_indices = @transform_1, window_bounds = array<i64: 1, 1, 256>}, {pipeline_mode = #tpu.pipeline_mode<synchronous>, transform_indices = @transform_2, window_bounds = array<i64: 9, 256>}, {pipeline_mode = #tpu.pipeline_mode<synchronous>, transform_indices = @transform_3, window_bounds = array<i64: 16, 4>}, {pipeline_mode = #tpu.pipeline_mode<synchronous>, transform_indices = @transform_4, window_bounds = array<i64: 16, 1>}, {pipeline_mode = #tpu.pipeline_mode<synchronous>, transform_indices = @transform_5, window_bounds = array<i64: 16, 144>}, {pipeline_mode = #tpu.pipeline_mode<synchronous>, transform_indices = @transform_6, window_bounds = array<i64: 16, 1>}, {pipeline_mode = #tpu.pipeline_mode<synchronous>, transform_indices = @transform_7, window_bounds = array<i64: 16, 144>}, {pipeline_mode = #tpu.pipeline_mode<synchronous>, transform_indices = @transform_8, window_bounds = array<i64: 16, 1>}, {pipeline_mode = #tpu.pipeline_mode<synchronous>, transform_indices = @transform_9, window_bounds = array<i64: 16, 144>}, {pipeline_mode = #tpu.pipeline_mode<synchronous>, transform_indices = @transform_10, window_bounds = array<i64: 16, 1>}, {pipeline_mode = #tpu.pipeline_mode<synchronous>, transform_indices = @transform_11, window_bounds = array<i64: 144, 1>}, {pipeline_mode = #tpu.pipeline_mode<synchronous>, transform_indices = @transform_12, window_bounds = array<i64: 1, 1>}, {transform_indices = @transform_13, window_bounds = array<i64: 1, 1, 256>}]} {
    %c0 = arith.constant 0 : index
    %c0_0 = arith.constant 0 : index
    %c0_1 = arith.constant 0 : index
    %0 = vector.load %arg2[%c0, %c0_0, %c0_1] : memref<1x1x256xf32, #tpu.memory_space<vmem>>, vector<1x1x256xf32>
    %1 = vector.shape_cast %0 : vector<1x1x256xf32> to vector<1x256xf32>
    %2 = math.absf %1 : vector<1x256xf32>
    %cst = arith.constant 0.000000e+00 : f32
    %3 = vector.broadcast %cst : f32 to vector<1x256xf32>
    %4 = arith.subf %3, %2 : vector<1x256xf32>
    %5 = math.exp %4 : vector<1x256xf32>
    %cst_2 = arith.constant 1.000000e+00 : f32
    %6 = vector.broadcast %cst_2 : f32 to vector<1x256xf32>
    %7 = arith.addf %6, %5 : vector<1x256xf32>
    %cst_3 = arith.constant 1.000000e+00 : f32
    %8 = vector.broadcast %cst_3 : f32 to vector<1x256xf32>
    %9 = arith.divf %8, %7 : vector<1x256xf32>
    %cst_4 = arith.constant 0.000000e+00 : f32
    %10 = vector.broadcast %cst_4 : f32 to vector<1x256xf32>
    %11 = arith.cmpf oge, %1, %10 : vector<1x256xf32>
    %12 = arith.mulf %5, %9 : vector<1x256xf32>
    %13 = arith.select %11, %12, %9 : vector<1x256xi1>, vector<1x256xf32>
    %c0_5 = arith.constant 0 : index
    %c0_6 = arith.constant 0 : index
    %14 = vector.load %arg4[%c0_5, %c0_6] : memref<16x4xf32, #tpu.memory_space<vmem>>, vector<16x4xf32>
    %c0_7 = arith.constant 0 : index
    %c0_8 = arith.constant 0 : index
    %c0_9 = arith.constant 0 : index
    %15 = vector.load %arg1[%c0_7, %c0_8, %c0_9] : memref<1x4x256xf32, #tpu.memory_space<vmem>>, vector<1x4x256xf32>
    %16 = vector.shape_cast %15 : vector<1x4x256xf32> to vector<4x256xf32>
    %cst_10 = arith.constant dense<0.000000e+00> : vector<16x256xf32>
    %17 = tpu.matmul %14, %16, %cst_10 {dimension_numbers = #tpu.dot_dimension_numbers<[1], [0], [0], [1], [0, 0, 1, 1], [], []>} : vector<16x4xf32>, vector<4x256xf32>, vector<16x256xf32> -> vector<16x256xf32>
    %c0_11 = arith.constant 0 : index
    %c0_12 = arith.constant 0 : index
    %18 = vector.load %arg5[%c0_11, %c0_12] : memref<16x1xf32, #tpu.memory_space<vmem>>, vector<16x1xf32>
    %19 = vector.broadcast %18 : vector<16x1xf32> to vector<16x256xf32>
    %20 = arith.addf %17, %19 : vector<16x256xf32>
    %cst_13 = arith.constant 0.000000e+00 : f32
    %21 = vector.broadcast %cst_13 : f32 to vector<16x256xf32>
    %22 = arith.maximumf %20, %21 : vector<16x256xf32>
    %23 = vector.broadcast %13 : vector<1x256xf32> to vector<16x256xf32>
    %24 = arith.mulf %22, %23 : vector<16x256xf32>
    %c17_i32 = arith.constant 17 : i32
    %25 = tpu.dynamic_rotate %24 by %c17_i32 dim 1 : vector<16x256xf32>, i32 -> vector<16x256xf32>
    %c0_14 = arith.constant 0 : index
    %c0_15 = arith.constant 0 : index
    %26 = vector.load %arg3[%c0_14, %c0_15] : memref<9x256xf32, #tpu.memory_space<vmem>>, vector<1x256xf32>
    %27 = vector.broadcast %26 : vector<1x256xf32> to vector<16x256xf32>
    %28 = arith.mulf %25, %27 : vector<16x256xf32>
    %c0_16 = arith.constant 0 : index
    %c0_17 = arith.constant 0 : index
    %29 = vector.load %arg15[%c0_16, %c0_17] : memref<144x256xf32, #tpu.memory_space<vmem>>, vector<16x256xf32>
    tpu.vector_store %arg15[%c0_16, %c0_17], %28 {strides = array<i32>} : memref<144x256xf32, #tpu.memory_space<vmem>>, vector<16x256xf32>,
    %c16_i32 = arith.constant 16 : i32
    %30 = tpu.dynamic_rotate %24 by %c16_i32 dim 1 : vector<16x256xf32>, i32 -> vector<16x256xf32>
    %c1 = arith.constant 1 : index
    %c0_18 = arith.constant 0 : index
    %31 = vector.load %arg3[%c1, %c0_18] : memref<9x256xf32, #tpu.memory_space<vmem>>, vector<1x256xf32>
    %32 = vector.broadcast %31 : vector<1x256xf32> to vector<16x256xf32>
    %33 = arith.mulf %30, %32 : vector<16x256xf32>
    %c16 = arith.constant 16 : index
    %c0_19 = arith.constant 0 : index
    %34 = vector.load %arg15[%c16, %c0_19] : memref<144x256xf32, #tpu.memory_space<vmem>>, vector<16x256xf32>
    tpu.vector_store %arg15[%c16, %c0_19], %33 {strides = array<i32>} : memref<144x256xf32, #tpu.memory_space<vmem>>, vector<16x256xf32>,
    %c15_i32 = arith.constant 15 : i32
    %35 = tpu.dynamic_rotate %24 by %c15_i32 dim 1 : vector<16x256xf32>, i32 -> vector<16x256xf32>
    %c2 = arith.constant 2 : index
    %c0_20 = arith.constant 0 : index
    %36 = vector.load %arg3[%c2, %c0_20] : memref<9x256xf32, #tpu.memory_space<vmem>>, vector<1x256xf32>
    %37 = vector.broadcast %36 : vector<1x256xf32> to vector<16x256xf32>
    %38 = arith.mulf %35, %37 : vector<16x256xf32>
    %c32 = arith.constant 32 : index
    %c0_21 = arith.constant 0 : index
    %39 = vector.load %arg15[%c32, %c0_21] : memref<144x256xf32, #tpu.memory_space<vmem>>, vector<16x256xf32>
    tpu.vector_store %arg15[%c32, %c0_21], %38 {strides = array<i32>} : memref<144x256xf32, #tpu.memory_space<vmem>>, vector<16x256xf32>,
    %c1_i32 = arith.constant 1 : i32
    %40 = tpu.dynamic_rotate %24 by %c1_i32 dim 1 : vector<16x256xf32>, i32 -> vector<16x256xf32>
    %c3 = arith.constant 3 : index
    %c0_22 = arith.constant 0 : index
    %41 = vector.load %arg3[%c3, %c0_22] : memref<9x256xf32, #tpu.memory_space<vmem>>, vector<1x256xf32>
    %42 = vector.broadcast %41 : vector<1x256xf32> to vector<16x256xf32>
    %43 = arith.mulf %40, %42 : vector<16x256xf32>
    %c48 = arith.constant 48 : index
    %c0_23 = arith.constant 0 : index
    %44 = vector.load %arg15[%c48, %c0_23] : memref<144x256xf32, #tpu.memory_space<vmem>>, vector<16x256xf32>
    tpu.vector_store %arg15[%c48, %c0_23], %43 {strides = array<i32>} : memref<144x256xf32, #tpu.memory_space<vmem>>, vector<16x256xf32>,
    %c4 = arith.constant 4 : index
    %c0_24 = arith.constant 0 : index
    %45 = vector.load %arg3[%c4, %c0_24] : memref<9x256xf32, #tpu.memory_space<vmem>>, vector<1x256xf32>
    %46 = vector.broadcast %45 : vector<1x256xf32> to vector<16x256xf32>
    %47 = arith.mulf %24, %46 : vector<16x256xf32>
    %c64 = arith.constant 64 : index
    %c0_25 = arith.constant 0 : index
    %48 = vector.load %arg15[%c64, %c0_25] : memref<144x256xf32, #tpu.memory_space<vmem>>, vector<16x256xf32>
    tpu.vector_store %arg15[%c64, %c0_25], %47 {strides = array<i32>} : memref<144x256xf32, #tpu.memory_space<vmem>>, vector<16x256xf32>,
    %c255_i32 = arith.constant 255 : i32
    %49 = tpu.dynamic_rotate %24 by %c255_i32 dim 1 : vector<16x256xf32>, i32 -> vector<16x256xf32>
    %c5 = arith.constant 5 : index
    %c0_26 = arith.constant 0 : index
    %50 = vector.load %arg3[%c5, %c0_26] : memref<9x256xf32, #tpu.memory_space<vmem>>, vector<1x256xf32>
    %51 = vector.broadcast %50 : vector<1x256xf32> to vector<16x256xf32>
    %52 = arith.mulf %49, %51 : vector<16x256xf32>
    %c80 = arith.constant 80 : index
    %c0_27 = arith.constant 0 : index
    %53 = vector.load %arg15[%c80, %c0_27] : memref<144x256xf32, #tpu.memory_space<vmem>>, vector<16x256xf32>
    tpu.vector_store %arg15[%c80, %c0_27], %52 {strides = array<i32>} : memref<144x256xf32, #tpu.memory_space<vmem>>, vector<16x256xf32>,
    %c241_i32 = arith.constant 241 : i32
    %54 = tpu.dynamic_rotate %24 by %c241_i32 dim 1 : vector<16x256xf32>, i32 -> vector<16x256xf32>
    %c6 = arith.constant 6 : index
    %c0_28 = arith.constant 0 : index
    %55 = vector.load %arg3[%c6, %c0_28] : memref<9x256xf32, #tpu.memory_space<vmem>>, vector<1x256xf32>
    %56 = vector.broadcast %55 : vector<1x256xf32> to vector<16x256xf32>
    %57 = arith.mulf %54, %56 : vector<16x256xf32>
    %c96 = arith.constant 96 : index
    %c0_29 = arith.constant 0 : index
    %58 = vector.load %arg15[%c96, %c0_29] : memref<144x256xf32, #tpu.memory_space<vmem>>, vector<16x256xf32>
    tpu.vector_store %arg15[%c96, %c0_29], %57 {strides = array<i32>} : memref<144x256xf32, #tpu.memory_space<vmem>>, vector<16x256xf32>,
    %c240_i32 = arith.constant 240 : i32
    %59 = tpu.dynamic_rotate %24 by %c240_i32 dim 1 : vector<16x256xf32>, i32 -> vector<16x256xf32>
    %c7 = arith.constant 7 : index
    %c0_30 = arith.constant 0 : index
    %60 = vector.load %arg3[%c7, %c0_30] : memref<9x256xf32, #tpu.memory_space<vmem>>, vector<1x256xf32>
    %61 = vector.broadcast %60 : vector<1x256xf32> to vector<16x256xf32>
    %62 = arith.mulf %59, %61 : vector<16x256xf32>
    %c112 = arith.constant 112 : index
    %c0_31 = arith.constant 0 : index
    %63 = vector.load %arg15[%c112, %c0_31] : memref<144x256xf32, #tpu.memory_space<vmem>>, vector<16x256xf32>
    tpu.vector_store %arg15[%c112, %c0_31], %62 {strides = array<i32>} : memref<144x256xf32, #tpu.memory_space<vmem>>, vector<16x256xf32>,
    %c239_i32 = arith.constant 239 : i32
    %64 = tpu.dynamic_rotate %24 by %c239_i32 dim 1 : vector<16x256xf32>, i32 -> vector<16x256xf32>
    %c8 = arith.constant 8 : index
    %c0_32 = arith.constant 0 : index
    %65 = vector.load %arg3[%c8, %c0_32] : memref<9x256xf32, #tpu.memory_space<vmem>>, vector<1x256xf32>
    %66 = vector.broadcast %65 : vector<1x256xf32> to vector<16x256xf32>
    %67 = arith.mulf %64, %66 : vector<16x256xf32>
    %c128 = arith.constant 128 : index
    %c0_33 = arith.constant 0 : index
    %68 = vector.load %arg15[%c128, %c0_33] : memref<144x256xf32, #tpu.memory_space<vmem>>, vector<16x256xf32>
    tpu.vector_store %arg15[%c128, %c0_33], %67 {strides = array<i32>} : memref<144x256xf32, #tpu.memory_space<vmem>>, vector<16x256xf32>,
    %c0_34 = arith.constant 0 : index
    %c0_35 = arith.constant 0 : index
    %69 = vector.load %arg6[%c0_34, %c0_35] : memref<16x144xf32, #tpu.memory_space<vmem>>, vector<16x144xf32>
    %c0_36 = arith.constant 0 : index
    %c0_37 = arith.constant 0 : index
    %70 = vector.load %arg15[%c0_36, %c0_37] : memref<144x256xf32, #tpu.memory_space<vmem>>, vector<144x256xf32>
    %cst_38 = arith.constant dense<0.000000e+00> : vector<16x256xf32>
    %71 = tpu.matmul %69, %70, %cst_38 {dimension_numbers = #tpu.dot_dimension_numbers<[1], [0], [0], [1], [0, 0, 1, 1], [], []>} : vector<16x144xf32>, vector<144x256xf32>, vector<16x256xf32> -> vector<16x256xf32>
    %c0_39 = arith.constant 0 : index
    %c0_40 = arith.constant 0 : index
    %72 = vector.load %arg7[%c0_39, %c0_40] : memref<16x1xf32, #tpu.memory_space<vmem>>, vector<16x1xf32>
    %73 = vector.broadcast %72 : vector<16x1xf32> to vector<16x256xf32>
    %74 = arith.addf %71, %73 : vector<16x256xf32>
    %cst_41 = arith.constant 0.000000e+00 : f32
    %75 = vector.broadcast %cst_41 : f32 to vector<16x256xf32>
    %76 = arith.maximumf %74, %75 : vector<16x256xf32>
    %c17_i32_42 = arith.constant 17 : i32
    %77 = tpu.dynamic_rotate %76 by %c17_i32_42 dim 1 : vector<16x256xf32>, i32 -> vector<16x256xf32>
    %c0_43 = arith.constant 0 : index
    %c0_44 = arith.constant 0 : index
    %78 = vector.load %arg3[%c0_43, %c0_44] : memref<9x256xf32, #tpu.memory_space<vmem>>, vector<1x256xf32>
    %79 = vector.broadcast %78 : vector<1x256xf32> to vector<16x256xf32>
    %80 = arith.mulf %77, %79 : vector<16x256xf32>
    %c0_45 = arith.constant 0 : index
    %c0_46 = arith.constant 0 : index
    %81 = vector.load %arg15[%c0_45, %c0_46] : memref<144x256xf32, #tpu.memory_space<vmem>>, vector<16x256xf32>
    tpu.vector_store %arg15[%c0_45, %c0_46], %80 {strides = array<i32>} : memref<144x256xf32, #tpu.memory_space<vmem>>, vector<16x256xf32>,
    %c16_i32_47 = arith.constant 16 : i32
    %82 = tpu.dynamic_rotate %76 by %c16_i32_47 dim 1 : vector<16x256xf32>, i32 -> vector<16x256xf32>
    %c1_48 = arith.constant 1 : index
    %c0_49 = arith.constant 0 : index
    %83 = vector.load %arg3[%c1_48, %c0_49] : memref<9x256xf32, #tpu.memory_space<vmem>>, vector<1x256xf32>
    %84 = vector.broadcast %83 : vector<1x256xf32> to vector<16x256xf32>
    %85 = arith.mulf %82, %84 : vector<16x256xf32>
    %c16_50 = arith.constant 16 : index
    %c0_51 = arith.constant 0 : index
    %86 = vector.load %arg15[%c16_50, %c0_51] : memref<144x256xf32, #tpu.memory_space<vmem>>, vector<16x256xf32>
    tpu.vector_store %arg15[%c16_50, %c0_51], %85 {strides = array<i32>} : memref<144x256xf32, #tpu.memory_space<vmem>>, vector<16x256xf32>,
    %c15_i32_52 = arith.constant 15 : i32
    %87 = tpu.dynamic_rotate %76 by %c15_i32_52 dim 1 : vector<16x256xf32>, i32 -> vector<16x256xf32>
    %c2_53 = arith.constant 2 : index
    %c0_54 = arith.constant 0 : index
    %88 = vector.load %arg3[%c2_53, %c0_54] : memref<9x256xf32, #tpu.memory_space<vmem>>, vector<1x256xf32>
    %89 = vector.broadcast %88 : vector<1x256xf32> to vector<16x256xf32>
    %90 = arith.mulf %87, %89 : vector<16x256xf32>
    %c32_55 = arith.constant 32 : index
    %c0_56 = arith.constant 0 : index
    %91 = vector.load %arg15[%c32_55, %c0_56] : memref<144x256xf32, #tpu.memory_space<vmem>>, vector<16x256xf32>
    tpu.vector_store %arg15[%c32_55, %c0_56], %90 {strides = array<i32>} : memref<144x256xf32, #tpu.memory_space<vmem>>, vector<16x256xf32>,
    %c1_i32_57 = arith.constant 1 : i32
    %92 = tpu.dynamic_rotate %76 by %c1_i32_57 dim 1 : vector<16x256xf32>, i32 -> vector<16x256xf32>
    %c3_58 = arith.constant 3 : index
    %c0_59 = arith.constant 0 : index
    %93 = vector.load %arg3[%c3_58, %c0_59] : memref<9x256xf32, #tpu.memory_space<vmem>>, vector<1x256xf32>
    %94 = vector.broadcast %93 : vector<1x256xf32> to vector<16x256xf32>
    %95 = arith.mulf %92, %94 : vector<16x256xf32>
    %c48_60 = arith.constant 48 : index
    %c0_61 = arith.constant 0 : index
    %96 = vector.load %arg15[%c48_60, %c0_61] : memref<144x256xf32, #tpu.memory_space<vmem>>, vector<16x256xf32>
    tpu.vector_store %arg15[%c48_60, %c0_61], %95 {strides = array<i32>} : memref<144x256xf32, #tpu.memory_space<vmem>>, vector<16x256xf32>,
    %c4_62 = arith.constant 4 : index
    %c0_63 = arith.constant 0 : index
    %97 = vector.load %arg3[%c4_62, %c0_63] : memref<9x256xf32, #tpu.memory_space<vmem>>, vector<1x256xf32>
    %98 = vector.broadcast %97 : vector<1x256xf32> to vector<16x256xf32>
    %99 = arith.mulf %76, %98 : vector<16x256xf32>
    %c64_64 = arith.constant 64 : index
    %c0_65 = arith.constant 0 : index
    %100 = vector.load %arg15[%c64_64, %c0_65] : memref<144x256xf32, #tpu.memory_space<vmem>>, vector<16x256xf32>
    tpu.vector_store %arg15[%c64_64, %c0_65], %99 {strides = array<i32>} : memref<144x256xf32, #tpu.memory_space<vmem>>, vector<16x256xf32>,
    %c255_i32_66 = arith.constant 255 : i32
    %101 = tpu.dynamic_rotate %76 by %c255_i32_66 dim 1 : vector<16x256xf32>, i32 -> vector<16x256xf32>
    %c5_67 = arith.constant 5 : index
    %c0_68 = arith.constant 0 : index
    %102 = vector.load %arg3[%c5_67, %c0_68] : memref<9x256xf32, #tpu.memory_space<vmem>>, vector<1x256xf32>
    %103 = vector.broadcast %102 : vector<1x256xf32> to vector<16x256xf32>
    %104 = arith.mulf %101, %103 : vector<16x256xf32>
    %c80_69 = arith.constant 80 : index
    %c0_70 = arith.constant 0 : index
    %105 = vector.load %arg15[%c80_69, %c0_70] : memref<144x256xf32, #tpu.memory_space<vmem>>, vector<16x256xf32>
    tpu.vector_store %arg15[%c80_69, %c0_70], %104 {strides = array<i32>} : memref<144x256xf32, #tpu.memory_space<vmem>>, vector<16x256xf32>,
    %c241_i32_71 = arith.constant 241 : i32
    %106 = tpu.dynamic_rotate %76 by %c241_i32_71 dim 1 : vector<16x256xf32>, i32 -> vector<16x256xf32>
    %c6_72 = arith.constant 6 : index
    %c0_73 = arith.constant 0 : index
    %107 = vector.load %arg3[%c6_72, %c0_73] : memref<9x256xf32, #tpu.memory_space<vmem>>, vector<1x256xf32>
    %108 = vector.broadcast %107 : vector<1x256xf32> to vector<16x256xf32>
    %109 = arith.mulf %106, %108 : vector<16x256xf32>
    %c96_74 = arith.constant 96 : index
    %c0_75 = arith.constant 0 : index
    %110 = vector.load %arg15[%c96_74, %c0_75] : memref<144x256xf32, #tpu.memory_space<vmem>>, vector<16x256xf32>
    tpu.vector_store %arg15[%c96_74, %c0_75], %109 {strides = array<i32>} : memref<144x256xf32, #tpu.memory_space<vmem>>, vector<16x256xf32>,
    %c240_i32_76 = arith.constant 240 : i32
    %111 = tpu.dynamic_rotate %76 by %c240_i32_76 dim 1 : vector<16x256xf32>, i32 -> vector<16x256xf32>
    %c7_77 = arith.constant 7 : index
    %c0_78 = arith.constant 0 : index
    %112 = vector.load %arg3[%c7_77, %c0_78] : memref<9x256xf32, #tpu.memory_space<vmem>>, vector<1x256xf32>
    %113 = vector.broadcast %112 : vector<1x256xf32> to vector<16x256xf32>
    %114 = arith.mulf %111, %113 : vector<16x256xf32>
    %c112_79 = arith.constant 112 : index
    %c0_80 = arith.constant 0 : index
    %115 = vector.load %arg15[%c112_79, %c0_80] : memref<144x256xf32, #tpu.memory_space<vmem>>, vector<16x256xf32>
    tpu.vector_store %arg15[%c112_79, %c0_80], %114 {strides = array<i32>} : memref<144x256xf32, #tpu.memory_space<vmem>>, vector<16x256xf32>,
    %c239_i32_81 = arith.constant 239 : i32
    %116 = tpu.dynamic_rotate %76 by %c239_i32_81 dim 1 : vector<16x256xf32>, i32 -> vector<16x256xf32>
    %c8_82 = arith.constant 8 : index
    %c0_83 = arith.constant 0 : index
    %117 = vector.load %arg3[%c8_82, %c0_83] : memref<9x256xf32, #tpu.memory_space<vmem>>, vector<1x256xf32>
    %118 = vector.broadcast %117 : vector<1x256xf32> to vector<16x256xf32>
    %119 = arith.mulf %116, %118 : vector<16x256xf32>
    %c128_84 = arith.constant 128 : index
    %c0_85 = arith.constant 0 : index
    %120 = vector.load %arg15[%c128_84, %c0_85] : memref<144x256xf32, #tpu.memory_space<vmem>>, vector<16x256xf32>
    tpu.vector_store %arg15[%c128_84, %c0_85], %119 {strides = array<i32>} : memref<144x256xf32, #tpu.memory_space<vmem>>, vector<16x256xf32>,
    %c0_86 = arith.constant 0 : index
    %c0_87 = arith.constant 0 : index
    %121 = vector.load %arg8[%c0_86, %c0_87] : memref<16x144xf32, #tpu.memory_space<vmem>>, vector<16x144xf32>
    %c0_88 = arith.constant 0 : index
    %c0_89 = arith.constant 0 : index
    %122 = vector.load %arg15[%c0_88, %c0_89] : memref<144x256xf32, #tpu.memory_space<vmem>>, vector<144x256xf32>
    %cst_90 = arith.constant dense<0.000000e+00> : vector<16x256xf32>
    %123 = tpu.matmul %121, %122, %cst_90 {dimension_numbers = #tpu.dot_dimension_numbers<[1], [0], [0], [1], [0, 0, 1, 1], [], []>} : vector<16x144xf32>, vector<144x256xf32>, vector<16x256xf32> -> vector<16x256xf32>
    %c0_91 = arith.constant 0 : index
    %c0_92 = arith.constant 0 : index
    %124 = vector.load %arg9[%c0_91, %c0_92] : memref<16x1xf32, #tpu.memory_space<vmem>>, vector<16x1xf32>
    %125 = vector.broadcast %124 : vector<16x1xf32> to vector<16x256xf32>
    %126 = arith.addf %123, %125 : vector<16x256xf32>
    %cst_93 = arith.constant 0.000000e+00 : f32
    %127 = vector.broadcast %cst_93 : f32 to vector<16x256xf32>
    %128 = arith.maximumf %126, %127 : vector<16x256xf32>
    %c17_i32_94 = arith.constant 17 : i32
    %129 = tpu.dynamic_rotate %128 by %c17_i32_94 dim 1 : vector<16x256xf32>, i32 -> vector<16x256xf32>
    %c0_95 = arith.constant 0 : index
    %c0_96 = arith.constant 0 : index
    %130 = vector.load %arg3[%c0_95, %c0_96] : memref<9x256xf32, #tpu.memory_space<vmem>>, vector<1x256xf32>
    %131 = vector.broadcast %130 : vector<1x256xf32> to vector<16x256xf32>
    %132 = arith.mulf %129, %131 : vector<16x256xf32>
    %c0_97 = arith.constant 0 : index
    %c0_98 = arith.constant 0 : index
    %133 = vector.load %arg15[%c0_97, %c0_98] : memref<144x256xf32, #tpu.memory_space<vmem>>, vector<16x256xf32>
    tpu.vector_store %arg15[%c0_97, %c0_98], %132 {strides = array<i32>} : memref<144x256xf32, #tpu.memory_space<vmem>>, vector<16x256xf32>,
    %c16_i32_99 = arith.constant 16 : i32
    %134 = tpu.dynamic_rotate %128 by %c16_i32_99 dim 1 : vector<16x256xf32>, i32 -> vector<16x256xf32>
    %c1_100 = arith.constant 1 : index
    %c0_101 = arith.constant 0 : index
    %135 = vector.load %arg3[%c1_100, %c0_101] : memref<9x256xf32, #tpu.memory_space<vmem>>, vector<1x256xf32>
    %136 = vector.broadcast %135 : vector<1x256xf32> to vector<16x256xf32>
    %137 = arith.mulf %134, %136 : vector<16x256xf32>
    %c16_102 = arith.constant 16 : index
    %c0_103 = arith.constant 0 : index
    %138 = vector.load %arg15[%c16_102, %c0_103] : memref<144x256xf32, #tpu.memory_space<vmem>>, vector<16x256xf32>
    tpu.vector_store %arg15[%c16_102, %c0_103], %137 {strides = array<i32>} : memref<144x256xf32, #tpu.memory_space<vmem>>, vector<16x256xf32>,
    %c15_i32_104 = arith.constant 15 : i32
    %139 = tpu.dynamic_rotate %128 by %c15_i32_104 dim 1 : vector<16x256xf32>, i32 -> vector<16x256xf32>
    %c2_105 = arith.constant 2 : index
    %c0_106 = arith.constant 0 : index
    %140 = vector.load %arg3[%c2_105, %c0_106] : memref<9x256xf32, #tpu.memory_space<vmem>>, vector<1x256xf32>
    %141 = vector.broadcast %140 : vector<1x256xf32> to vector<16x256xf32>
    %142 = arith.mulf %139, %141 : vector<16x256xf32>
    %c32_107 = arith.constant 32 : index
    %c0_108 = arith.constant 0 : index
    %143 = vector.load %arg15[%c32_107, %c0_108] : memref<144x256xf32, #tpu.memory_space<vmem>>, vector<16x256xf32>
    tpu.vector_store %arg15[%c32_107, %c0_108], %142 {strides = array<i32>} : memref<144x256xf32, #tpu.memory_space<vmem>>, vector<16x256xf32>,
    %c1_i32_109 = arith.constant 1 : i32
    %144 = tpu.dynamic_rotate %128 by %c1_i32_109 dim 1 : vector<16x256xf32>, i32 -> vector<16x256xf32>
    %c3_110 = arith.constant 3 : index
    %c0_111 = arith.constant 0 : index
    %145 = vector.load %arg3[%c3_110, %c0_111] : memref<9x256xf32, #tpu.memory_space<vmem>>, vector<1x256xf32>
    %146 = vector.broadcast %145 : vector<1x256xf32> to vector<16x256xf32>
    %147 = arith.mulf %144, %146 : vector<16x256xf32>
    %c48_112 = arith.constant 48 : index
    %c0_113 = arith.constant 0 : index
    %148 = vector.load %arg15[%c48_112, %c0_113] : memref<144x256xf32, #tpu.memory_space<vmem>>, vector<16x256xf32>
    tpu.vector_store %arg15[%c48_112, %c0_113], %147 {strides = array<i32>} : memref<144x256xf32, #tpu.memory_space<vmem>>, vector<16x256xf32>,
    %c4_114 = arith.constant 4 : index
    %c0_115 = arith.constant 0 : index
    %149 = vector.load %arg3[%c4_114, %c0_115] : memref<9x256xf32, #tpu.memory_space<vmem>>, vector<1x256xf32>
    %150 = vector.broadcast %149 : vector<1x256xf32> to vector<16x256xf32>
    %151 = arith.mulf %128, %150 : vector<16x256xf32>
    %c64_116 = arith.constant 64 : index
    %c0_117 = arith.constant 0 : index
    %152 = vector.load %arg15[%c64_116, %c0_117] : memref<144x256xf32, #tpu.memory_space<vmem>>, vector<16x256xf32>
    tpu.vector_store %arg15[%c64_116, %c0_117], %151 {strides = array<i32>} : memref<144x256xf32, #tpu.memory_space<vmem>>, vector<16x256xf32>,
    %c255_i32_118 = arith.constant 255 : i32
    %153 = tpu.dynamic_rotate %128 by %c255_i32_118 dim 1 : vector<16x256xf32>, i32 -> vector<16x256xf32>
    %c5_119 = arith.constant 5 : index
    %c0_120 = arith.constant 0 : index
    %154 = vector.load %arg3[%c5_119, %c0_120] : memref<9x256xf32, #tpu.memory_space<vmem>>, vector<1x256xf32>
    %155 = vector.broadcast %154 : vector<1x256xf32> to vector<16x256xf32>
    %156 = arith.mulf %153, %155 : vector<16x256xf32>
    %c80_121 = arith.constant 80 : index
    %c0_122 = arith.constant 0 : index
    %157 = vector.load %arg15[%c80_121, %c0_122] : memref<144x256xf32, #tpu.memory_space<vmem>>, vector<16x256xf32>
    tpu.vector_store %arg15[%c80_121, %c0_122], %156 {strides = array<i32>} : memref<144x256xf32, #tpu.memory_space<vmem>>, vector<16x256xf32>,
    %c241_i32_123 = arith.constant 241 : i32
    %158 = tpu.dynamic_rotate %128 by %c241_i32_123 dim 1 : vector<16x256xf32>, i32 -> vector<16x256xf32>
    %c6_124 = arith.constant 6 : index
    %c0_125 = arith.constant 0 : index
    %159 = vector.load %arg3[%c6_124, %c0_125] : memref<9x256xf32, #tpu.memory_space<vmem>>, vector<1x256xf32>
    %160 = vector.broadcast %159 : vector<1x256xf32> to vector<16x256xf32>
    %161 = arith.mulf %158, %160 : vector<16x256xf32>
    %c96_126 = arith.constant 96 : index
    %c0_127 = arith.constant 0 : index
    %162 = vector.load %arg15[%c96_126, %c0_127] : memref<144x256xf32, #tpu.memory_space<vmem>>, vector<16x256xf32>
    tpu.vector_store %arg15[%c96_126, %c0_127], %161 {strides = array<i32>} : memref<144x256xf32, #tpu.memory_space<vmem>>, vector<16x256xf32>,
    %c240_i32_128 = arith.constant 240 : i32
    %163 = tpu.dynamic_rotate %128 by %c240_i32_128 dim 1 : vector<16x256xf32>, i32 -> vector<16x256xf32>
    %c7_129 = arith.constant 7 : index
    %c0_130 = arith.constant 0 : index
    %164 = vector.load %arg3[%c7_129, %c0_130] : memref<9x256xf32, #tpu.memory_space<vmem>>, vector<1x256xf32>
    %165 = vector.broadcast %164 : vector<1x256xf32> to vector<16x256xf32>
    %166 = arith.mulf %163, %165 : vector<16x256xf32>
    %c112_131 = arith.constant 112 : index
    %c0_132 = arith.constant 0 : index
    %167 = vector.load %arg15[%c112_131, %c0_132] : memref<144x256xf32, #tpu.memory_space<vmem>>, vector<16x256xf32>
    tpu.vector_store %arg15[%c112_131, %c0_132], %166 {strides = array<i32>} : memref<144x256xf32, #tpu.memory_space<vmem>>, vector<16x256xf32>,
    %c239_i32_133 = arith.constant 239 : i32
    %168 = tpu.dynamic_rotate %128 by %c239_i32_133 dim 1 : vector<16x256xf32>, i32 -> vector<16x256xf32>
    %c8_134 = arith.constant 8 : index
    %c0_135 = arith.constant 0 : index
    %169 = vector.load %arg3[%c8_134, %c0_135] : memref<9x256xf32, #tpu.memory_space<vmem>>, vector<1x256xf32>
    %170 = vector.broadcast %169 : vector<1x256xf32> to vector<16x256xf32>
    %171 = arith.mulf %168, %170 : vector<16x256xf32>
    %c128_136 = arith.constant 128 : index
    %c0_137 = arith.constant 0 : index
    %172 = vector.load %arg15[%c128_136, %c0_137] : memref<144x256xf32, #tpu.memory_space<vmem>>, vector<16x256xf32>
    tpu.vector_store %arg15[%c128_136, %c0_137], %171 {strides = array<i32>} : memref<144x256xf32, #tpu.memory_space<vmem>>, vector<16x256xf32>,
    %c0_138 = arith.constant 0 : index
    %c0_139 = arith.constant 0 : index
    %173 = vector.load %arg10[%c0_138, %c0_139] : memref<16x144xf32, #tpu.memory_space<vmem>>, vector<16x144xf32>
    %c0_140 = arith.constant 0 : index
    %c0_141 = arith.constant 0 : index
    %174 = vector.load %arg15[%c0_140, %c0_141] : memref<144x256xf32, #tpu.memory_space<vmem>>, vector<144x256xf32>
    %cst_142 = arith.constant dense<0.000000e+00> : vector<16x256xf32>
    %175 = tpu.matmul %173, %174, %cst_142 {dimension_numbers = #tpu.dot_dimension_numbers<[1], [0], [0], [1], [0, 0, 1, 1], [], []>} : vector<16x144xf32>, vector<144x256xf32>, vector<16x256xf32> -> vector<16x256xf32>
    %c0_143 = arith.constant 0 : index
    %c0_144 = arith.constant 0 : index
    %176 = vector.load %arg11[%c0_143, %c0_144] : memref<16x1xf32, #tpu.memory_space<vmem>>, vector<16x1xf32>
    %177 = vector.broadcast %176 : vector<16x1xf32> to vector<16x256xf32>
    %178 = arith.addf %175, %177 : vector<16x256xf32>
    %cst_145 = arith.constant 0.000000e+00 : f32
    %179 = vector.broadcast %cst_145 : f32 to vector<16x256xf32>
    %180 = arith.maximumf %178, %179 : vector<16x256xf32>
    %c17_i32_146 = arith.constant 17 : i32
    %181 = tpu.dynamic_rotate %180 by %c17_i32_146 dim 1 : vector<16x256xf32>, i32 -> vector<16x256xf32>
    %c0_147 = arith.constant 0 : index
    %c0_148 = arith.constant 0 : index
    %182 = vector.load %arg3[%c0_147, %c0_148] : memref<9x256xf32, #tpu.memory_space<vmem>>, vector<1x256xf32>
    %183 = vector.broadcast %182 : vector<1x256xf32> to vector<16x256xf32>
    %184 = arith.mulf %181, %183 : vector<16x256xf32>
    %c0_149 = arith.constant 0 : index
    %c0_150 = arith.constant 0 : index
    %185 = vector.load %arg15[%c0_149, %c0_150] : memref<144x256xf32, #tpu.memory_space<vmem>>, vector<16x256xf32>
    tpu.vector_store %arg15[%c0_149, %c0_150], %184 {strides = array<i32>} : memref<144x256xf32, #tpu.memory_space<vmem>>, vector<16x256xf32>,
    %c16_i32_151 = arith.constant 16 : i32
    %186 = tpu.dynamic_rotate %180 by %c16_i32_151 dim 1 : vector<16x256xf32>, i32 -> vector<16x256xf32>
    %c1_152 = arith.constant 1 : index
    %c0_153 = arith.constant 0 : index
    %187 = vector.load %arg3[%c1_152, %c0_153] : memref<9x256xf32, #tpu.memory_space<vmem>>, vector<1x256xf32>
    %188 = vector.broadcast %187 : vector<1x256xf32> to vector<16x256xf32>
    %189 = arith.mulf %186, %188 : vector<16x256xf32>
    %c16_154 = arith.constant 16 : index
    %c0_155 = arith.constant 0 : index
    %190 = vector.load %arg15[%c16_154, %c0_155] : memref<144x256xf32, #tpu.memory_space<vmem>>, vector<16x256xf32>
    tpu.vector_store %arg15[%c16_154, %c0_155], %189 {strides = array<i32>} : memref<144x256xf32, #tpu.memory_space<vmem>>, vector<16x256xf32>,
    %c15_i32_156 = arith.constant 15 : i32
    %191 = tpu.dynamic_rotate %180 by %c15_i32_156 dim 1 : vector<16x256xf32>, i32 -> vector<16x256xf32>
    %c2_157 = arith.constant 2 : index
    %c0_158 = arith.constant 0 : index
    %192 = vector.load %arg3[%c2_157, %c0_158] : memref<9x256xf32, #tpu.memory_space<vmem>>, vector<1x256xf32>
    %193 = vector.broadcast %192 : vector<1x256xf32> to vector<16x256xf32>
    %194 = arith.mulf %191, %193 : vector<16x256xf32>
    %c32_159 = arith.constant 32 : index
    %c0_160 = arith.constant 0 : index
    %195 = vector.load %arg15[%c32_159, %c0_160] : memref<144x256xf32, #tpu.memory_space<vmem>>, vector<16x256xf32>
    tpu.vector_store %arg15[%c32_159, %c0_160], %194 {strides = array<i32>} : memref<144x256xf32, #tpu.memory_space<vmem>>, vector<16x256xf32>,
    %c1_i32_161 = arith.constant 1 : i32
    %196 = tpu.dynamic_rotate %180 by %c1_i32_161 dim 1 : vector<16x256xf32>, i32 -> vector<16x256xf32>
    %c3_162 = arith.constant 3 : index
    %c0_163 = arith.constant 0 : index
    %197 = vector.load %arg3[%c3_162, %c0_163] : memref<9x256xf32, #tpu.memory_space<vmem>>, vector<1x256xf32>
    %198 = vector.broadcast %197 : vector<1x256xf32> to vector<16x256xf32>
    %199 = arith.mulf %196, %198 : vector<16x256xf32>
    %c48_164 = arith.constant 48 : index
    %c0_165 = arith.constant 0 : index
    %200 = vector.load %arg15[%c48_164, %c0_165] : memref<144x256xf32, #tpu.memory_space<vmem>>, vector<16x256xf32>
    tpu.vector_store %arg15[%c48_164, %c0_165], %199 {strides = array<i32>} : memref<144x256xf32, #tpu.memory_space<vmem>>, vector<16x256xf32>,
    %c4_166 = arith.constant 4 : index
    %c0_167 = arith.constant 0 : index
    %201 = vector.load %arg3[%c4_166, %c0_167] : memref<9x256xf32, #tpu.memory_space<vmem>>, vector<1x256xf32>
    %202 = vector.broadcast %201 : vector<1x256xf32> to vector<16x256xf32>
    %203 = arith.mulf %180, %202 : vector<16x256xf32>
    %c64_168 = arith.constant 64 : index
    %c0_169 = arith.constant 0 : index
    %204 = vector.load %arg15[%c64_168, %c0_169] : memref<144x256xf32, #tpu.memory_space<vmem>>, vector<16x256xf32>
    tpu.vector_store %arg15[%c64_168, %c0_169], %203 {strides = array<i32>} : memref<144x256xf32, #tpu.memory_space<vmem>>, vector<16x256xf32>,
    %c255_i32_170 = arith.constant 255 : i32
    %205 = tpu.dynamic_rotate %180 by %c255_i32_170 dim 1 : vector<16x256xf32>, i32 -> vector<16x256xf32>
    %c5_171 = arith.constant 5 : index
    %c0_172 = arith.constant 0 : index
    %206 = vector.load %arg3[%c5_171, %c0_172] : memref<9x256xf32, #tpu.memory_space<vmem>>, vector<1x256xf32>
    %207 = vector.broadcast %206 : vector<1x256xf32> to vector<16x256xf32>
    %208 = arith.mulf %205, %207 : vector<16x256xf32>
    %c80_173 = arith.constant 80 : index
    %c0_174 = arith.constant 0 : index
    %209 = vector.load %arg15[%c80_173, %c0_174] : memref<144x256xf32, #tpu.memory_space<vmem>>, vector<16x256xf32>
    tpu.vector_store %arg15[%c80_173, %c0_174], %208 {strides = array<i32>} : memref<144x256xf32, #tpu.memory_space<vmem>>, vector<16x256xf32>,
    %c241_i32_175 = arith.constant 241 : i32
    %210 = tpu.dynamic_rotate %180 by %c241_i32_175 dim 1 : vector<16x256xf32>, i32 -> vector<16x256xf32>
    %c6_176 = arith.constant 6 : index
    %c0_177 = arith.constant 0 : index
    %211 = vector.load %arg3[%c6_176, %c0_177] : memref<9x256xf32, #tpu.memory_space<vmem>>, vector<1x256xf32>
    %212 = vector.broadcast %211 : vector<1x256xf32> to vector<16x256xf32>
    %213 = arith.mulf %210, %212 : vector<16x256xf32>
    %c96_178 = arith.constant 96 : index
    %c0_179 = arith.constant 0 : index
    %214 = vector.load %arg15[%c96_178, %c0_179] : memref<144x256xf32, #tpu.memory_space<vmem>>, vector<16x256xf32>
    tpu.vector_store %arg15[%c96_178, %c0_179], %213 {strides = array<i32>} : memref<144x256xf32, #tpu.memory_space<vmem>>, vector<16x256xf32>,
    %c240_i32_180 = arith.constant 240 : i32
    %215 = tpu.dynamic_rotate %180 by %c240_i32_180 dim 1 : vector<16x256xf32>, i32 -> vector<16x256xf32>
    %c7_181 = arith.constant 7 : index
    %c0_182 = arith.constant 0 : index
    %216 = vector.load %arg3[%c7_181, %c0_182] : memref<9x256xf32, #tpu.memory_space<vmem>>, vector<1x256xf32>
    %217 = vector.broadcast %216 : vector<1x256xf32> to vector<16x256xf32>
    %218 = arith.mulf %215, %217 : vector<16x256xf32>
    %c112_183 = arith.constant 112 : index
    %c0_184 = arith.constant 0 : index
    %219 = vector.load %arg15[%c112_183, %c0_184] : memref<144x256xf32, #tpu.memory_space<vmem>>, vector<16x256xf32>
    tpu.vector_store %arg15[%c112_183, %c0_184], %218 {strides = array<i32>} : memref<144x256xf32, #tpu.memory_space<vmem>>, vector<16x256xf32>,
    %c239_i32_185 = arith.constant 239 : i32
    %220 = tpu.dynamic_rotate %180 by %c239_i32_185 dim 1 : vector<16x256xf32>, i32 -> vector<16x256xf32>
    %c8_186 = arith.constant 8 : index
    %c0_187 = arith.constant 0 : index
    %221 = vector.load %arg3[%c8_186, %c0_187] : memref<9x256xf32, #tpu.memory_space<vmem>>, vector<1x256xf32>
    %222 = vector.broadcast %221 : vector<1x256xf32> to vector<16x256xf32>
    %223 = arith.mulf %220, %222 : vector<16x256xf32>
    %c128_188 = arith.constant 128 : index
    %c0_189 = arith.constant 0 : index
    %224 = vector.load %arg15[%c128_188, %c0_189] : memref<144x256xf32, #tpu.memory_space<vmem>>, vector<16x256xf32>
    tpu.vector_store %arg15[%c128_188, %c0_189], %223 {strides = array<i32>} : memref<144x256xf32, #tpu.memory_space<vmem>>, vector<16x256xf32>,
    %c0_190 = arith.constant 0 : index
    %c0_191 = arith.constant 0 : index
    %225 = vector.load %arg15[%c0_190, %c0_191] : memref<144x256xf32, #tpu.memory_space<vmem>>, vector<144x256xf32>
    %c0_192 = arith.constant 0 : index
    %c0_193 = arith.constant 0 : index
    %226 = vector.load %arg12[%c0_192, %c0_193] : memref<144x1xf32, #tpu.memory_space<vmem>>, vector<144x1xf32>
    %227 = vector.broadcast %226 : vector<144x1xf32> to vector<144x256xf32>
    %228 = arith.mulf %225, %227 : vector<144x256xf32>
    %cst_194 = arith.constant dense<0.000000e+00> : vector<256xf32>
    %229 = vector.multi_reduction <add>, %228, %cst_194 [0] : vector<144x256xf32> to vector<256xf32>
    %230 = vector.shape_cast %229 : vector<256xf32> to vector<1x256xf32>
    %c0_195 = arith.constant 0 : index
    %c0_196 = arith.constant 0 : index
    %231 = vector.load %arg13[%c0_195, %c0_196] : memref<1x1xf32, #tpu.memory_space<vmem>>, vector<1x1xf32>
    %232 = vector.broadcast %231 : vector<1x1xf32> to vector<1x256xf32>
    %233 = arith.addf %230, %232 : vector<1x256xf32>
    %234 = arith.addf %1, %233 : vector<1x256xf32>
    %c0_197 = arith.constant 0 : index
    %c0_198 = arith.constant 0 : index
    %c0_199 = arith.constant 0 : index
    %235 = vector.load %arg14[%c0_197, %c0_198, %c0_199] : memref<1x1x256xf32, #tpu.memory_space<vmem>>, vector<1x1x256xf32>
    %236 = vector.shape_cast %235 : vector<1x1x256xf32> to vector<1x256xf32>
    %237 = vector.shape_cast %234 : vector<1x256xf32> to vector<1x1x256xf32>
    tpu.vector_store %arg14[%c0_197, %c0_198, %c0_199], %237 {strides = array<i32>} : memref<1x1x256xf32, #tpu.memory_space<vmem>>, vector<1x1x256xf32>,
    return
  }
  func.func @transform_0(%arg0: i32) -> (i32, i32, i32) {
    %c0_i32 = arith.constant 0 : i32
    %c0_i32_0 = arith.constant 0 : i32
    %c0_i32_1 = arith.constant 0 : i32
    return %arg0, %c0_i32, %c0_i32_0 : i32, i32, i32
  }
  func.func @transform_1(%arg0: i32) -> (i32, i32, i32) {
    %c0_i32 = arith.constant 0 : i32
    %c0_i32_0 = arith.constant 0 : i32
    %c0_i32_1 = arith.constant 0 : i32
    return %arg0, %c0_i32, %c0_i32_0 : i32, i32, i32
  }
  func.func @transform_2(%arg0: i32) -> (i32, i32) {
    %c0_i32 = arith.constant 0 : i32
    %c0_i32_0 = arith.constant 0 : i32
    %c0_i32_1 = arith.constant 0 : i32
    return %c0_i32, %c0_i32_0 : i32, i32
  }
  func.func @transform_3(%arg0: i32) -> (i32, i32) {
    %c0_i32 = arith.constant 0 : i32
    %c0_i32_0 = arith.constant 0 : i32
    %c0_i32_1 = arith.constant 0 : i32
    return %c0_i32, %c0_i32_0 : i32, i32
  }
  func.func @transform_4(%arg0: i32) -> (i32, i32) {
    %c0_i32 = arith.constant 0 : i32
    %c0_i32_0 = arith.constant 0 : i32
    %c0_i32_1 = arith.constant 0 : i32
    return %c0_i32, %c0_i32_0 : i32, i32
  }
  func.func @transform_5(%arg0: i32) -> (i32, i32) {
    %c0_i32 = arith.constant 0 : i32
    %c0_i32_0 = arith.constant 0 : i32
    %c0_i32_1 = arith.constant 0 : i32
    return %c0_i32, %c0_i32_0 : i32, i32
  }
  func.func @transform_6(%arg0: i32) -> (i32, i32) {
    %c0_i32 = arith.constant 0 : i32
    %c0_i32_0 = arith.constant 0 : i32
    %c0_i32_1 = arith.constant 0 : i32
    return %c0_i32, %c0_i32_0 : i32, i32
  }
  func.func @transform_7(%arg0: i32) -> (i32, i32) {
    %c0_i32 = arith.constant 0 : i32
    %c0_i32_0 = arith.constant 0 : i32
    %c0_i32_1 = arith.constant 0 : i32
    return %c0_i32, %c0_i32_0 : i32, i32
  }
  func.func @transform_8(%arg0: i32) -> (i32, i32) {
    %c0_i32 = arith.constant 0 : i32
    %c0_i32_0 = arith.constant 0 : i32
    %c0_i32_1 = arith.constant 0 : i32
    return %c0_i32, %c0_i32_0 : i32, i32
  }
  func.func @transform_9(%arg0: i32) -> (i32, i32) {
    %c0_i32 = arith.constant 0 : i32
    %c0_i32_0 = arith.constant 0 : i32
    %c0_i32_1 = arith.constant 0 : i32
    return %c0_i32, %c0_i32_0 : i32, i32
  }
  func.func @transform_10(%arg0: i32) -> (i32, i32) {
    %c0_i32 = arith.constant 0 : i32
    %c0_i32_0 = arith.constant 0 : i32
    %c0_i32_1 = arith.constant 0 : i32
    return %c0_i32, %c0_i32_0 : i32, i32
  }
  func.func @transform_11(%arg0: i32) -> (i32, i32) {
    %c0_i32 = arith.constant 0 : i32
    %c0_i32_0 = arith.constant 0 : i32
    %c0_i32_1 = arith.constant 0 : i32
    return %c0_i32, %c0_i32_0 : i32, i32
  }
  func.func @transform_12(%arg0: i32) -> (i32, i32) {
    %c0_i32 = arith.constant 0 : i32
    %c0_i32_0 = arith.constant 0 : i32
    %c0_i32_1 = arith.constant 0 : i32
    return %c0_i32, %c0_i32_0 : i32, i32
  }
  func.func @transform_13(%arg0: i32) -> (i32, i32, i32) {
    %c0_i32 = arith.constant 0 : i32
    %c0_i32_0 = arith.constant 0 : i32
    %c0_i32_1 = arith.constant 0 : i32
    return %arg0, %c0_i32, %c0_i32_0 : i32, i32, i32
  }
}

</mosaic_0001>

<llo_original>
// kernel: tpu_custom_call.1
$region0: #{tpu_custom_call.1}
  #allocation0 [shape = 'u32[]', space=smem, size = 0x4, offset = 0x4, fixed_abs, tag = 'smem constant byte address 0x4 - core index']
  #allocation1 [shape = 'u32[144,128]{1,0:T(1,128)}', space=vmem, size = 0x12000, scoped, tag = 'internal scratch']
  #allocation2 [shape = 'f32[144,256]{1,0:T(8,128)}', space=vmem, size = 0x24000, scoped, tag = 'scratch operand']
  #allocation3 [shape = 'f32[1,1]{1,0:T(1,128)S(1)}', space=vmem, size = 0x200, scoped, tag = 'scoped memory for tpu_custom_call.1']
  %s0 = inlined_call_operand.vmem [shape: f32[2,4,256], index: 0, kind: input, shape index: {}]
  %s1 = inlined_call_operand.vmem [shape: f32[2,1,256], index: 1, kind: input, shape index: {}]
  %s2 = inlined_call_operand.vmem [shape: f32[9,256], index: 2, kind: input, shape index: {}]
  %s3 = inlined_call_operand.vmem [shape: f32[16,4], index: 3, kind: input, shape index: {}]
  %s4 = inlined_call_operand.vmem [shape: f32[16,1], index: 4, kind: input, shape index: {}]
  %s5 = inlined_call_operand.vmem [shape: f32[16,144], index: 5, kind: input, shape index: {}]
  %s6 = inlined_call_operand.vmem [shape: f32[16,1], index: 6, kind: input, shape index: {}]
  %s7 = inlined_call_operand.vmem [shape: f32[16,144], index: 7, kind: input, shape index: {}]
  %s8 = inlined_call_operand.vmem [shape: f32[16,1], index: 8, kind: input, shape index: {}]
  %s9 = inlined_call_operand.vmem [shape: f32[16,144], index: 9, kind: input, shape index: {}]
  %s10 = inlined_call_operand.vmem [shape: f32[16,1], index: 10, kind: input, shape index: {}]
  %s11 = inlined_call_operand.vmem [shape: f32[144,1], index: 11, kind: input, shape index: {}]
  %s12 = inlined_call_operand.<no memory space> [shape: f32[1,1], index: 12, kind: input, shape index: {}]
  %s13 = inlined_call_operand.hbm [shape: f32[2,1,256], index: 13, kind: output, shape index: {}]
  %s14 = sld [smem:[#allocation0]]
  $region85: #{tpu_custom_call.1} parent=0
    _
  %s16 = ssub.s32 1, %s14
  %s17 = scalar_select 0, %s16, %s14
  %v18 = vstv %s12
  %19 = vst [vmem:[#allocation3] sm:$0x1] %v18
  $region1: #{tpu_custom_call.1} parent=0
    #allocation4 [shape = 'u8[2048]{0}', space=vmem, size = 0x800, scoped, tag = 'output window, operand 0']
    #allocation5 [shape = 's32[2]{0}', space=sflag, size = 0x8, scoped, tag = 'scoped memory for tpu_custom_call.1']
    %20 = vsyncpa [#allocation5], 0
    %s21 = scalar_lea.sflag [#allocation5], 1
    %22 = vsyncpa %s21, 0
    loop: start=0, step=1, limit=4
    $region2: #{tpu_custom_call.1} parent=1 // loop_pre_header
      _
    $region3: #{tpu_custom_call.1} parent=1 // loop_header
      %s24 = sphi 0, %s28
      %p25 = scmp.ge.s32.totalorder %s24, 4
      %s34 = sphi 0, %s36
      %s37 = sphi 0, %s34
      %s38 = sphi 0, %s37
      %s54 = sphi 0, %s38
      %s60 = sphi 0, %s62
      %s63 = sphi 0, %s60
      %s64 = sphi 0, %s63
      %s80 = sphi 0, %s64
      %s84 = sphi 0, %s84
      %s86 = sphi 0, %s84
      %s87 = sphi 0, %s86
      %s101 = sphi 0, %s87
      %s105 = sphi 0, %s105
      %s107 = sphi 0, %s105
      %s108 = sphi 0, %s107
      %s122 = sphi 0, %s108
      %s126 = sphi 0, %s126
      %s128 = sphi 0, %s126
      %s129 = sphi 0, %s128
      %s143 = sphi 0, %s129
      %s147 = sphi 0, %s147
      %s149 = sphi 0, %s147
      %s150 = sphi 0, %s149
      %s164 = sphi 0, %s150
      %s168 = sphi 0, %s168
      %s170 = sphi 0, %s168
      %s171 = sphi 0, %s170
      %s185 = sphi 0, %s171
      %s189 = sphi 0, %s189
      %s191 = sphi 0, %s189
      %s192 = sphi 0, %s191
      %s206 = sphi 0, %s192
      %s210 = sphi 0, %s210
      %s212 = sphi 0, %s210
      %s213 = sphi 0, %s212
      %s227 = sphi 0, %s213
      %s231 = sphi 0, %s231
      %s233 = sphi 0, %s231
      %s234 = sphi 0, %s233
      %s248 = sphi 0, %s234
      %s252 = sphi 0, %s252
      %s254 = sphi 0, %s252
      %s255 = sphi 0, %s254
      %s269 = sphi 0, %s255
      %s273 = sphi 0, %s273
      %s275 = sphi 0, %s273
      %s276 = sphi 0, %s275
      %s290 = sphi 0, %s276
      %s294 = sphi 0, %s294
      %s296 = sphi 0, %s294
      %s297 = sphi 0, %s296
      %s311 = sphi 0, %s297
      %s317 = sphi 0, %s319
      %s320 = sphi 0, %s317
      %s321 = sphi 0, %s320
      %s337 = sphi 0, %s321
    $region4: #{tpu_custom_call.1} parent=1 // loop_header_branch
      %27 = sbr.rel (%p25) target = $region8
    $region5: #{tpu_custom_call.1} parent=1 // loop_body
      %s29 = ssub.s32 %s24, 1
      %s30 = ssub.s32 %s24, 2
      %s31 = sadd.s32 %s24, 1
      %s32 = ssub.s32 %s24, %s31
      %p33 = scmp.eq.s32.totalorder %s32, 0
      %s35 = sadd.s32 %s34, 1
      %s36 = scalar_select %p33, %s34, %s35
      %p39 = pneg %p33
      %p40 = scmp.eq.s32.totalorder %s24, 1
      %p41 = por %p39, %p40
      %p42 = scmp.ne.s32.totalorder %s34, %s37
      %p43 = scmp.eq.s32.totalorder %s24, 0
      %p44 = por %p42, %p43
      %p45 = scmp.ne.s32.totalorder %s34, %s37
      %p46 = scmp.eq.s32.totalorder %s29, 1
      %p47 = por %p45, %p46
      %p48 = scmp.ne.s32.totalorder %s37, %s38
      %p49 = scmp.eq.s32.totalorder %s29, 0
      %p50 = por %p48, %p49
      %p51 = scmp.ne.s32.totalorder %s37, %s38
      %p52 = scmp.eq.s32.totalorder %s30, 1
      %p53 = por %p51, %p52
      %p55 = scmp.ne.s32.totalorder %s38, %s54
      %p56 = scmp.eq.s32.totalorder %s30, 0
      %p57 = por %p55, %p56
      %s58 = ssub.s32 %s24, %s31
      %p59 = scmp.eq.s32.totalorder %s58, 0
      %s61 = sadd.s32 %s60, 1
      %s62 = scalar_select %p59, %s60, %s61
      %p65 = pneg %p59
      %p66 = scmp.eq.s32.totalorder %s24, 1
      %p67 = por %p65, %p66
      %p68 = scmp.ne.s32.totalorder %s60, %s63
      %p69 = scmp.eq.s32.totalorder %s24, 0
      %p70 = por %p68, %p69
      %p71 = scmp.ne.s32.totalorder %s60, %s63
      %p72 = scmp.eq.s32.totalorder %s29, 1
      %p73 = por %p71, %p72
      %p74 = scmp.ne.s32.totalorder %s63, %s64
      %p75 = scmp.eq.s32.totalorder %s29, 0
      %p76 = por %p74, %p75
      %p77 = scmp.ne.s32.totalorder %s63, %s64
      %p78 = scmp.eq.s32.totalorder %s30, 1
      %p79 = por %p77, %p78
      %p81 = scmp.ne.s32.totalorder %s64, %s80
      %p82 = scmp.eq.s32.totalorder %s30, 0
      %p83 = por %p81, %p82
      %s85 = sadd.s32 %s84, 1
      %p88 = scmp.eq.s32.totalorder %s24, 1
      %p89 = scmp.ne.s32.totalorder %s84, %s86
      %p90 = scmp.eq.s32.totalorder %s24, 0
      %p91 = por %p89, %p90
      %p92 = scmp.ne.s32.totalorder %s84, %s86
      %p93 = scmp.eq.s32.totalorder %s29, 1
      %p94 = por %p92, %p93
      %p95 = scmp.ne.s32.totalorder %s86, %s87
      %p96 = scmp.eq.s32.totalorder %s29, 0
      %p97 = por %p95, %p96
      %p98 = scmp.ne.s32.totalorder %s86, %s87
      %p99 = scmp.eq.s32.totalorder %s30, 1
      %p100 = por %p98, %p99
      %p102 = scmp.ne.s32.totalorder %s87, %s101
      %p103 = scmp.eq.s32.totalorder %s30, 0
      %p104 = por %p102, %p103
      %s106 = sadd.s32 %s105, 1
      %p109 = scmp.eq.s32.totalorder %s24, 1
      %p110 = scmp.ne.s32.totalorder %s105, %s107
      %p111 = scmp.eq.s32.totalorder %s24, 0
      %p112 = por %p110, %p111
      %p113 = scmp.ne.s32.totalorder %s105, %s107
      %p114 = scmp.eq.s32.totalorder %s29, 1
      %p115 = por %p113, %p114
      %p116 = scmp.ne.s32.totalorder %s107, %s108
      %p117 = scmp.eq.s32.totalorder %s29, 0
      %p118 = por %p116, %p117
      %p119 = scmp.ne.s32.totalorder %s107, %s108
      %p120 = scmp.eq.s32.totalorder %s30, 1
      %p121 = por %p119, %p120
      %p123 = scmp.ne.s32.totalorder %s108, %s122
      %p124 = scmp.eq.s32.totalorder %s30, 0
      %p125 = por %p123, %p124
      %s127 = sadd.s32 %s126, 1
      %p130 = scmp.eq.s32.totalorder %s24, 1
      %p131 = scmp.ne.s32.totalorder %s126, %s128
      %p132 = scmp.eq.s32.totalorder %s24, 0
      %p133 = por %p131, %p132
      %p134 = scmp.ne.s32.totalorder %s126, %s128
      %p135 = scmp.eq.s32.totalorder %s29, 1
      %p136 = por %p134, %p135
      %p137 = scmp.ne.s32.totalorder %s128, %s129
      %p138 = scmp.eq.s32.totalorder %s29, 0
      %p139 = por %p137, %p138
      %p140 = scmp.ne.s32.totalorder %s128, %s129
      %p141 = scmp.eq.s32.totalorder %s30, 1
      %p142 = por %p140, %p141
      %p144 = scmp.ne.s32.totalorder %s129, %s143
      %p145 = scmp.eq.s32.totalorder %s30, 0
      %p146 = por %p144, %p145
      %s148 = sadd.s32 %s147, 1
      %p151 = scmp.eq.s32.totalorder %s24, 1
      %p152 = scmp.ne.s32.totalorder %s147, %s149
      %p153 = scmp.eq.s32.totalorder %s24, 0
      %p154 = por %p152, %p153
      %p155 = scmp.ne.s32.totalorder %s147, %s149
      %p156 = scmp.eq.s32.totalorder %s29, 1
      %p157 = por %p155, %p156
      %p158 = scmp.ne.s32.totalorder %s149, %s150
      %p159 = scmp.eq.s32.totalorder %s29, 0
      %p160 = por %p158, %p159
      %p161 = scmp.ne.s32.totalorder %s149, %s150
      %p162 = scmp.eq.s32.totalorder %s30, 1
      %p163 = por %p161, %p162
      %p165 = scmp.ne.s32.totalorder %s150, %s164
      %p166 = scmp.eq.s32.totalorder %s30, 0
      %p167 = por %p165, %p166
      %s169 = sadd.s32 %s168, 1
      %p172 = scmp.eq.s32.totalorder %s24, 1
      %p173 = scmp.ne.s32.totalorder %s168, %s170
      %p174 = scmp.eq.s32.totalorder %s24, 0
      %p175 = por %p173, %p174
      %p176 = scmp.ne.s32.totalorder %s168, %s170
      %p177 = scmp.eq.s32.totalorder %s29, 1
      %p178 = por %p176, %p177
      %p179 = scmp.ne.s32.totalorder %s170, %s171
      %p180 = scmp.eq.s32.totalorder %s29, 0
      %p181 = por %p179, %p180
      %p182 = scmp.ne.s32.totalorder %s170, %s171
      %p183 = scmp.eq.s32.totalorder %s30, 1
      %p184 = por %p182, %p183
      %p186 = scmp.ne.s32.totalorder %s171, %s185
      %p187 = scmp.eq.s32.totalorder %s30, 0
      %p188 = por %p186, %p187
      %s190 = sadd.s32 %s189, 1
      %p193 = scmp.eq.s32.totalorder %s24, 1
      %p194 = scmp.ne.s32.totalorder %s189, %s191
      %p195 = scmp.eq.s32.totalorder %s24, 0
      %p196 = por %p194, %p195
      %p197 = scmp.ne.s32.totalorder %s189, %s191
      %p198 = scmp.eq.s32.totalorder %s29, 1
      %p199 = por %p197, %p198
      %p200 = scmp.ne.s32.totalorder %s191, %s192
      %p201 = scmp.eq.s32.totalorder %s29, 0
      %p202 = por %p200, %p201
      %p203 = scmp.ne.s32.totalorder %s191, %s192
      %p204 = scmp.eq.s32.totalorder %s30, 1
      %p205 = por %p203, %p204
      %p207 = scmp.ne.s32.totalorder %s192, %s206
      %p208 = scmp.eq.s32.totalorder %s30, 0
      %p209 = por %p207, %p208
      %s211 = sadd.s32 %s210, 1
      %p214 = scmp.eq.s32.totalorder %s24, 1
      %p215 = scmp.ne.s32.totalorder %s210, %s212
      %p216 = scmp.eq.s32.totalorder %s24, 0
      %p217 = por %p215, %p216
      %p218 = scmp.ne.s32.totalorder %s210, %s212
      %p219 = scmp.eq.s32.totalorder %s29, 1
      %p220 = por %p218, %p219
      %p221 = scmp.ne.s32.totalorder %s212, %s213
      %p222 = scmp.eq.s32.totalorder %s29, 0
      %p223 = por %p221, %p222
      %p224 = scmp.ne.s32.totalorder %s212, %s213
      %p225 = scmp.eq.s32.totalorder %s30, 1
      %p226 = por %p224, %p225
      %p228 = scmp.ne.s32.totalorder %s213, %s227
      %p229 = scmp.eq.s32.totalorder %s30, 0
      %p230 = por %p228, %p229
      %s232 = sadd.s32 %s231, 1
      %p235 = scmp.eq.s32.totalorder %s24, 1
      %p236 = scmp.ne.s32.totalorder %s231, %s233
      %p237 = scmp.eq.s32.totalorder %s24, 0
      %p238 = por %p236, %p237
      %p239 = scmp.ne.s32.totalorder %s231, %s233
      %p240 = scmp.eq.s32.totalorder %s29, 1
      %p241 = por %p239, %p240
      %p242 = scmp.ne.s32.totalorder %s233, %s234
      %p243 = scmp.eq.s32.totalorder %s29, 0
      %p244 = por %p242, %p243
      %p245 = scmp.ne.s32.totalorder %s233, %s234
      %p246 = scmp.eq.s32.totalorder %s30, 1
      %p247 = por %p245, %p246
      %p249 = scmp.ne.s32.totalorder %s234, %s248
      %p250 = scmp.eq.s32.totalorder %s30, 0
      %p251 = por %p249, %p250
      %s253 = sadd.s32 %s252, 1
      %p256 = scmp.eq.s32.totalorder %s24, 1
      %p257 = scmp.ne.s32.totalorder %s252, %s254
      %p258 = scmp.eq.s32.totalorder %s24, 0
      %p259 = por %p257, %p258
      %p260 = scmp.ne.s32.totalorder %s252, %s254
      %p261 = scmp.eq.s32.totalorder %s29, 1
      %p262 = por %p260, %p261
      %p263 = scmp.ne.s32.totalorder %s254, %s255
      %p264 = scmp.eq.s32.totalorder %s29, 0
      %p265 = por %p263, %p264
      %p266 = scmp.ne.s32.totalorder %s254, %s255
      %p267 = scmp.eq.s32.totalorder %s30, 1
      %p268 = por %p266, %p267
      %p270 = scmp.ne.s32.totalorder %s255, %s269
      %p271 = scmp.eq.s32.totalorder %s30, 0
      %p272 = por %p270, %p271
      %s274 = sadd.s32 %s273, 1
      %p277 = scmp.eq.s32.totalorder %s24, 1
      %p278 = scmp.ne.s32.totalorder %s273, %s275
      %p279 = scmp.eq.s32.totalorder %s24, 0
      %p280 = por %p278, %p279
      %p281 = scmp.ne.s32.totalorder %s273, %s275
      %p282 = scmp.eq.s32.totalorder %s29, 1
      %p283 = por %p281, %p282
      %p284 = scmp.ne.s32.totalorder %s275, %s276
      %p285 = scmp.eq.s32.totalorder %s29, 0
      %p286 = por %p284, %p285
      %p287 = scmp.ne.s32.totalorder %s275, %s276
      %p288 = scmp.eq.s32.totalorder %s30, 1
      %p289 = por %p287, %p288
      %p291 = scmp.ne.s32.totalorder %s276, %s290
      %p292 = scmp.eq.s32.totalorder %s30, 0
      %p293 = por %p291, %p292
      %s295 = sadd.s32 %s294, 1
      %p298 = scmp.eq.s32.totalorder %s24, 1
      %p299 = scmp.ne.s32.totalorder %s294, %s296
      %p300 = scmp.eq.s32.totalorder %s24, 0
      %p301 = por %p299, %p300
      %p302 = scmp.ne.s32.totalorder %s294, %s296
      %p303 = scmp.eq.s32.totalorder %s29, 1
      %p304 = por %p302, %p303
      %p305 = scmp.ne.s32.totalorder %s296, %s297
      %p306 = scmp.eq.s32.totalorder %s29, 0
      %p307 = por %p305, %p306
      %p308 = scmp.ne.s32.totalorder %s296, %s297
      %p309 = scmp.eq.s32.totalorder %s30, 1
      %p310 = por %p308, %p309
      %p312 = scmp.ne.s32.totalorder %s297, %s311
      %p313 = scmp.eq.s32.totalorder %s30, 0
      %p314 = por %p312, %p313
      %s315 = ssub.s32 %s24, %s31
      %p316 = scmp.eq.s32.totalorder %s315, 0
      %s318 = sadd.s32 %s317, 1
      %s319 = scalar_select %p316, %s317, %s318
      %p322 = pneg %p316
      %p323 = scmp.eq.s32.totalorder %s24, 1
      %p324 = por %p322, %p323
      %p325 = scmp.ne.s32.totalorder %s317, %s320
      %p326 = scmp.eq.s32.totalorder %s24, 0
      %p327 = por %p325, %p326
      %p328 = scmp.ne.s32.totalorder %s317, %s320
      %p329 = scmp.eq.s32.totalorder %s29, 1
      %p330 = por %p328, %p329
      %p331 = scmp.ne.s32.totalorder %s320, %s321
      %p332 = scmp.eq.s32.totalorder %s29, 0
      %p333 = por %p331, %p332
      %p334 = scmp.ne.s32.totalorder %s320, %s321
      %p335 = scmp.eq.s32.totalorder %s30, 1
      %p336 = por %p334, %p335
      %p338 = scmp.ne.s32.totalorder %s321, %s337
      %p339 = scmp.eq.s32.totalorder %s30, 0
      %p340 = por %p338, %p339
      %p341 = scmp.le.s32.totalorder 1, %s24
      %p342 = scmp.lt.s32.totalorder %s24, 3
      %p343 = pnand %p341, %p342
      %p344 = pneg %p343
      // Predicated region
      $region9: #{tpu_custom_call.1} parent=5 // pred_check
        _
      $region10: #{tpu_custom_call.1} parent=5 // pred_check_branch
        %346 = sbr.rel (%p343) target = $region12
      $region11: #{tpu_custom_call.1} parent=5 // pred_region
        %s347 = ssub.s32 %s24, 1
        // Predicated region
        $region13: #{tpu_custom_call.1} parent=11 // pred_check
          %p348 = pneg %p97
        $region14: #{tpu_custom_call.1} parent=11 // pred_check_branch
          %350 = sbr.rel (%p348) target = $region16
        $region15: #{tpu_custom_call.1} parent=11 // pred_region
          _
        $region16: #{tpu_custom_call.1} parent=11 // pred_fallthru
          _
        // Predicated region
        $region17: #{tpu_custom_call.1} parent=11 // pred_check
          %p351 = pneg %p118
        $region18: #{tpu_custom_call.1} parent=11 // pred_check_branch
          %353 = sbr.rel (%p351) target = $region20
        $region19: #{tpu_custom_call.1} parent=11 // pred_region
          _
        $region20: #{tpu_custom_call.1} parent=11 // pred_fallthru
          _
        // Predicated region
        $region21: #{tpu_custom_call.1} parent=11 // pred_check
          %p354 = pneg %p139
        $region22: #{tpu_custom_call.1} parent=11 // pred_check_branch
          %356 = sbr.rel (%p354) target = $region24
        $region23: #{tpu_custom_call.1} parent=11 // pred_region
          _
        $region24: #{tpu_custom_call.1} parent=11 // pred_fallthru
          _
        // Predicated region
        $region25: #{tpu_custom_call.1} parent=11 // pred_check
          %p357 = pneg %p160
        $region26: #{tpu_custom_call.1} parent=11 // pred_check_branch
          %359 = sbr.rel (%p357) target = $region28
        $region27: #{tpu_custom_call.1} parent=11 // pred_region
          _
        $region28: #{tpu_custom_call.1} parent=11 // pred_fallthru
          _
        // Predicated region
        $region29: #{tpu_custom_call.1} parent=11 // pred_check
          %p360 = pneg %p181
        $region30: #{tpu_custom_call.1} parent=11 // pred_check_branch
          %362 = sbr.rel (%p360) target = $region32
        $region31: #{tpu_custom_call.1} parent=11 // pred_region
          _
        $region32: #{tpu_custom_call.1} parent=11 // pred_fallthru
          _
        // Predicated region
        $region33: #{tpu_custom_call.1} parent=11 // pred_check
          %p363 = pneg %p202
        $region34: #{tpu_custom_call.1} parent=11 // pred_check_branch
          %365 = sbr.rel (%p363) target = $region36
        $region35: #{tpu_custom_call.1} parent=11 // pred_region
          _
        $region36: #{tpu_custom_call.1} parent=11 // pred_fallthru
          _
        // Predicated region
        $region37: #{tpu_custom_call.1} parent=11 // pred_check
          %p366 = pneg %p223
        $region38: #{tpu_custom_call.1} parent=11 // pred_check_branch
          %368 = sbr.rel (%p366) target = $region40
        $region39: #{tpu_custom_call.1} parent=11 // pred_region
          _
        $region40: #{tpu_custom_call.1} parent=11 // pred_fallthru
          _
        // Predicated region
        $region41: #{tpu_custom_call.1} parent=11 // pred_check
          %p369 = pneg %p244
        $region42: #{tpu_custom_call.1} parent=11 // pred_check_branch
          %371 = sbr.rel (%p369) target = $region44
        $region43: #{tpu_custom_call.1} parent=11 // pred_region
          _
        $region44: #{tpu_custom_call.1} parent=11 // pred_fallthru
          _
        // Predicated region
        $region45: #{tpu_custom_call.1} parent=11 // pred_check
          %p372 = pneg %p265
        $region46: #{tpu_custom_call.1} parent=11 // pred_check_branch
          %374 = sbr.rel (%p372) target = $region48
        $region47: #{tpu_custom_call.1} parent=11 // pred_region
          _
        $region48: #{tpu_custom_call.1} parent=11 // pred_fallthru
          _
        // Predicated region
        $region49: #{tpu_custom_call.1} parent=11 // pred_check
          %p375 = pneg %p286
        $region50: #{tpu_custom_call.1} parent=11 // pred_check_branch
          %377 = sbr.rel (%p375) target = $region52
        $region51: #{tpu_custom_call.1} parent=11 // pred_region
          _
        $region52: #{tpu_custom_call.1} parent=11 // pred_fallthru
          _
        // Predicated region
        $region53: #{tpu_custom_call.1} parent=11 // pred_check
          %p378 = pneg %p307
        $region54: #{tpu_custom_call.1} parent=11 // pred_check_branch
          %380 = sbr.rel (%p378) target = $region56
        $region55: #{tpu_custom_call.1} parent=11 // pred_region
          _
        $region56: #{tpu_custom_call.1} parent=11 // pred_fallthru
          _
      $region12: #{tpu_custom_call.1} parent=5 // pred_fallthru
        _
      %p381 = scmp.lt.s32.totalorder %s24, 2
      // Predicated region
      $region57: #{tpu_custom_call.1} parent=5 // pred_check
        %p382 = pneg %p381
      $region58: #{tpu_custom_call.1} parent=5 // pred_check_branch
        %384 = sbr.rel (%p382) target = $region60
      $region59: #{tpu_custom_call.1} parent=5 // pred_region
        // Predicated region
        $region61: #{tpu_custom_call.1} parent=59 // pred_check
          %p385 = pneg %p44
        $region62: #{tpu_custom_call.1} parent=59 // pred_check_branch
          %387 = sbr.rel (%p385) target = $region64
        $region63: #{tpu_custom_call.1} parent=59 // pred_region
          %p388 = scmp.lt.s32.totalorder %s24, 1
          %s389 = scalar_select %p388, %s24, 1
          %s390 = smul.addr %s389, 2
          %s391 = smul.addr %s390, 4
          %s392 = scalar_lea.vmem %s0, %s391
        $region64: #{tpu_custom_call.1} parent=59 // pred_fallthru
          _
        // Predicated region
        $region65: #{tpu_custom_call.1} parent=59 // pred_check
          %p393 = pneg %p70
        $region66: #{tpu_custom_call.1} parent=59 // pred_check_branch
          %395 = sbr.rel (%p393) target = $region68
        $region67: #{tpu_custom_call.1} parent=59 // pred_region
          %p396 = scmp.lt.s32.totalorder %s24, 1
          %s397 = scalar_select %p396, %s24, 1
          %s398 = smul.addr %s397, 2
          %s399 = scalar_lea.vmem %s1, %s398
        $region68: #{tpu_custom_call.1} parent=59 // pred_fallthru
          _
      $region60: #{tpu_custom_call.1} parent=5 // pred_fallthru
        _
      %p400 = scmp.le.s32.totalorder 1, %s24
      %p401 = scmp.lt.s32.totalorder %s24, 3
      %p402 = pnand %p400, %p401
      %p403 = pneg %p402
      // Predicated region
      $region69: #{tpu_custom_call.1} parent=5 // pred_check
        _
      $region70: #{tpu_custom_call.1} parent=5 // pred_check_branch
        %405 = sbr.rel (%p402) target = $region72
      $region71: #{tpu_custom_call.1} parent=5 // pred_region
        %s406 = ssub.s32 %s24, 1
        %p407 = scmp.lt.s32.totalorder %s29, 1
        %s408 = scalar_select %p407, %s29, 1
        %s409 = smul.addr %s408, 2
        %s410 = smul.addr %s409, 4
        %s411 = scalar_lea.vmem %s0, %s410
        %p412 = pneg %p50
        %p413 = pneg %p47
        %p414 = scmp.lt.s32.totalorder %s29, 1
        %s415 = scalar_select %p414, %s29, 1
        %s416 = smul.addr %s415, 2
        %s417 = scalar_lea.vmem %s1, %s416
        %p418 = pneg %p76
        %p419 = pneg %p73
        %p420 = pneg %p97
        %p421 = pneg %p94
        %p422 = pneg %p118
        %p423 = pneg %p115
        %p424 = pneg %p139
        %p425 = pneg %p136
        %p426 = pneg %p160
        %p427 = pneg %p157
        %p428 = pneg %p181
        %p429 = pneg %p178
        %p430 = pneg %p202
        %p431 = pneg %p199
        %p432 = pneg %p223
        %p433 = pneg %p220
        %p434 = pneg %p244
        %p435 = pneg %p241
        %p436 = pneg %p265
        %p437 = pneg %p262
        %p438 = pneg %p286
        %p439 = pneg %p283
        %p440 = pneg %p307
        %p441 = pneg %p304
        %p442 = pneg %p333
        %p443 = pneg %p330
        %s444 = sand.u32 %s320, 1
        %s445 = scalar_lea.sflag [#allocation5], %s444
        %s446 = sand.u32 %s320, 1
        %s447 = smul.addr %s446, 2
        %s448 = scalar_lea.vmem [#allocation4], %s447
        %p449 = scmp.lt.s32.totalorder %s29, 1
        %s450 = scalar_select %p449, %s29, 1
        %s451 = smul.addr %s450, 2
        %s452 = smul.addr %s451, 4
        %s453 = scalar_lea.vmem %s0, %s452
        %p454 = scmp.lt.s32.totalorder %s29, 1
        %s455 = scalar_select %p454, %s29, 1
        %s456 = smul.addr %s455, 2
        %s457 = scalar_lea.vmem %s1, %s456
        %v458 = vld [vmem:[%s457] sm:$0x3]
        %v459 = vand.u32 2147483647, %v458
        %v460 = vsub.f32 0.0, %v459
        %v461 = vmul.f32 %v460, 1.442695
        %v462 = vpow.pop %v461
        %v463 = vadd.f32 %v462, 1.0
        %v464 = vrcp.pop %v463
        %v465 = vmul.f32 1.0, %v464
        %vm466 = vcmp.ge.f32.partialorder %v458, 0.0
        %v467 = vmul.f32 %v462, %v465
        %v468 = vsel %vm466, %v467, %v465
        %v469 = vld [vmem:[%s3] sm:$0xff]
        %v470 = vld [vmem:[%s3 + $0x8] sm:$0xff]
        %v471 = vld [vmem:[%s453] sm:$0xff]
        %v472 = vld [vmem:[%s4] sm:$0xff]
        %v473 = vld [vmem:[%s4 + $0x8] sm:$0xff]
        %475 = vset.pattern.permute.xlu0 0
        %476 = vperm.xlu0 %475, %v472
        %v477 = vpop.permute.xlu0 %476
        %480 = vset.pattern.permute.xlu0 0
        %481 = vperm.xlu0 %480, %v473
        %v482 = vpop.permute.xlu0 %481
        %v485 = vcombine.high %v471, %v471
        %vm486 = vcmask 31744
        %v488 = vsel %vm486, %v469, 0
        %v491 = vsel %vm486, %v470, 0
        %vm493 = vcmask 1043456
        %v494 = vsel %vm493, %v471, 0
        %v496 = vsel %vm493, %v485, 0
        %498 = vmatprep.subr.mxu0 %v496
        %499 = vmatpush1.msra.mxu0 %v494
        %500 = vmatprep.subr.mxu0 0.0
        %501 = vmatpush1.msra.mxu0 0.0
        %502 = vmatprep.subr.mxu0 0.0
        %503 = vmatpush1.msra.mxu0 0.0
        %504 = vmatprep.subr.mxu0 0.0
        %505 = vmatpush1.msra.mxu0 0.0
        %506 = vmatprep.subr.mxu0 0.0
        %507 = vmatpush1.msra.mxu0 0.0
        %508 = vmatprep.subr.mxu0 0.0
        %509 = vmatpush1.msra.mxu0 0.0
        %510 = vmatprep.subr.mxu0 0.0
        %511 = vmatpush1.msra.mxu0 0.0
        %512 = vmatprep.subr.mxu0 0.0
        %513 = vmatpush1.msra.mxu0 0.0
        %514 = vmatprep.subr.mxu0 0.0
        %515 = vmatpush1.msra.mxu0 0.0
        %516 = vmatprep.subr.mxu0 0.0
        %517 = vmatpush1.msra.mxu0 0.0
        %518 = vmatprep.subr.mxu0 0.0
        %519 = vmatpush1.msra.mxu0 0.0
        %520 = vmatprep.subr.mxu0 0.0
        %521 = vmatpush1.msra.mxu0 0.0
        %522 = vmatprep.subr.mxu0 0.0
        %523 = vmatpush1.msra.mxu0 0.0
        %524 = vmatprep.subr.mxu0 0.0
        %525 = vmatpush1.msra.mxu0 0.0
        %526 = vmatprep.subr.mxu0 0.0
        %527 = vmatpush1.msra.mxu0 0.0
        %528 = vmatprep.subr.mxu0 0.0
        %529 = vmatpush1.msra.mxu0 0.0
        %530 = vmatprep.subr.mxu0 0.0
        %531 = vmatpush1.msra.mxu0 0.0
        %532 = vmatprep.subr.mxu0 0.0
        %533 = vmatpush1.msra.mxu0 0.0
        %534 = vmatprep.subr.mxu0 0.0
        %535 = vmatpush1.msra.mxu0 0.0
        %536 = vmatprep.subr.mxu0 0.0
        %537 = vmatpush1.msra.mxu0 0.0
        %538 = vmatprep.subr.mxu0 0.0
        %539 = vmatpush1.msra.mxu0 0.0
        %540 = vmatprep.subr.mxu0 0.0
        %541 = vmatpush1.msra.mxu0 0.0
        %542 = vmatprep.subr.mxu0 0.0
        %543 = vmatpush1.msra.mxu0 0.0
        %544 = vmatprep.subr.mxu0 0.0
        %545 = vmatpush1.msra.mxu0 0.0
        %546 = vmatprep.subr.mxu0 0.0
        %547 = vmatpush1.msra.mxu0 0.0
        %548 = vmatprep.subr.mxu0 0.0
        %549 = vmatpush1.msra.mxu0 0.0
        %550 = vmatprep.subr.mxu0 0.0
        %551 = vmatpush1.msra.mxu0 0.0
        %552 = vmatprep.subr.mxu0 0.0
        %553 = vmatpush1.msra.mxu0 0.0
        %554 = vmatprep.subr.mxu0 0.0
        %555 = vmatpush1.msra.mxu0 0.0
        %556 = vmatprep.subr.mxu0 0.0
        %557 = vmatpush1.msra.mxu0 0.0
        %558 = vmatprep.subr.mxu0 0.0
        %559 = vmatpush1.msra.mxu0 0.0
        %560 = vmatprep.subr.mxu0 0.0
        %561 = vmatpush1.msra.mxu0 0.0
        %562 = vmatprep.mubr.f32.mxu0 0.0
        %563 = vmatmul.mubr.f32.gmra.mrb[0].mxu0 %v488
        %v564 = vpop.f32.mrb[0].mxu0
        %v565 = vadd.f32 %v477, %v564
        %v566 = vpop.f32.mrb[0].mxu0
        %v567 = vadd.f32 %v477, %v566
        %568 = vmatprep.mubr.f32.mxu0 0.0
        %569 = vmatmul.mubr.f32.gmra.mrb[0].mxu0 %v491
        %v570 = vpop.f32.mrb[0].mxu0
        %v571 = vadd.f32 %v482, %v570
        %v572 = vpop.f32.mrb[0].mxu0
        %v573 = vadd.f32 %v482, %v572
        %574 = vdwg.mxu0
        %v575 = vmax.f32 %v565, 0.0
        %v576 = vmax.f32 %v567, 0.0
        %v577 = vmax.f32 %v571, 0.0
        %v578 = vmax.f32 %v573, 0.0
        %v580 = vlaneseq
        %v581 = vshrl.u32 %v580, 7
        %v582 = vsub.s32 0, %v581
        %v583 = vrot.slane %v468, %v582
        %v584 = vlaneseq
        %v585 = vshrl.u32 %v584, 7
        %v586 = vsub.s32 1, %v585
        %v587 = vrot.slane %v468, %v586
        %v590 = vmul.f32 %v575, %v583
        %v591 = vmul.f32 %v576, %v587
        %v592 = vmul.f32 %v577, %v583
        %v593 = vmul.f32 %v578, %v587
        %594 = vrot.lane.b32.xlu0 %v590, 17
        %v595 = vpop.permute.xlu0 %594
        %596 = vrot.lane.b32.xlu0 %v592, 17
        %v597 = vpop.permute.xlu0 %596
        %598 = vrot.lane.b32.xlu0 %v591, 17
        %v599 = vpop.permute.xlu0 %598
        %600 = vrot.lane.b32.xlu0 %v593, 17
        %v601 = vpop.permute.xlu0 %600
        %v602 = vlaneseq
        %v603 = vand.u32 %v602, 127
        %vm604 = vcmp.lt.s32.totalorder %v603, 17
        %v605 = vsel %vm604, %v595, %v599
        %v606 = vsel %vm604, %v597, %v601
        %v607 = vsel %vm604, %v599, %v595
        %v608 = vsel %vm604, %v601, %v597
        %v609 = vld [vmem:[%s2] ss:$8 sm:$0x3]
        %v611 = vlaneseq
        %v612 = vshrl.u32 %v611, 7
        %v613 = vsub.s32 0, %v612
        %v614 = vrot.slane %v609, %v613
        %v615 = vlaneseq
        %v616 = vshrl.u32 %v615, 7
        %v617 = vsub.s32 1, %v616
        %v618 = vrot.slane %v609, %v617
        %v621 = vmul.f32 %v607, %v614
        %v622 = vmul.f32 %v605, %v618
        %v623 = vmul.f32 %v608, %v614
        %v624 = vmul.f32 %v606, %v618
        %625 = vst [vmem:[#allocation2] sm:$0xff] %v621
        %626 = vst [vmem:[#allocation2 + $0x8] sm:$0xff] %v622
        %627 = vst [vmem:[#allocation2 + $0x10] sm:$0xff] %v623
        %628 = vst [vmem:[#allocation2 + $0x18] sm:$0xff] %v624
        %629 = vrot.lane.b32.xlu0 %v590, 16
        %v630 = vpop.permute.xlu0 %629
        %631 = vrot.lane.b32.xlu0 %v592, 16
        %v632 = vpop.permute.xlu0 %631
        %633 = vrot.lane.b32.xlu0 %v591, 16
        %v634 = vpop.permute.xlu0 %633
        %635 = vrot.lane.b32.xlu0 %v593, 16
        %v636 = vpop.permute.xlu0 %635
        %vm637 = vcmp.lt.s32.totalorder %v603, 16
        %v638 = vsel %vm637, %v630, %v634
        %v639 = vsel %vm637, %v632, %v636
        %v640 = vsel %vm637, %v634, %v630
        %v641 = vsel %vm637, %v636, %v632
        %s642 = scalar_lea.vmem %s2, 1
        %v643 = vld [vmem:[%s642] ss:$8 sm:$0x3]
        %v645 = vlaneseq
        %v646 = vshrl.u32 %v645, 7
        %v647 = vsub.s32 0, %v646
        %v648 = vrot.slane %v643, %v647
        %v649 = vlaneseq
        %v650 = vshrl.u32 %v649, 7
        %v651 = vsub.s32 1, %v650
        %v652 = vrot.slane %v643, %v651
        %v655 = vmul.f32 %v640, %v648
        %v656 = vmul.f32 %v638, %v652
        %v657 = vmul.f32 %v641, %v648
        %v658 = vmul.f32 %v639, %v652
        %659 = vst [vmem:[#allocation2 + $0x20] sm:$0xff] %v655
        %660 = vst [vmem:[#allocation2 + $0x28] sm:$0xff] %v656
        %661 = vst [vmem:[#allocation2 + $0x30] sm:$0xff] %v657
        %662 = vst [vmem:[#allocation2 + $0x38] sm:$0xff] %v658
        %663 = vrot.lane.b32.xlu0 %v590, 15
        %v664 = vpop.permute.xlu0 %663
        %665 = vrot.lane.b32.xlu0 %v592, 15
        %v666 = vpop.permute.xlu0 %665
        %667 = vrot.lane.b32.xlu0 %v591, 15
        %v668 = vpop.permute.xlu0 %667
        %669 = vrot.lane.b32.xlu0 %v593, 15
        %v670 = vpop.permute.xlu0 %669
        %vm671 = vcmp.lt.s32.totalorder %v603, 15
        %v672 = vsel %vm671, %v664, %v668
        %v673 = vsel %vm671, %v666, %v670
        %v674 = vsel %vm671, %v668, %v664
        %v675 = vsel %vm671, %v670, %v666
        %s676 = scalar_lea.vmem %s2, 2
        %v677 = vld [vmem:[%s676] ss:$8 sm:$0x3]
        %v679 = vlaneseq
        %v680 = vshrl.u32 %v679, 7
        %v681 = vsub.s32 0, %v680
        %v682 = vrot.slane %v677, %v681
        %v683 = vlaneseq
        %v684 = vshrl.u32 %v683, 7
        %v685 = vsub.s32 1, %v684
        %v686 = vrot.slane %v677, %v685
        %v689 = vmul.f32 %v674, %v682
        %v690 = vmul.f32 %v672, %v686
        %v691 = vmul.f32 %v675, %v682
        %v692 = vmul.f32 %v673, %v686
        %693 = vst [vmem:[#allocation2 + $0x40] sm:$0xff] %v689
        %694 = vst [vmem:[#allocation2 + $0x48] sm:$0xff] %v690
        %695 = vst [vmem:[#allocation2 + $0x50] sm:$0xff] %v691
        %696 = vst [vmem:[#allocation2 + $0x58] sm:$0xff] %v692
        %697 = vrot.lane.b32.xlu0 %v590, 1
        %v698 = vpop.permute.xlu0 %697
        %699 = vrot.lane.b32.xlu0 %v592, 1
        %v700 = vpop.permute.xlu0 %699
        %701 = vrot.lane.b32.xlu0 %v591, 1
        %v702 = vpop.permute.xlu0 %701
        %703 = vrot.lane.b32.xlu0 %v593, 1
        %v704 = vpop.permute.xlu0 %703
        %vm705 = vcmp.lt.s32.totalorder %v603, 1
        %v706 = vsel %vm705, %v698, %v702
        %v707 = vsel %vm705, %v700, %v704
        %v708 = vsel %vm705, %v702, %v698
        %v709 = vsel %vm705, %v704, %v700
        %s710 = scalar_lea.vmem %s2, 3
        %v711 = vld [vmem:[%s710] ss:$8 sm:$0x3]
        %v713 = vlaneseq
        %v714 = vshrl.u32 %v713, 7
        %v715 = vsub.s32 0, %v714
        %v716 = vrot.slane %v711, %v715
        %v717 = vlaneseq
        %v718 = vshrl.u32 %v717, 7
        %v719 = vsub.s32 1, %v718
        %v720 = vrot.slane %v711, %v719
        %v723 = vmul.f32 %v708, %v716
        %v724 = vmul.f32 %v706, %v720
        %v725 = vmul.f32 %v709, %v716
        %v726 = vmul.f32 %v707, %v720
        %727 = vst [vmem:[#allocation2 + $0x60] sm:$0xff] %v723
        %728 = vst [vmem:[#allocation2 + $0x68] sm:$0xff] %v724
        %729 = vst [vmem:[#allocation2 + $0x70] sm:$0xff] %v725
        %730 = vst [vmem:[#allocation2 + $0x78] sm:$0xff] %v726
        %s731 = scalar_lea.vmem %s2, 4
        %v732 = vld [vmem:[%s731] ss:$8 sm:$0x3]
        %v734 = vlaneseq
        %v735 = vshrl.u32 %v734, 7
        %v736 = vsub.s32 0, %v735
        %v737 = vrot.slane %v732, %v736
        %v738 = vlaneseq
        %v739 = vshrl.u32 %v738, 7
        %v740 = vsub.s32 1, %v739
        %v741 = vrot.slane %v732, %v740
        %v744 = vmul.f32 %v590, %v737
        %v745 = vmul.f32 %v591, %v741
        %v746 = vmul.f32 %v592, %v737
        %v747 = vmul.f32 %v593, %v741
        %748 = vst [vmem:[#allocation2 + $0x80] sm:$0xff] %v744
        %749 = vst [vmem:[#allocation2 + $0x88] sm:$0xff] %v745
        %750 = vst [vmem:[#allocation2 + $0x90] sm:$0xff] %v746
        %751 = vst [vmem:[#allocation2 + $0x98] sm:$0xff] %v747
        %752 = vrot.lane.b32.xlu0 %v590, 127
        %v753 = vpop.permute.xlu0 %752
        %754 = vrot.lane.b32.xlu0 %v592, 127
        %v755 = vpop.permute.xlu0 %754
        %756 = vrot.lane.b32.xlu0 %v591, 127
        %v757 = vpop.permute.xlu0 %756
        %758 = vrot.lane.b32.xlu0 %v593, 127
        %v759 = vpop.permute.xlu0 %758
        %vm760 = vcmp.lt.s32.totalorder %v603, 127
        %v761 = vsel %vm760, %v753, %v757
        %v762 = vsel %vm760, %v755, %v759
        %v763 = vsel %vm760, %v757, %v753
        %v764 = vsel %vm760, %v759, %v755
        %s765 = scalar_lea.vmem %s2, 5
        %v766 = vld [vmem:[%s765] ss:$8 sm:$0x3]
        %v768 = vlaneseq
        %v769 = vshrl.u32 %v768, 7
        %v770 = vsub.s32 0, %v769
        %v771 = vrot.slane %v766, %v770
        %v772 = vlaneseq
        %v773 = vshrl.u32 %v772, 7
        %v774 = vsub.s32 1, %v773
        %v775 = vrot.slane %v766, %v774
        %v778 = vmul.f32 %v761, %v771
        %v779 = vmul.f32 %v763, %v775
        %v780 = vmul.f32 %v762, %v771
        %v781 = vmul.f32 %v764, %v775
        %782 = vst [vmem:[#allocation2 + $0xa0] sm:$0xff] %v778
        %783 = vst [vmem:[#allocation2 + $0xa8] sm:$0xff] %v779
        %784 = vst [vmem:[#allocation2 + $0xb0] sm:$0xff] %v780
        %785 = vst [vmem:[#allocation2 + $0xb8] sm:$0xff] %v781
        %786 = vrot.lane.b32.xlu0 %v590, 113
        %v787 = vpop.permute.xlu0 %786
        %788 = vrot.lane.b32.xlu0 %v592, 113
        %v789 = vpop.permute.xlu0 %788
        %790 = vrot.lane.b32.xlu0 %v591, 113
        %v791 = vpop.permute.xlu0 %790
        %792 = vrot.lane.b32.xlu0 %v593, 113
        %v793 = vpop.permute.xlu0 %792
        %vm794 = vcmp.lt.s32.totalorder %v603, 113
        %v795 = vsel %vm794, %v787, %v791
        %v796 = vsel %vm794, %v789, %v793
        %v797 = vsel %vm794, %v791, %v787
        %v798 = vsel %vm794, %v793, %v789
        %s799 = scalar_lea.vmem %s2, 6
        %v800 = vld [vmem:[%s799] ss:$8 sm:$0x3]
        %v802 = vlaneseq
        %v803 = vshrl.u32 %v802, 7
        %v804 = vsub.s32 0, %v803
        %v805 = vrot.slane %v800, %v804
        %v806 = vlaneseq
        %v807 = vshrl.u32 %v806, 7
        %v808 = vsub.s32 1, %v807
        %v809 = vrot.slane %v800, %v808
        %v812 = vmul.f32 %v795, %v805
        %v813 = vmul.f32 %v797, %v809
        %v814 = vmul.f32 %v796, %v805
        %v815 = vmul.f32 %v798, %v809
        %816 = vst [vmem:[#allocation2 + $0xc0] sm:$0xff] %v812
        %817 = vst [vmem:[#allocation2 + $0xc8] sm:$0xff] %v813
        %818 = vst [vmem:[#allocation2 + $0xd0] sm:$0xff] %v814
        %819 = vst [vmem:[#allocation2 + $0xd8] sm:$0xff] %v815
        %820 = vrot.lane.b32.xlu0 %v590, 112
        %v821 = vpop.permute.xlu0 %820
        %822 = vrot.lane.b32.xlu0 %v592, 112
        %v823 = vpop.permute.xlu0 %822
        %824 = vrot.lane.b32.xlu0 %v591, 112
        %v825 = vpop.permute.xlu0 %824
        %826 = vrot.lane.b32.xlu0 %v593, 112
        %v827 = vpop.permute.xlu0 %826
        %vm828 = vcmp.lt.s32.totalorder %v603, 112
        %v829 = vsel %vm828, %v821, %v825
        %v830 = vsel %vm828, %v823, %v827
        %v831 = vsel %vm828, %v825, %v821
        %v832 = vsel %vm828, %v827, %v823
        %s833 = scalar_lea.vmem %s2, 7
        %v834 = vld [vmem:[%s833] ss:$8 sm:$0x3]
        %v836 = vlaneseq
        %v837 = vshrl.u32 %v836, 7
        %v838 = vsub.s32 0, %v837
        %v839 = vrot.slane %v834, %v838
        %v840 = vlaneseq
        %v841 = vshrl.u32 %v840, 7
        %v842 = vsub.s32 1, %v841
        %v843 = vrot.slane %v834, %v842
        %v846 = vmul.f32 %v829, %v839
        %v847 = vmul.f32 %v831, %v843
        %v848 = vmul.f32 %v830, %v839
        %v849 = vmul.f32 %v832, %v843
        %850 = vst [vmem:[#allocation2 + $0xe0] sm:$0xff] %v846
        %851 = vst [vmem:[#allocation2 + $0xe8] sm:$0xff] %v847
        %852 = vst [vmem:[#allocation2 + $0xf0] sm:$0xff] %v848
        %853 = vst [vmem:[#allocation2 + $0xf8] sm:$0xff] %v849
        %854 = vrot.lane.b32.xlu0 %v590, 111
        %v855 = vpop.permute.xlu0 %854
        %856 = vrot.lane.b32.xlu0 %v592, 111
        %v857 = vpop.permute.xlu0 %856
        %858 = vrot.lane.b32.xlu0 %v591, 111
        %v859 = vpop.permute.xlu0 %858
        %860 = vrot.lane.b32.xlu0 %v593, 111
        %v861 = vpop.permute.xlu0 %860
        %vm862 = vcmp.lt.s32.totalorder %v603, 111
        %v863 = vsel %vm862, %v855, %v859
        %v864 = vsel %vm862, %v857, %v861
        %v865 = vsel %vm862, %v859, %v855
        %v866 = vsel %vm862, %v861, %v857
        %s867 = scalar_lea.vmem %s2, 16
        %v868 = vld [vmem:[%s867] ss:$8 sm:$0x3]
        %v870 = vlaneseq
        %v871 = vshrl.u32 %v870, 7
        %v872 = vsub.s32 0, %v871
        %v873 = vrot.slane %v868, %v872
        %v874 = vlaneseq
        %v875 = vshrl.u32 %v874, 7
        %v876 = vsub.s32 1, %v875
        %v877 = vrot.slane %v868, %v876
        %v880 = vmul.f32 %v863, %v873
        %v881 = vmul.f32 %v865, %v877
        %v882 = vmul.f32 %v864, %v873
        %v883 = vmul.f32 %v866, %v877
        %884 = vst [vmem:[#allocation2 + $0x100] sm:$0xff] %v880
        %885 = vst [vmem:[#allocation2 + $0x108] sm:$0xff] %v881
        %886 = vst [vmem:[#allocation2 + $0x110] sm:$0xff] %v882
        %887 = vst [vmem:[#allocation2 + $0x118] sm:$0xff] %v883
        %v888 = vld [vmem:[%s5] sm:$0xff]
        %v889 = vld [vmem:[%s5 + $0x8] sm:$0xff]
        %v890 = vld [vmem:[%s5 + $0x10] sm:$0xff]
        %v891 = vld [vmem:[%s5 + $0x18] sm:$0xff]
        %v892 = vld [vmem:[#allocation2] sm:$0xff]
        %v893 = vld [vmem:[#allocation2 + $0x8] sm:$0xff]
        %v894 = vld [vmem:[#allocation2 + $0x10] sm:$0xff]
        %v895 = vld [vmem:[#allocation2 + $0x18] sm:$0xff]
        %v896 = vld [vmem:[#allocation2 + $0x20] sm:$0xff]
        %v897 = vld [vmem:[#allocation2 + $0x28] sm:$0xff]
        %v898 = vld [vmem:[#allocation2 + $0x30] sm:$0xff]
        %v899 = vld [vmem:[#allocation2 + $0x38] sm:$0xff]
        %v900 = vld [vmem:[#allocation2 + $0x40] sm:$0xff]
        %v901 = vld [vmem:[#allocation2 + $0x48] sm:$0xff]
        %v902 = vld [vmem:[#allocation2 + $0x50] sm:$0xff]
        %v903 = vld [vmem:[#allocation2 + $0x58] sm:$0xff]
        %v904 = vld [vmem:[#allocation2 + $0x60] sm:$0xff]
        %v905 = vld [vmem:[#allocation2 + $0x68] sm:$0xff]
        %v906 = vld [vmem:[#allocation2 + $0x70] sm:$0xff]
        %v907 = vld [vmem:[#allocation2 + $0x78] sm:$0xff]
        %v908 = vld [vmem:[#allocation2 + $0x80] sm:$0xff]
        %v909 = vld [vmem:[#allocation2 + $0x88] sm:$0xff]
        %v910 = vld [vmem:[#allocation2 + $0x90] sm:$0xff]
        %v911 = vld [vmem:[#allocation2 + $0x98] sm:$0xff]
        %v912 = vld [vmem:[#allocation2 + $0xa0] sm:$0xff]
        %v913 = vld [vmem:[#allocation2 + $0xa8] sm:$0xff]
        %v914 = vld [vmem:[#allocation2 + $0xb0] sm:$0xff]
        %v915 = vld [vmem:[#allocation2 + $0xb8] sm:$0xff]
        %v916 = vld [vmem:[#allocation2 + $0xc0] sm:$0xff]
        %v917 = vld [vmem:[#allocation2 + $0xc8] sm:$0xff]
        %v918 = vld [vmem:[#allocation2 + $0xd0] sm:$0xff]
        %v919 = vld [vmem:[#allocation2 + $0xd8] sm:$0xff]
        %v920 = vld [vmem:[#allocation2 + $0xe0] sm:$0xff]
        %v921 = vld [vmem:[#allocation2 + $0xe8] sm:$0xff]
        %v922 = vld [vmem:[#allocation2 + $0xf0] sm:$0xff]
        %v923 = vld [vmem:[#allocation2 + $0xf8] sm:$0xff]
        %v924 = vld [vmem:[#allocation2 + $0x100] sm:$0xff]
        %v925 = vld [vmem:[#allocation2 + $0x108] sm:$0xff]
        %v926 = vld [vmem:[#allocation2 + $0x110] sm:$0xff]
        %v927 = vld [vmem:[#allocation2 + $0x118] sm:$0xff]
        %v928 = vld [vmem:[%s6] sm:$0xff]
        %v929 = vld [vmem:[%s6 + $0x8] sm:$0xff]
        %931 = vset.pattern.permute.xlu0 0
        %932 = vperm.xlu0 %931, %v928
        %v933 = vpop.permute.xlu0 %932
        %936 = vset.pattern.permute.xlu0 0
        %937 = vperm.xlu0 %936, %v929
        %v938 = vpop.permute.xlu0 %937
        %vm940 = vcmask 130048
        %v942 = vsel %vm940, %v889, 0
        %v945 = vsel %vm940, %v891, 0
        %947 = vmatprep.subr.mxu0 %v893
        %948 = vmatpush1.msra.mxu0 %v892
        %949 = vmatprep.subr.mxu0 %v895
        %950 = vmatpush1.msra.mxu0 %v894
        %951 = vmatprep.subr.mxu0 %v897
        %952 = vmatpush1.msra.mxu0 %v896
        %953 = vmatprep.subr.mxu0 %v899
        %954 = vmatpush1.msra.mxu0 %v898
        %955 = vmatprep.subr.mxu0 %v901
        %956 = vmatpush1.msra.mxu0 %v900
        %957 = vmatprep.subr.mxu0 %v903
        %958 = vmatpush1.msra.mxu0 %v902
        %959 = vmatprep.subr.mxu0 %v905
        %960 = vmatpush1.msra.mxu0 %v904
        %961 = vmatprep.subr.mxu0 %v907
        %962 = vmatpush1.msra.mxu0 %v906
        %963 = vmatprep.subr.mxu0 %v909
        %964 = vmatpush1.msra.mxu0 %v908
        %965 = vmatprep.subr.mxu0 %v911
        %966 = vmatpush1.msra.mxu0 %v910
        %967 = vmatprep.subr.mxu0 %v913
        %968 = vmatpush1.msra.mxu0 %v912
        %969 = vmatprep.subr.mxu0 %v915
        %970 = vmatpush1.msra.mxu0 %v914
        %971 = vmatprep.subr.mxu0 %v917
        %972 = vmatpush1.msra.mxu0 %v916
        %973 = vmatprep.subr.mxu0 %v919
        %974 = vmatpush1.msra.mxu0 %v918
        %975 = vmatprep.subr.mxu0 %v921
        %976 = vmatpush1.msra.mxu0 %v920
        %977 = vmatprep.subr.mxu0 %v923
        %978 = vmatpush1.msra.mxu0 %v922
        %979 = vmatprep.subr.mxu0 %v925
        %980 = vmatpush1.msra.mxu0 %v924
        %981 = vmatprep.subr.mxu0 %v927
        %982 = vmatpush1.msra.mxu0 %v926
        %983 = vmatprep.subr.mxu0 0.0
        %984 = vmatpush1.msra.mxu0 0.0
        %985 = vmatprep.subr.mxu0 0.0
        %986 = vmatpush1.msra.mxu0 0.0
        %987 = vmatprep.subr.mxu0 0.0
        %988 = vmatpush1.msra.mxu0 0.0
        %989 = vmatprep.subr.mxu0 0.0
        %990 = vmatpush1.msra.mxu0 0.0
        %991 = vmatprep.subr.mxu0 0.0
        %992 = vmatpush1.msra.mxu0 0.0
        %993 = vmatprep.subr.mxu0 0.0
        %994 = vmatpush1.msra.mxu0 0.0
        %995 = vmatprep.subr.mxu0 0.0
        %996 = vmatpush1.msra.mxu0 0.0
        %997 = vmatprep.subr.mxu0 0.0
        %998 = vmatpush1.msra.mxu0 0.0
        %999 = vmatprep.subr.mxu0 0.0
        %1000 = vmatpush1.msra.mxu0 0.0
        %1001 = vmatprep.subr.mxu0 0.0
        %1002 = vmatpush1.msra.mxu0 0.0
        %1003 = vmatprep.subr.mxu0 0.0
        %1004 = vmatpush1.msra.mxu0 0.0
        %1005 = vmatprep.subr.mxu0 0.0
        %1006 = vmatpush1.msra.mxu0 0.0
        %1007 = vmatprep.subr.mxu0 0.0
        %1008 = vmatpush1.msra.mxu0 0.0
        %1009 = vmatprep.subr.mxu0 0.0
        %1010 = vmatpush1.msra.mxu0 0.0
        %1011 = vmatprep.mubr.f32.mxu0 %v942
        %1012 = vmatmul.mubr.f32.gmra.mrb[0].mxu0 %v888
        %v1013 = vpop.f32.mrb[0].mxu0
        %v1014 = vadd.f32 %v933, %v1013
        %v1015 = vpop.f32.mrb[0].mxu0
        %v1016 = vadd.f32 %v933, %v1015
        %1017 = vmatprep.mubr.f32.mxu0 %v945
        %1018 = vmatmul.mubr.f32.gmra.mrb[0].mxu0 %v890
        %v1019 = vpop.f32.mrb[0].mxu0
        %v1020 = vadd.f32 %v938, %v1019
        %v1021 = vpop.f32.mrb[0].mxu0
        %v1022 = vadd.f32 %v938, %v1021
        %1023 = vdwg.mxu0
        %v1024 = vmax.f32 %v1014, 0.0
        %v1025 = vmax.f32 %v1016, 0.0
        %v1026 = vmax.f32 %v1020, 0.0
        %v1027 = vmax.f32 %v1022, 0.0
        %1028 = vrot.lane.b32.xlu0 %v1024, 17
        %v1029 = vpop.permute.xlu0 %1028
        %1030 = vrot.lane.b32.xlu0 %v1026, 17
        %v1031 = vpop.permute.xlu0 %1030
        %1032 = vrot.lane.b32.xlu0 %v1025, 17
        %v1033 = vpop.permute.xlu0 %1032
        %1034 = vrot.lane.b32.xlu0 %v1027, 17
        %v1035 = vpop.permute.xlu0 %1034
        %v1036 = vsel %vm604, %v1029, %v1033
        %v1037 = vsel %vm604, %v1031, %v1035
        %v1038 = vsel %vm604, %v1033, %v1029
        %v1039 = vsel %vm604, %v1035, %v1031
        %v1040 = vld [vmem:[%s2] ss:$8 sm:$0x3]
        %v1042 = vlaneseq
        %v1043 = vshrl.u32 %v1042, 7
        %v1044 = vsub.s32 0, %v1043
        %v1045 = vrot.slane %v1040, %v1044
        %v1046 = vlaneseq
        %v1047 = vshrl.u32 %v1046, 7
        %v1048 = vsub.s32 1, %v1047
        %v1049 = vrot.slane %v1040, %v1048
        %v1052 = vmul.f32 %v1038, %v1045
        %v1053 = vmul.f32 %v1036, %v1049
        %v1054 = vmul.f32 %v1039, %v1045
        %v1055 = vmul.f32 %v1037, %v1049
        %1056 = vst [vmem:[#allocation2] sm:$0xff] %v1052
        %1057 = vst [vmem:[#allocation2 + $0x8] sm:$0xff] %v1053
        %1058 = vst [vmem:[#allocation2 + $0x10] sm:$0xff] %v1054
        %1059 = vst [vmem:[#allocation2 + $0x18] sm:$0xff] %v1055
        %1060 = vrot.lane.b32.xlu0 %v1024, 16
        %v1061 = vpop.permute.xlu0 %1060
        %1062 = vrot.lane.b32.xlu0 %v1026, 16
        %v1063 = vpop.permute.xlu0 %1062
        %1064 = vrot.lane.b32.xlu0 %v1025, 16
        %v1065 = vpop.permute.xlu0 %1064
        %1066 = vrot.lane.b32.xlu0 %v1027, 16
        %v1067 = vpop.permute.xlu0 %1066
        %v1068 = vsel %vm637, %v1061, %v1065
        %v1069 = vsel %vm637, %v1063, %v1067
        %v1070 = vsel %vm637, %v1065, %v1061
        %v1071 = vsel %vm637, %v1067, %v1063
        %v1072 = vld [vmem:[%s642] ss:$8 sm:$0x3]
        %v1074 = vlaneseq
        %v1075 = vshrl.u32 %v1074, 7
        %v1076 = vsub.s32 0, %v1075
        %v1077 = vrot.slane %v1072, %v1076
        %v1078 = vlaneseq
        %v1079 = vshrl.u32 %v1078, 7
        %v1080 = vsub.s32 1, %v1079
        %v1081 = vrot.slane %v1072, %v1080
        %v1084 = vmul.f32 %v1070, %v1077
        %v1085 = vmul.f32 %v1068, %v1081
        %v1086 = vmul.f32 %v1071, %v1077
        %v1087 = vmul.f32 %v1069, %v1081
        %1088 = vst [vmem:[#allocation2 + $0x20] sm:$0xff] %v1084
        %1089 = vst [vmem:[#allocation2 + $0x28] sm:$0xff] %v1085
        %1090 = vst [vmem:[#allocation2 + $0x30] sm:$0xff] %v1086
        %1091 = vst [vmem:[#allocation2 + $0x38] sm:$0xff] %v1087
        %1092 = vrot.lane.b32.xlu0 %v1024, 15
        %v1093 = vpop.permute.xlu0 %1092
        %1094 = vrot.lane.b32.xlu0 %v1026, 15
        %v1095 = vpop.permute.xlu0 %1094
        %1096 = vrot.lane.b32.xlu0 %v1025, 15
        %v1097 = vpop.permute.xlu0 %1096
        %1098 = vrot.lane.b32.xlu0 %v1027, 15
        %v1099 = vpop.permute.xlu0 %1098
        %v1100 = vsel %vm671, %v1093, %v1097
        %v1101 = vsel %vm671, %v1095, %v1099
        %v1102 = vsel %vm671, %v1097, %v1093
        %v1103 = vsel %vm671, %v1099, %v1095
        %v1104 = vld [vmem:[%s676] ss:$8 sm:$0x3]
        %v1106 = vlaneseq
        %v1107 = vshrl.u32 %v1106, 7
        %v1108 = vsub.s32 0, %v1107
        %v1109 = vrot.slane %v1104, %v1108
        %v1110 = vlaneseq
        %v1111 = vshrl.u32 %v1110, 7
        %v1112 = vsub.s32 1, %v1111
        %v1113 = vrot.slane %v1104, %v1112
        %v1116 = vmul.f32 %v1102, %v1109
        %v1117 = vmul.f32 %v1100, %v1113
        %v1118 = vmul.f32 %v1103, %v1109
        %v1119 = vmul.f32 %v1101, %v1113
        %1120 = vst [vmem:[#allocation2 + $0x40] sm:$0xff] %v1116
        %1121 = vst [vmem:[#allocation2 + $0x48] sm:$0xff] %v1117
        %1122 = vst [vmem:[#allocation2 + $0x50] sm:$0xff] %v1118
        %1123 = vst [vmem:[#allocation2 + $0x58] sm:$0xff] %v1119
        %1124 = vrot.lane.b32.xlu0 %v1024, 1
        %v1125 = vpop.permute.xlu0 %1124
        %1126 = vrot.lane.b32.xlu0 %v1026, 1
        %v1127 = vpop.permute.xlu0 %1126
        %1128 = vrot.lane.b32.xlu0 %v1025, 1
        %v1129 = vpop.permute.xlu0 %1128
        %1130 = vrot.lane.b32.xlu0 %v1027, 1
        %v1131 = vpop.permute.xlu0 %1130
        %v1132 = vsel %vm705, %v1125, %v1129
        %v1133 = vsel %vm705, %v1127, %v1131
        %v1134 = vsel %vm705, %v1129, %v1125
        %v1135 = vsel %vm705, %v1131, %v1127
        %v1136 = vld [vmem:[%s710] ss:$8 sm:$0x3]
        %v1138 = vlaneseq
        %v1139 = vshrl.u32 %v1138, 7
        %v1140 = vsub.s32 0, %v1139
        %v1141 = vrot.slane %v1136, %v1140
        %v1142 = vlaneseq
        %v1143 = vshrl.u32 %v1142, 7
        %v1144 = vsub.s32 1, %v1143
        %v1145 = vrot.slane %v1136, %v1144
        %v1148 = vmul.f32 %v1134, %v1141
        %v1149 = vmul.f32 %v1132, %v1145
        %v1150 = vmul.f32 %v1135, %v1141
        %v1151 = vmul.f32 %v1133, %v1145
        %1152 = vst [vmem:[#allocation2 + $0x60] sm:$0xff] %v1148
        %1153 = vst [vmem:[#allocation2 + $0x68] sm:$0xff] %v1149
        %1154 = vst [vmem:[#allocation2 + $0x70] sm:$0xff] %v1150
        %1155 = vst [vmem:[#allocation2 + $0x78] sm:$0xff] %v1151
        %v1156 = vld [vmem:[%s731] ss:$8 sm:$0x3]
        %v1158 = vlaneseq
        %v1159 = vshrl.u32 %v1158, 7
        %v1160 = vsub.s32 0, %v1159
        %v1161 = vrot.slane %v1156, %v1160
        %v1162 = vlaneseq
        %v1163 = vshrl.u32 %v1162, 7
        %v1164 = vsub.s32 1, %v1163
        %v1165 = vrot.slane %v1156, %v1164
        %v1168 = vmul.f32 %v1024, %v1161
        %v1169 = vmul.f32 %v1025, %v1165
        %v1170 = vmul.f32 %v1026, %v1161
        %v1171 = vmul.f32 %v1027, %v1165
        %1172 = vst [vmem:[#allocation2 + $0x80] sm:$0xff] %v1168
        %1173 = vst [vmem:[#allocation2 + $0x88] sm:$0xff] %v1169
        %1174 = vst [vmem:[#allocation2 + $0x90] sm:$0xff] %v1170
        %1175 = vst [vmem:[#allocation2 + $0x98] sm:$0xff] %v1171
        %1176 = vrot.lane.b32.xlu0 %v1024, 127
        %v1177 = vpop.permute.xlu0 %1176
        %1178 = vrot.lane.b32.xlu0 %v1026, 127
        %v1179 = vpop.permute.xlu0 %1178
        %1180 = vrot.lane.b32.xlu0 %v1025, 127
        %v1181 = vpop.permute.xlu0 %1180
        %1182 = vrot.lane.b32.xlu0 %v1027, 127
        %v1183 = vpop.permute.xlu0 %1182
        %v1184 = vsel %vm760, %v1177, %v1181
        %v1185 = vsel %vm760, %v1179, %v1183
        %v1186 = vsel %vm760, %v1181, %v1177
        %v1187 = vsel %vm760, %v1183, %v1179
        %v1188 = vld [vmem:[%s765] ss:$8 sm:$0x3]
        %v1190 = vlaneseq
        %v1191 = vshrl.u32 %v1190, 7
        %v1192 = vsub.s32 0, %v1191
        %v1193 = vrot.slane %v1188, %v1192
        %v1194 = vlaneseq
        %v1195 = vshrl.u32 %v1194, 7
        %v1196 = vsub.s32 1, %v1195
        %v1197 = vrot.slane %v1188, %v1196
        %v1200 = vmul.f32 %v1184, %v1193
        %v1201 = vmul.f32 %v1186, %v1197
        %v1202 = vmul.f32 %v1185, %v1193
        %v1203 = vmul.f32 %v1187, %v1197
        %1204 = vst [vmem:[#allocation2 + $0xa0] sm:$0xff] %v1200
        %1205 = vst [vmem:[#allocation2 + $0xa8] sm:$0xff] %v1201
        %1206 = vst [vmem:[#allocation2 + $0xb0] sm:$0xff] %v1202
        %1207 = vst [vmem:[#allocation2 + $0xb8] sm:$0xff] %v1203
        %1208 = vrot.lane.b32.xlu0 %v1024, 113
        %v1209 = vpop.permute.xlu0 %1208
        %1210 = vrot.lane.b32.xlu0 %v1026, 113
        %v1211 = vpop.permute.xlu0 %1210
        %1212 = vrot.lane.b32.xlu0 %v1025, 113
        %v1213 = vpop.permute.xlu0 %1212
        %1214 = vrot.lane.b32.xlu0 %v1027, 113
        %v1215 = vpop.permute.xlu0 %1214
        %v1216 = vsel %vm794, %v1209, %v1213
        %v1217 = vsel %vm794, %v1211, %v1215
        %v1218 = vsel %vm794, %v1213, %v1209
        %v1219 = vsel %vm794, %v1215, %v1211
        %v1220 = vld [vmem:[%s799] ss:$8 sm:$0x3]
        %v1222 = vlaneseq
        %v1223 = vshrl.u32 %v1222, 7
        %v1224 = vsub.s32 0, %v1223
        %v1225 = vrot.slane %v1220, %v1224
        %v1226 = vlaneseq
        %v1227 = vshrl.u32 %v1226, 7
        %v1228 = vsub.s32 1, %v1227
        %v1229 = vrot.slane %v1220, %v1228
        %v1232 = vmul.f32 %v1216, %v1225
        %v1233 = vmul.f32 %v1218, %v1229
        %v1234 = vmul.f32 %v1217, %v1225
        %v1235 = vmul.f32 %v1219, %v1229
        %1236 = vst [vmem:[#allocation2 + $0xc0] sm:$0xff] %v1232
        %1237 = vst [vmem:[#allocation2 + $0xc8] sm:$0xff] %v1233
        %1238 = vst [vmem:[#allocation2 + $0xd0] sm:$0xff] %v1234
        %1239 = vst [vmem:[#allocation2 + $0xd8] sm:$0xff] %v1235
        %1240 = vrot.lane.b32.xlu0 %v1024, 112
        %v1241 = vpop.permute.xlu0 %1240
        %1242 = vrot.lane.b32.xlu0 %v1026, 112
        %v1243 = vpop.permute.xlu0 %1242
        %1244 = vrot.lane.b32.xlu0 %v1025, 112
        %v1245 = vpop.permute.xlu0 %1244
        %1246 = vrot.lane.b32.xlu0 %v1027, 112
        %v1247 = vpop.permute.xlu0 %1246
        %v1248 = vsel %vm828, %v1241, %v1245
        %v1249 = vsel %vm828, %v1243, %v1247
        %v1250 = vsel %vm828, %v1245, %v1241
        %v1251 = vsel %vm828, %v1247, %v1243
        %v1252 = vld [vmem:[%s833] ss:$8 sm:$0x3]
        %v1254 = vlaneseq
        %v1255 = vshrl.u32 %v1254, 7
        %v1256 = vsub.s32 0, %v1255
        %v1257 = vrot.slane %v1252, %v1256
        %v1258 = vlaneseq
        %v1259 = vshrl.u32 %v1258, 7
        %v1260 = vsub.s32 1, %v1259
        %v1261 = vrot.slane %v1252, %v1260
        %v1264 = vmul.f32 %v1248, %v1257
        %v1265 = vmul.f32 %v1250, %v1261
        %v1266 = vmul.f32 %v1249, %v1257
        %v1267 = vmul.f32 %v1251, %v1261
        %1268 = vst [vmem:[#allocation2 + $0xe0] sm:$0xff] %v1264
        %1269 = vst [vmem:[#allocation2 + $0xe8] sm:$0xff] %v1265
        %1270 = vst [vmem:[#allocation2 + $0xf0] sm:$0xff] %v1266
        %1271 = vst [vmem:[#allocation2 + $0xf8] sm:$0xff] %v1267
        %1272 = vrot.lane.b32.xlu0 %v1024, 111
        %v1273 = vpop.permute.xlu0 %1272
        %1274 = vrot.lane.b32.xlu0 %v1026, 111
        %v1275 = vpop.permute.xlu0 %1274
        %1276 = vrot.lane.b32.xlu0 %v1025, 111
        %v1277 = vpop.permute.xlu0 %1276
        %1278 = vrot.lane.b32.xlu0 %v1027, 111
        %v1279 = vpop.permute.xlu0 %1278
        %v1280 = vsel %vm862, %v1273, %v1277
        %v1281 = vsel %vm862, %v1275, %v1279
        %v1282 = vsel %vm862, %v1277, %v1273
        %v1283 = vsel %vm862, %v1279, %v1275
        %v1284 = vld [vmem:[%s867] ss:$8 sm:$0x3]
        %v1286 = vlaneseq
        %v1287 = vshrl.u32 %v1286, 7
        %v1288 = vsub.s32 0, %v1287
        %v1289 = vrot.slane %v1284, %v1288
        %v1290 = vlaneseq
        %v1291 = vshrl.u32 %v1290, 7
        %v1292 = vsub.s32 1, %v1291
        %v1293 = vrot.slane %v1284, %v1292
        %v1296 = vmul.f32 %v1280, %v1289
        %v1297 = vmul.f32 %v1282, %v1293
        %v1298 = vmul.f32 %v1281, %v1289
        %v1299 = vmul.f32 %v1283, %v1293
        %1300 = vst [vmem:[#allocation2 + $0x100] sm:$0xff] %v1296
        %1301 = vst [vmem:[#allocation2 + $0x108] sm:$0xff] %v1297
        %1302 = vst [vmem:[#allocation2 + $0x110] sm:$0xff] %v1298
        %1303 = vst [vmem:[#allocation2 + $0x118] sm:$0xff] %v1299
        %v1304 = vld [vmem:[%s7] sm:$0xff]
        %v1305 = vld [vmem:[%s7 + $0x8] sm:$0xff]
        %v1306 = vld [vmem:[%s7 + $0x10] sm:$0xff]
        %v1307 = vld [vmem:[%s7 + $0x18] sm:$0xff]
        %v1308 = vld [vmem:[#allocation2] sm:$0xff]
        %v1309 = vld [vmem:[#allocation2 + $0x8] sm:$0xff]
        %v1310 = vld [vmem:[#allocation2 + $0x10] sm:$0xff]
        %v1311 = vld [vmem:[#allocation2 + $0x18] sm:$0xff]
        %v1312 = vld [vmem:[#allocation2 + $0x20] sm:$0xff]
        %v1313 = vld [vmem:[#allocation2 + $0x28] sm:$0xff]
        %v1314 = vld [vmem:[#allocation2 + $0x30] sm:$0xff]
        %v1315 = vld [vmem:[#allocation2 + $0x38] sm:$0xff]
        %v1316 = vld [vmem:[#allocation2 + $0x40] sm:$0xff]
        %v1317 = vld [vmem:[#allocation2 + $0x48] sm:$0xff]
        %v1318 = vld [vmem:[#allocation2 + $0x50] sm:$0xff]
        %v1319 = vld [vmem:[#allocation2 + $0x58] sm:$0xff]
        %v1320 = vld [vmem:[#allocation2 + $0x60] sm:$0xff]
        %v1321 = vld [vmem:[#allocation2 + $0x68] sm:$0xff]
        %v1322 = vld [vmem:[#allocation2 + $0x70] sm:$0xff]
        %v1323 = vld [vmem:[#allocation2 + $0x78] sm:$0xff]
        %v1324 = vld [vmem:[#allocation2 + $0x80] sm:$0xff]
        %v1325 = vld [vmem:[#allocation2 + $0x88] sm:$0xff]
        %v1326 = vld [vmem:[#allocation2 + $0x90] sm:$0xff]
        %v1327 = vld [vmem:[#allocation2 + $0x98] sm:$0xff]
        %v1328 = vld [vmem:[#allocation2 + $0xa0] sm:$0xff]
        %v1329 = vld [vmem:[#allocation2 + $0xa8] sm:$0xff]
        %v1330 = vld [vmem:[#allocation2 + $0xb0] sm:$0xff]
        %v1331 = vld [vmem:[#allocation2 + $0xb8] sm:$0xff]
        %v1332 = vld [vmem:[#allocation2 + $0xc0] sm:$0xff]
        %v1333 = vld [vmem:[#allocation2 + $0xc8] sm:$0xff]
        %v1334 = vld [vmem:[#allocation2 + $0xd0] sm:$0xff]
        %v1335 = vld [vmem:[#allocation2 + $0xd8] sm:$0xff]
        %v1336 = vld [vmem:[#allocation2 + $0xe0] sm:$0xff]
        %v1337 = vld [vmem:[#allocation2 + $0xe8] sm:$0xff]
        %v1338 = vld [vmem:[#allocation2 + $0xf0] sm:$0xff]
        %v1339 = vld [vmem:[#allocation2 + $0xf8] sm:$0xff]
        %v1340 = vld [vmem:[#allocation2 + $0x100] sm:$0xff]
        %v1341 = vld [vmem:[#allocation2 + $0x108] sm:$0xff]
        %v1342 = vld [vmem:[#allocation2 + $0x110] sm:$0xff]
        %v1343 = vld [vmem:[#allocation2 + $0x118] sm:$0xff]
        %v1344 = vld [vmem:[%s8] sm:$0xff]
        %v1345 = vld [vmem:[%s8 + $0x8] sm:$0xff]
        %1347 = vset.pattern.permute.xlu0 0
        %1348 = vperm.xlu0 %1347, %v1344
        %v1349 = vpop.permute.xlu0 %1348
        %1352 = vset.pattern.permute.xlu0 0
        %1353 = vperm.xlu0 %1352, %v1345
        %v1354 = vpop.permute.xlu0 %1353
        %v1357 = vsel %vm940, %v1305, 0
        %v1360 = vsel %vm940, %v1307, 0
        %1362 = vmatprep.subr.mxu0 %v1309
        %1363 = vmatpush1.msra.mxu0 %v1308
        %1364 = vmatprep.subr.mxu0 %v1311
        %1365 = vmatpush1.msra.mxu0 %v1310
        %1366 = vmatprep.subr.mxu0 %v1313
        %1367 = vmatpush1.msra.mxu0 %v1312
        %1368 = vmatprep.subr.mxu0 %v1315
        %1369 = vmatpush1.msra.mxu0 %v1314
        %1370 = vmatprep.subr.mxu0 %v1317
        %1371 = vmatpush1.msra.mxu0 %v1316
        %1372 = vmatprep.subr.mxu0 %v1319
        %1373 = vmatpush1.msra.mxu0 %v1318
        %1374 = vmatprep.subr.mxu0 %v1321
        %1375 = vmatpush1.msra.mxu0 %v1320
        %1376 = vmatprep.subr.mxu0 %v1323
        %1377 = vmatpush1.msra.mxu0 %v1322
        %1378 = vmatprep.subr.mxu0 %v1325
        %1379 = vmatpush1.msra.mxu0 %v1324
        %1380 = vmatprep.subr.mxu0 %v1327
        %1381 = vmatpush1.msra.mxu0 %v1326
        %1382 = vmatprep.subr.mxu0 %v1329
        %1383 = vmatpush1.msra.mxu0 %v1328
        %1384 = vmatprep.subr.mxu0 %v1331
        %1385 = vmatpush1.msra.mxu0 %v1330
        %1386 = vmatprep.subr.mxu0 %v1333
        %1387 = vmatpush1.msra.mxu0 %v1332
        %1388 = vmatprep.subr.mxu0 %v1335
        %1389 = vmatpush1.msra.mxu0 %v1334
        %1390 = vmatprep.subr.mxu0 %v1337
        %1391 = vmatpush1.msra.mxu0 %v1336
        %1392 = vmatprep.subr.mxu0 %v1339
        %1393 = vmatpush1.msra.mxu0 %v1338
        %1394 = vmatprep.subr.mxu0 %v1341
        %1395 = vmatpush1.msra.mxu0 %v1340
        %1396 = vmatprep.subr.mxu0 %v1343
        %1397 = vmatpush1.msra.mxu0 %v1342
        %1398 = vmatprep.subr.mxu0 0.0
        %1399 = vmatpush1.msra.mxu0 0.0
        %1400 = vmatprep.subr.mxu0 0.0
        %1401 = vmatpush1.msra.mxu0 0.0
        %1402 = vmatprep.subr.mxu0 0.0
        %1403 = vmatpush1.msra.mxu0 0.0
        %1404 = vmatprep.subr.mxu0 0.0
        %1405 = vmatpush1.msra.mxu0 0.0
        %1406 = vmatprep.subr.mxu0 0.0
        %1407 = vmatpush1.msra.mxu0 0.0
        %1408 = vmatprep.subr.mxu0 0.0
        %1409 = vmatpush1.msra.mxu0 0.0
        %1410 = vmatprep.subr.mxu0 0.0
        %1411 = vmatpush1.msra.mxu0 0.0
        %1412 = vmatprep.subr.mxu0 0.0
        %1413 = vmatpush1.msra.mxu0 0.0
        %1414 = vmatprep.subr.mxu0 0.0
        %1415 = vmatpush1.msra.mxu0 0.0
        %1416 = vmatprep.subr.mxu0 0.0
        %1417 = vmatpush1.msra.mxu0 0.0
        %1418 = vmatprep.subr.mxu0 0.0
        %1419 = vmatpush1.msra.mxu0 0.0
        %1420 = vmatprep.subr.mxu0 0.0
        %1421 = vmatpush1.msra.mxu0 0.0
        %1422 = vmatprep.subr.mxu0 0.0
        %1423 = vmatpush1.msra.mxu0 0.0
        %1424 = vmatprep.subr.mxu0 0.0
        %1425 = vmatpush1.msra.mxu0 0.0
        %1426 = vmatprep.mubr.f32.mxu0 %v1357
        %1427 = vmatmul.mubr.f32.gmra.mrb[0].mxu0 %v1304
        %v1428 = vpop.f32.mrb[0].mxu0
        %v1429 = vadd.f32 %v1349, %v1428
        %v1430 = vpop.f32.mrb[0].mxu0
        %v1431 = vadd.f32 %v1349, %v1430
        %1432 = vmatprep.mubr.f32.mxu0 %v1360
        %1433 = vmatmul.mubr.f32.gmra.mrb[0].mxu0 %v1306
        %v1434 = vpop.f32.mrb[0].mxu0
        %v1435 = vadd.f32 %v1354, %v1434
        %v1436 = vpop.f32.mrb[0].mxu0
        %v1437 = vadd.f32 %v1354, %v1436
        %1438 = vdwg.mxu0
        %v1439 = vmax.f32 %v1429, 0.0
        %v1440 = vmax.f32 %v1431, 0.0
        %v1441 = vmax.f32 %v1435, 0.0
        %v1442 = vmax.f32 %v1437, 0.0
        %1443 = vrot.lane.b32.xlu0 %v1439, 17
        %v1444 = vpop.permute.xlu0 %1443
        %1445 = vrot.lane.b32.xlu0 %v1441, 17
        %v1446 = vpop.permute.xlu0 %1445
        %1447 = vrot.lane.b32.xlu0 %v1440, 17
        %v1448 = vpop.permute.xlu0 %1447
        %1449 = vrot.lane.b32.xlu0 %v1442, 17
        %v1450 = vpop.permute.xlu0 %1449
        %v1451 = vsel %vm604, %v1444, %v1448
        %v1452 = vsel %vm604, %v1446, %v1450
        %v1453 = vsel %vm604, %v1448, %v1444
        %v1454 = vsel %vm604, %v1450, %v1446
        %v1455 = vld [vmem:[%s2] ss:$8 sm:$0x3]
        %v1457 = vlaneseq
        %v1458 = vshrl.u32 %v1457, 7
        %v1459 = vsub.s32 0, %v1458
        %v1460 = vrot.slane %v1455, %v1459
        %v1461 = vlaneseq
        %v1462 = vshrl.u32 %v1461, 7
        %v1463 = vsub.s32 1, %v1462
        %v1464 = vrot.slane %v1455, %v1463
        %v1467 = vmul.f32 %v1453, %v1460
        %v1468 = vmul.f32 %v1451, %v1464
        %v1469 = vmul.f32 %v1454, %v1460
        %v1470 = vmul.f32 %v1452, %v1464
        %1471 = vst [vmem:[#allocation2] sm:$0xff] %v1467
        %1472 = vst [vmem:[#allocation2 + $0x8] sm:$0xff] %v1468
        %1473 = vst [vmem:[#allocation2 + $0x10] sm:$0xff] %v1469
        %1474 = vst [vmem:[#allocation2 + $0x18] sm:$0xff] %v1470
        %1475 = vrot.lane.b32.xlu0 %v1439, 16
        %v1476 = vpop.permute.xlu0 %1475
        %1477 = vrot.lane.b32.xlu0 %v1441, 16
        %v1478 = vpop.permute.xlu0 %1477
        %1479 = vrot.lane.b32.xlu0 %v1440, 16
        %v1480 = vpop.permute.xlu0 %1479
        %1481 = vrot.lane.b32.xlu0 %v1442, 16
        %v1482 = vpop.permute.xlu0 %1481
        %v1483 = vsel %vm637, %v1476, %v1480
        %v1484 = vsel %vm637, %v1478, %v1482
        %v1485 = vsel %vm637, %v1480, %v1476
        %v1486 = vsel %vm637, %v1482, %v1478
        %v1487 = vld [vmem:[%s642] ss:$8 sm:$0x3]
        %v1489 = vlaneseq
        %v1490 = vshrl.u32 %v1489, 7
        %v1491 = vsub.s32 0, %v1490
        %v1492 = vrot.slane %v1487, %v1491
        %v1493 = vlaneseq
        %v1494 = vshrl.u32 %v1493, 7
        %v1495 = vsub.s32 1, %v1494
        %v1496 = vrot.slane %v1487, %v1495
        %v1499 = vmul.f32 %v1485, %v1492
        %v1500 = vmul.f32 %v1483, %v1496
        %v1501 = vmul.f32 %v1486, %v1492
        %v1502 = vmul.f32 %v1484, %v1496
        %1503 = vst [vmem:[#allocation2 + $0x20] sm:$0xff] %v1499
        %1504 = vst [vmem:[#allocation2 + $0x28] sm:$0xff] %v1500
        %1505 = vst [vmem:[#allocation2 + $0x30] sm:$0xff] %v1501
        %1506 = vst [vmem:[#allocation2 + $0x38] sm:$0xff] %v1502
        %1507 = vrot.lane.b32.xlu0 %v1439, 15
        %v1508 = vpop.permute.xlu0 %1507
        %1509 = vrot.lane.b32.xlu0 %v1441, 15
        %v1510 = vpop.permute.xlu0 %1509
        %1511 = vrot.lane.b32.xlu0 %v1440, 15
        %v1512 = vpop.permute.xlu0 %1511
        %1513 = vrot.lane.b32.xlu0 %v1442, 15
        %v1514 = vpop.permute.xlu0 %1513
        %v1515 = vsel %vm671, %v1508, %v1512
        %v1516 = vsel %vm671, %v1510, %v1514
        %v1517 = vsel %vm671, %v1512, %v1508
        %v1518 = vsel %vm671, %v1514, %v1510
        %v1519 = vld [vmem:[%s676] ss:$8 sm:$0x3]
        %v1521 = vlaneseq
        %v1522 = vshrl.u32 %v1521, 7
        %v1523 = vsub.s32 0, %v1522
        %v1524 = vrot.slane %v1519, %v1523
        %v1525 = vlaneseq
        %v1526 = vshrl.u32 %v1525, 7
        %v1527 = vsub.s32 1, %v1526
        %v1528 = vrot.slane %v1519, %v1527
        %v1531 = vmul.f32 %v1517, %v1524
        %v1532 = vmul.f32 %v1515, %v1528
        %v1533 = vmul.f32 %v1518, %v1524
        %v1534 = vmul.f32 %v1516, %v1528
        %1535 = vst [vmem:[#allocation2 + $0x40] sm:$0xff] %v1531
        %1536 = vst [vmem:[#allocation2 + $0x48] sm:$0xff] %v1532
        %1537 = vst [vmem:[#allocation2 + $0x50] sm:$0xff] %v1533
        %1538 = vst [vmem:[#allocation2 + $0x58] sm:$0xff] %v1534
        %1539 = vrot.lane.b32.xlu0 %v1439, 1
        %v1540 = vpop.permute.xlu0 %1539
        %1541 = vrot.lane.b32.xlu0 %v1441, 1
        %v1542 = vpop.permute.xlu0 %1541
        %1543 = vrot.lane.b32.xlu0 %v1440, 1
        %v1544 = vpop.permute.xlu0 %1543
        %1545 = vrot.lane.b32.xlu0 %v1442, 1
        %v1546 = vpop.permute.xlu0 %1545
        %v1547 = vsel %vm705, %v1540, %v1544
        %v1548 = vsel %vm705, %v1542, %v1546
        %v1549 = vsel %vm705, %v1544, %v1540
        %v1550 = vsel %vm705, %v1546, %v1542
        %v1551 = vld [vmem:[%s710] ss:$8 sm:$0x3]
        %v1553 = vlaneseq
        %v1554 = vshrl.u32 %v1553, 7
        %v1555 = vsub.s32 0, %v1554
        %v1556 = vrot.slane %v1551, %v1555
        %v1557 = vlaneseq
        %v1558 = vshrl.u32 %v1557, 7
        %v1559 = vsub.s32 1, %v1558
        %v1560 = vrot.slane %v1551, %v1559
        %v1563 = vmul.f32 %v1549, %v1556
        %v1564 = vmul.f32 %v1547, %v1560
        %v1565 = vmul.f32 %v1550, %v1556
        %v1566 = vmul.f32 %v1548, %v1560
        %1567 = vst [vmem:[#allocation2 + $0x60] sm:$0xff] %v1563
        %1568 = vst [vmem:[#allocation2 + $0x68] sm:$0xff] %v1564
        %1569 = vst [vmem:[#allocation2 + $0x70] sm:$0xff] %v1565
        %1570 = vst [vmem:[#allocation2 + $0x78] sm:$0xff] %v1566
        %v1571 = vld [vmem:[%s731] ss:$8 sm:$0x3]
        %v1573 = vlaneseq
        %v1574 = vshrl.u32 %v1573, 7
        %v1575 = vsub.s32 0, %v1574
        %v1576 = vrot.slane %v1571, %v1575
        %v1577 = vlaneseq
        %v1578 = vshrl.u32 %v1577, 7
        %v1579 = vsub.s32 1, %v1578
        %v1580 = vrot.slane %v1571, %v1579
        %v1583 = vmul.f32 %v1439, %v1576
        %v1584 = vmul.f32 %v1440, %v1580
        %v1585 = vmul.f32 %v1441, %v1576
        %v1586 = vmul.f32 %v1442, %v1580
        %1587 = vst [vmem:[#allocation2 + $0x80] sm:$0xff] %v1583
        %1588 = vst [vmem:[#allocation2 + $0x88] sm:$0xff] %v1584
        %1589 = vst [vmem:[#allocation2 + $0x90] sm:$0xff] %v1585
        %1590 = vst [vmem:[#allocation2 + $0x98] sm:$0xff] %v1586
        %1591 = vrot.lane.b32.xlu0 %v1439, 127
        %v1592 = vpop.permute.xlu0 %1591
        %1593 = vrot.lane.b32.xlu0 %v1441, 127
        %v1594 = vpop.permute.xlu0 %1593
        %1595 = vrot.lane.b32.xlu0 %v1440, 127
        %v1596 = vpop.permute.xlu0 %1595
        %1597 = vrot.lane.b32.xlu0 %v1442, 127
        %v1598 = vpop.permute.xlu0 %1597
        %v1599 = vsel %vm760, %v1592, %v1596
        %v1600 = vsel %vm760, %v1594, %v1598
        %v1601 = vsel %vm760, %v1596, %v1592
        %v1602 = vsel %vm760, %v1598, %v1594
        %v1603 = vld [vmem:[%s765] ss:$8 sm:$0x3]
        %v1605 = vlaneseq
        %v1606 = vshrl.u32 %v1605, 7
        %v1607 = vsub.s32 0, %v1606
        %v1608 = vrot.slane %v1603, %v1607
        %v1609 = vlaneseq
        %v1610 = vshrl.u32 %v1609, 7
        %v1611 = vsub.s32 1, %v1610
        %v1612 = vrot.slane %v1603, %v1611
        %v1615 = vmul.f32 %v1599, %v1608
        %v1616 = vmul.f32 %v1601, %v1612
        %v1617 = vmul.f32 %v1600, %v1608
        %v1618 = vmul.f32 %v1602, %v1612
        %1619 = vst [vmem:[#allocation2 + $0xa0] sm:$0xff] %v1615
        %1620 = vst [vmem:[#allocation2 + $0xa8] sm:$0xff] %v1616
        %1621 = vst [vmem:[#allocation2 + $0xb0] sm:$0xff] %v1617
        %1622 = vst [vmem:[#allocation2 + $0xb8] sm:$0xff] %v1618
        %1623 = vrot.lane.b32.xlu0 %v1439, 113
        %v1624 = vpop.permute.xlu0 %1623
        %1625 = vrot.lane.b32.xlu0 %v1441, 113
        %v1626 = vpop.permute.xlu0 %1625
        %1627 = vrot.lane.b32.xlu0 %v1440, 113
        %v1628 = vpop.permute.xlu0 %1627
        %1629 = vrot.lane.b32.xlu0 %v1442, 113
        %v1630 = vpop.permute.xlu0 %1629
        %v1631 = vsel %vm794, %v1624, %v1628
        %v1632 = vsel %vm794, %v1626, %v1630
        %v1633 = vsel %vm794, %v1628, %v1624
        %v1634 = vsel %vm794, %v1630, %v1626
        %v1635 = vld [vmem:[%s799] ss:$8 sm:$0x3]
        %v1637 = vlaneseq
        %v1638 = vshrl.u32 %v1637, 7
        %v1639 = vsub.s32 0, %v1638
        %v1640 = vrot.slane %v1635, %v1639
        %v1641 = vlaneseq
        %v1642 = vshrl.u32 %v1641, 7
        %v1643 = vsub.s32 1, %v1642
        %v1644 = vrot.slane %v1635, %v1643
        %v1647 = vmul.f32 %v1631, %v1640
        %v1648 = vmul.f32 %v1633, %v1644
        %v1649 = vmul.f32 %v1632, %v1640
        %v1650 = vmul.f32 %v1634, %v1644
        %1651 = vst [vmem:[#allocation2 + $0xc0] sm:$0xff] %v1647
        %1652 = vst [vmem:[#allocation2 + $0xc8] sm:$0xff] %v1648
        %1653 = vst [vmem:[#allocation2 + $0xd0] sm:$0xff] %v1649
        %1654 = vst [vmem:[#allocation2 + $0xd8] sm:$0xff] %v1650
        %1655 = vrot.lane.b32.xlu0 %v1439, 112
        %v1656 = vpop.permute.xlu0 %1655
        %1657 = vrot.lane.b32.xlu0 %v1441, 112
        %v1658 = vpop.permute.xlu0 %1657
        %1659 = vrot.lane.b32.xlu0 %v1440, 112
        %v1660 = vpop.permute.xlu0 %1659
        %1661 = vrot.lane.b32.xlu0 %v1442, 112
        %v1662 = vpop.permute.xlu0 %1661
        %v1663 = vsel %vm828, %v1656, %v1660
        %v1664 = vsel %vm828, %v1658, %v1662
        %v1665 = vsel %vm828, %v1660, %v1656
        %v1666 = vsel %vm828, %v1662, %v1658
        %v1667 = vld [vmem:[%s833] ss:$8 sm:$0x3]
        %v1669 = vlaneseq
        %v1670 = vshrl.u32 %v1669, 7
        %v1671 = vsub.s32 0, %v1670
        %v1672 = vrot.slane %v1667, %v1671
        %v1673 = vlaneseq
        %v1674 = vshrl.u32 %v1673, 7
        %v1675 = vsub.s32 1, %v1674
        %v1676 = vrot.slane %v1667, %v1675
        %v1679 = vmul.f32 %v1663, %v1672
        %v1680 = vmul.f32 %v1665, %v1676
        %v1681 = vmul.f32 %v1664, %v1672
        %v1682 = vmul.f32 %v1666, %v1676
        %1683 = vst [vmem:[#allocation2 + $0xe0] sm:$0xff] %v1679
        %1684 = vst [vmem:[#allocation2 + $0xe8] sm:$0xff] %v1680
        %1685 = vst [vmem:[#allocation2 + $0xf0] sm:$0xff] %v1681
        %1686 = vst [vmem:[#allocation2 + $0xf8] sm:$0xff] %v1682
        %1687 = vrot.lane.b32.xlu0 %v1439, 111
        %v1688 = vpop.permute.xlu0 %1687
        %1689 = vrot.lane.b32.xlu0 %v1441, 111
        %v1690 = vpop.permute.xlu0 %1689
        %1691 = vrot.lane.b32.xlu0 %v1440, 111
        %v1692 = vpop.permute.xlu0 %1691
        %1693 = vrot.lane.b32.xlu0 %v1442, 111
        %v1694 = vpop.permute.xlu0 %1693
        %v1695 = vsel %vm862, %v1688, %v1692
        %v1696 = vsel %vm862, %v1690, %v1694
        %v1697 = vsel %vm862, %v1692, %v1688
        %v1698 = vsel %vm862, %v1694, %v1690
        %v1699 = vld [vmem:[%s867] ss:$8 sm:$0x3]
        %v1701 = vlaneseq
        %v1702 = vshrl.u32 %v1701, 7
        %v1703 = vsub.s32 0, %v1702
        %v1704 = vrot.slane %v1699, %v1703
        %v1705 = vlaneseq
        %v1706 = vshrl.u32 %v1705, 7
        %v1707 = vsub.s32 1, %v1706
        %v1708 = vrot.slane %v1699, %v1707
        %v1711 = vmul.f32 %v1695, %v1704
        %v1712 = vmul.f32 %v1697, %v1708
        %v1713 = vmul.f32 %v1696, %v1704
        %v1714 = vmul.f32 %v1698, %v1708
        %1715 = vst [vmem:[#allocation2 + $0x100] sm:$0xff] %v1711
        %1716 = vst [vmem:[#allocation2 + $0x108] sm:$0xff] %v1712
        %1717 = vst [vmem:[#allocation2 + $0x110] sm:$0xff] %v1713
        %1718 = vst [vmem:[#allocation2 + $0x118] sm:$0xff] %v1714
        %v1719 = vld [vmem:[%s9] sm:$0xff]
        %v1720 = vld [vmem:[%s9 + $0x8] sm:$0xff]
        %v1721 = vld [vmem:[%s9 + $0x10] sm:$0xff]
        %v1722 = vld [vmem:[%s9 + $0x18] sm:$0xff]
        %v1723 = vld [vmem:[#allocation2] sm:$0xff]
        %v1724 = vld [vmem:[#allocation2 + $0x8] sm:$0xff]
        %v1725 = vld [vmem:[#allocation2 + $0x10] sm:$0xff]
        %v1726 = vld [vmem:[#allocation2 + $0x18] sm:$0xff]
        %v1727 = vld [vmem:[#allocation2 + $0x20] sm:$0xff]
        %v1728 = vld [vmem:[#allocation2 + $0x28] sm:$0xff]
        %v1729 = vld [vmem:[#allocation2 + $0x30] sm:$0xff]
        %v1730 = vld [vmem:[#allocation2 + $0x38] sm:$0xff]
        %v1731 = vld [vmem:[#allocation2 + $0x40] sm:$0xff]
        %v1732 = vld [vmem:[#allocation2 + $0x48] sm:$0xff]
        %v1733 = vld [vmem:[#allocation2 + $0x50] sm:$0xff]
        %v1734 = vld [vmem:[#allocation2 + $0x58] sm:$0xff]
        %v1735 = vld [vmem:[#allocation2 + $0x60] sm:$0xff]
        %v1736 = vld [vmem:[#allocation2 + $0x68] sm:$0xff]
        %v1737 = vld [vmem:[#allocation2 + $0x70] sm:$0xff]
        %v1738 = vld [vmem:[#allocation2 + $0x78] sm:$0xff]
        %v1739 = vld [vmem:[#allocation2 + $0x80] sm:$0xff]
        %v1740 = vld [vmem:[#allocation2 + $0x88] sm:$0xff]
        %v1741 = vld [vmem:[#allocation2 + $0x90] sm:$0xff]
        %v1742 = vld [vmem:[#allocation2 + $0x98] sm:$0xff]
        %v1743 = vld [vmem:[#allocation2 + $0xa0] sm:$0xff]
        %v1744 = vld [vmem:[#allocation2 + $0xa8] sm:$0xff]
        %v1745 = vld [vmem:[#allocation2 + $0xb0] sm:$0xff]
        %v1746 = vld [vmem:[#allocation2 + $0xb8] sm:$0xff]
        %v1747 = vld [vmem:[#allocation2 + $0xc0] sm:$0xff]
        %v1748 = vld [vmem:[#allocation2 + $0xc8] sm:$0xff]
        %v1749 = vld [vmem:[#allocation2 + $0xd0] sm:$0xff]
        %v1750 = vld [vmem:[#allocation2 + $0xd8] sm:$0xff]
        %v1751 = vld [vmem:[#allocation2 + $0xe0] sm:$0xff]
        %v1752 = vld [vmem:[#allocation2 + $0xe8] sm:$0xff]
        %v1753 = vld [vmem:[#allocation2 + $0xf0] sm:$0xff]
        %v1754 = vld [vmem:[#allocation2 + $0xf8] sm:$0xff]
        %v1755 = vld [vmem:[#allocation2 + $0x100] sm:$0xff]
        %v1756 = vld [vmem:[#allocation2 + $0x108] sm:$0xff]
        %v1757 = vld [vmem:[#allocation2 + $0x110] sm:$0xff]
        %v1758 = vld [vmem:[#allocation2 + $0x118] sm:$0xff]
        %v1759 = vld [vmem:[%s10] sm:$0xff]
        %v1760 = vld [vmem:[%s10 + $0x8] sm:$0xff]
        %1762 = vset.pattern.permute.xlu0 0
        %1763 = vperm.xlu0 %1762, %v1759
        %v1764 = vpop.permute.xlu0 %1763
        %1767 = vset.pattern.permute.xlu0 0
        %1768 = vperm.xlu0 %1767, %v1760
        %v1769 = vpop.permute.xlu0 %1768
        %v1772 = vsel %vm940, %v1720, 0
        %v1775 = vsel %vm940, %v1722, 0
        %1777 = vmatprep.subr.mxu0 %v1724
        %1778 = vmatpush1.msra.mxu0 %v1723
        %1779 = vmatprep.subr.mxu0 %v1726
        %1780 = vmatpush1.msra.mxu0 %v1725
        %1781 = vmatprep.subr.mxu0 %v1728
        %1782 = vmatpush1.msra.mxu0 %v1727
        %1783 = vmatprep.subr.mxu0 %v1730
        %1784 = vmatpush1.msra.mxu0 %v1729
        %1785 = vmatprep.subr.mxu0 %v1732
        %1786 = vmatpush1.msra.mxu0 %v1731
        %1787 = vmatprep.subr.mxu0 %v1734
        %1788 = vmatpush1.msra.mxu0 %v1733
        %1789 = vmatprep.subr.mxu0 %v1736
        %1790 = vmatpush1.msra.mxu0 %v1735
        %1791 = vmatprep.subr.mxu0 %v1738
        %1792 = vmatpush1.msra.mxu0 %v1737
        %1793 = vmatprep.subr.mxu0 %v1740
        %1794 = vmatpush1.msra.mxu0 %v1739
        %1795 = vmatprep.subr.mxu0 %v1742
        %1796 = vmatpush1.msra.mxu0 %v1741
        %1797 = vmatprep.subr.mxu0 %v1744
        %1798 = vmatpush1.msra.mxu0 %v1743
        %1799 = vmatprep.subr.mxu0 %v1746
        %1800 = vmatpush1.msra.mxu0 %v1745
        %1801 = vmatprep.subr.mxu0 %v1748
        %1802 = vmatpush1.msra.mxu0 %v1747
        %1803 = vmatprep.subr.mxu0 %v1750
        %1804 = vmatpush1.msra.mxu0 %v1749
        %1805 = vmatprep.subr.mxu0 %v1752
        %1806 = vmatpush1.msra.mxu0 %v1751
        %1807 = vmatprep.subr.mxu0 %v1754
        %1808 = vmatpush1.msra.mxu0 %v1753
        %1809 = vmatprep.subr.mxu0 %v1756
        %1810 = vmatpush1.msra.mxu0 %v1755
        %1811 = vmatprep.subr.mxu0 %v1758
        %1812 = vmatpush1.msra.mxu0 %v1757
        %1813 = vmatprep.subr.mxu0 0.0
        %1814 = vmatpush1.msra.mxu0 0.0
        %1815 = vmatprep.subr.mxu0 0.0
        %1816 = vmatpush1.msra.mxu0 0.0
        %1817 = vmatprep.subr.mxu0 0.0
        %1818 = vmatpush1.msra.mxu0 0.0
        %1819 = vmatprep.subr.mxu0 0.0
        %1820 = vmatpush1.msra.mxu0 0.0
        %1821 = vmatprep.subr.mxu0 0.0
        %1822 = vmatpush1.msra.mxu0 0.0
        %1823 = vmatprep.subr.mxu0 0.0
        %1824 = vmatpush1.msra.mxu0 0.0
        %1825 = vmatprep.subr.mxu0 0.0
        %1826 = vmatpush1.msra.mxu0 0.0
        %1827 = vmatprep.subr.mxu0 0.0
        %1828 = vmatpush1.msra.mxu0 0.0
        %1829 = vmatprep.subr.mxu0 0.0
        %1830 = vmatpush1.msra.mxu0 0.0
        %1831 = vmatprep.subr.mxu0 0.0
        %1832 = vmatpush1.msra.mxu0 0.0
        %1833 = vmatprep.subr.mxu0 0.0
        %1834 = vmatpush1.msra.mxu0 0.0
        %1835 = vmatprep.subr.mxu0 0.0
        %1836 = vmatpush1.msra.mxu0 0.0
        %1837 = vmatprep.subr.mxu0 0.0
        %1838 = vmatpush1.msra.mxu0 0.0
        %1839 = vmatprep.subr.mxu0 0.0
        %1840 = vmatpush1.msra.mxu0 0.0
        %1841 = vmatprep.mubr.f32.mxu0 %v1772
        %1842 = vmatmul.mubr.f32.gmra.mrb[0].mxu0 %v1719
        %v1843 = vpop.f32.mrb[0].mxu0
        %v1844 = vadd.f32 %v1764, %v1843
        %v1845 = vpop.f32.mrb[0].mxu0
        %v1846 = vadd.f32 %v1764, %v1845
        %1847 = vmatprep.mubr.f32.mxu0 %v1775
        %1848 = vmatmul.mubr.f32.gmra.mrb[0].mxu0 %v1721
        %v1849 = vpop.f32.mrb[0].mxu0
        %v1850 = vadd.f32 %v1769, %v1849
        %v1851 = vpop.f32.mrb[0].mxu0
        %v1852 = vadd.f32 %v1769, %v1851
        %1853 = vdwg.mxu0
        %v1854 = vmax.f32 %v1844, 0.0
        %v1855 = vmax.f32 %v1846, 0.0
        %v1856 = vmax.f32 %v1850, 0.0
        %v1857 = vmax.f32 %v1852, 0.0
        %1858 = vrot.lane.b32.xlu0 %v1854, 17
        %v1859 = vpop.permute.xlu0 %1858
        %1860 = vrot.lane.b32.xlu0 %v1856, 17
        %v1861 = vpop.permute.xlu0 %1860
        %1862 = vrot.lane.b32.xlu0 %v1855, 17
        %v1863 = vpop.permute.xlu0 %1862
        %1864 = vrot.lane.b32.xlu0 %v1857, 17
        %v1865 = vpop.permute.xlu0 %1864
        %v1866 = vsel %vm604, %v1859, %v1863
        %v1867 = vsel %vm604, %v1861, %v1865
        %v1868 = vsel %vm604, %v1863, %v1859
        %v1869 = vsel %vm604, %v1865, %v1861
        %v1870 = vld [vmem:[%s2] ss:$8 sm:$0x3]
        %v1872 = vlaneseq
        %v1873 = vshrl.u32 %v1872, 7
        %v1874 = vsub.s32 0, %v1873
        %v1875 = vrot.slane %v1870, %v1874
        %v1876 = vlaneseq
        %v1877 = vshrl.u32 %v1876, 7
        %v1878 = vsub.s32 1, %v1877
        %v1879 = vrot.slane %v1870, %v1878
        %v1882 = vmul.f32 %v1868, %v1875
        %v1883 = vmul.f32 %v1866, %v1879
        %v1884 = vmul.f32 %v1869, %v1875
        %v1885 = vmul.f32 %v1867, %v1879
        %1886 = vst [vmem:[#allocation2] sm:$0xff] %v1882
        %1887 = vst [vmem:[#allocation2 + $0x8] sm:$0xff] %v1883
        %1888 = vst [vmem:[#allocation2 + $0x10] sm:$0xff] %v1884
        %1889 = vst [vmem:[#allocation2 + $0x18] sm:$0xff] %v1885
        %1890 = vrot.lane.b32.xlu0 %v1854, 16
        %v1891 = vpop.permute.xlu0 %1890
        %1892 = vrot.lane.b32.xlu0 %v1856, 16
        %v1893 = vpop.permute.xlu0 %1892
        %1894 = vrot.lane.b32.xlu0 %v1855, 16
        %v1895 = vpop.permute.xlu0 %1894
        %1896 = vrot.lane.b32.xlu0 %v1857, 16
        %v1897 = vpop.permute.xlu0 %1896
        %v1898 = vsel %vm637, %v1891, %v1895
        %v1899 = vsel %vm637, %v1893, %v1897
        %v1900 = vsel %vm637, %v1895, %v1891
        %v1901 = vsel %vm637, %v1897, %v1893
        %v1902 = vld [vmem:[%s642] ss:$8 sm:$0x3]
        %v1904 = vlaneseq
        %v1905 = vshrl.u32 %v1904, 7
        %v1906 = vsub.s32 0, %v1905
        %v1907 = vrot.slane %v1902, %v1906
        %v1908 = vlaneseq
        %v1909 = vshrl.u32 %v1908, 7
        %v1910 = vsub.s32 1, %v1909
        %v1911 = vrot.slane %v1902, %v1910
        %v1914 = vmul.f32 %v1900, %v1907
        %v1915 = vmul.f32 %v1898, %v1911
        %v1916 = vmul.f32 %v1901, %v1907
        %v1917 = vmul.f32 %v1899, %v1911
        %1918 = vst [vmem:[#allocation2 + $0x20] sm:$0xff] %v1914
        %1919 = vst [vmem:[#allocation2 + $0x28] sm:$0xff] %v1915
        %1920 = vst [vmem:[#allocation2 + $0x30] sm:$0xff] %v1916
        %1921 = vst [vmem:[#allocation2 + $0x38] sm:$0xff] %v1917
        %1922 = vrot.lane.b32.xlu0 %v1854, 15
        %v1923 = vpop.permute.xlu0 %1922
        %1924 = vrot.lane.b32.xlu0 %v1856, 15
        %v1925 = vpop.permute.xlu0 %1924
        %1926 = vrot.lane.b32.xlu0 %v1855, 15
        %v1927 = vpop.permute.xlu0 %1926
        %1928 = vrot.lane.b32.xlu0 %v1857, 15
        %v1929 = vpop.permute.xlu0 %1928
        %v1930 = vsel %vm671, %v1923, %v1927
        %v1931 = vsel %vm671, %v1925, %v1929
        %v1932 = vsel %vm671, %v1927, %v1923
        %v1933 = vsel %vm671, %v1929, %v1925
        %v1934 = vld [vmem:[%s676] ss:$8 sm:$0x3]
        %v1936 = vlaneseq
        %v1937 = vshrl.u32 %v1936, 7
        %v1938 = vsub.s32 0, %v1937
        %v1939 = vrot.slane %v1934, %v1938
        %v1940 = vlaneseq
        %v1941 = vshrl.u32 %v1940, 7
        %v1942 = vsub.s32 1, %v1941
        %v1943 = vrot.slane %v1934, %v1942
        %v1946 = vmul.f32 %v1932, %v1939
        %v1947 = vmul.f32 %v1930, %v1943
        %v1948 = vmul.f32 %v1933, %v1939
        %v1949 = vmul.f32 %v1931, %v1943
        %1950 = vst [vmem:[#allocation2 + $0x40] sm:$0xff] %v1946
        %1951 = vst [vmem:[#allocation2 + $0x48] sm:$0xff] %v1947
        %1952 = vst [vmem:[#allocation2 + $0x50] sm:$0xff] %v1948
        %1953 = vst [vmem:[#allocation2 + $0x58] sm:$0xff] %v1949
        %1954 = vrot.lane.b32.xlu0 %v1854, 1
        %v1955 = vpop.permute.xlu0 %1954
        %1956 = vrot.lane.b32.xlu0 %v1856, 1
        %v1957 = vpop.permute.xlu0 %1956
        %1958 = vrot.lane.b32.xlu0 %v1855, 1
        %v1959 = vpop.permute.xlu0 %1958
        %1960 = vrot.lane.b32.xlu0 %v1857, 1
        %v1961 = vpop.permute.xlu0 %1960
        %v1962 = vsel %vm705, %v1955, %v1959
        %v1963 = vsel %vm705, %v1957, %v1961
        %v1964 = vsel %vm705, %v1959, %v1955
        %v1965 = vsel %vm705, %v1961, %v1957
        %v1966 = vld [vmem:[%s710] ss:$8 sm:$0x3]
        %v1968 = vlaneseq
        %v1969 = vshrl.u32 %v1968, 7
        %v1970 = vsub.s32 0, %v1969
        %v1971 = vrot.slane %v1966, %v1970
        %v1972 = vlaneseq
        %v1973 = vshrl.u32 %v1972, 7
        %v1974 = vsub.s32 1, %v1973
        %v1975 = vrot.slane %v1966, %v1974
        %v1978 = vmul.f32 %v1964, %v1971
        %v1979 = vmul.f32 %v1962, %v1975
        %v1980 = vmul.f32 %v1965, %v1971
        %v1981 = vmul.f32 %v1963, %v1975
        %1982 = vst [vmem:[#allocation2 + $0x60] sm:$0xff] %v1978
        %1983 = vst [vmem:[#allocation2 + $0x68] sm:$0xff] %v1979
        %1984 = vst [vmem:[#allocation2 + $0x70] sm:$0xff] %v1980
        %1985 = vst [vmem:[#allocation2 + $0x78] sm:$0xff] %v1981
        %v1986 = vld [vmem:[%s731] ss:$8 sm:$0x3]
        %v1988 = vlaneseq
        %v1989 = vshrl.u32 %v1988, 7
        %v1990 = vsub.s32 0, %v1989
        %v1991 = vrot.slane %v1986, %v1990
        %v1992 = vlaneseq
        %v1993 = vshrl.u32 %v1992, 7
        %v1994 = vsub.s32 1, %v1993
        %v1995 = vrot.slane %v1986, %v1994
        %v1998 = vmul.f32 %v1854, %v1991
        %v1999 = vmul.f32 %v1855, %v1995
        %v2000 = vmul.f32 %v1856, %v1991
        %v2001 = vmul.f32 %v1857, %v1995
        %2002 = vst [vmem:[#allocation2 + $0x80] sm:$0xff] %v1998
        %2003 = vst [vmem:[#allocation2 + $0x88] sm:$0xff] %v1999
        %2004 = vst [vmem:[#allocation2 + $0x90] sm:$0xff] %v2000
        %2005 = vst [vmem:[#allocation2 + $0x98] sm:$0xff] %v2001
        %2006 = vrot.lane.b32.xlu0 %v1854, 127
        %v2007 = vpop.permute.xlu0 %2006
        %2008 = vrot.lane.b32.xlu0 %v1856, 127
        %v2009 = vpop.permute.xlu0 %2008
        %2010 = vrot.lane.b32.xlu0 %v1855, 127
        %v2011 = vpop.permute.xlu0 %2010
        %2012 = vrot.lane.b32.xlu0 %v1857, 127
        %v2013 = vpop.permute.xlu0 %2012
        %v2014 = vsel %vm760, %v2007, %v2011
        %v2015 = vsel %vm760, %v2009, %v2013
        %v2016 = vsel %vm760, %v2011, %v2007
        %v2017 = vsel %vm760, %v2013, %v2009
        %v2018 = vld [vmem:[%s765] ss:$8 sm:$0x3]
        %v2020 = vlaneseq
        %v2021 = vshrl.u32 %v2020, 7
        %v2022 = vsub.s32 0, %v2021
        %v2023 = vrot.slane %v2018, %v2022
        %v2024 = vlaneseq
        %v2025 = vshrl.u32 %v2024, 7
        %v2026 = vsub.s32 1, %v2025
        %v2027 = vrot.slane %v2018, %v2026
        %v2030 = vmul.f32 %v2014, %v2023
        %v2031 = vmul.f32 %v2016, %v2027
        %v2032 = vmul.f32 %v2015, %v2023
        %v2033 = vmul.f32 %v2017, %v2027
        %2034 = vst [vmem:[#allocation2 + $0xa0] sm:$0xff] %v2030
        %2035 = vst [vmem:[#allocation2 + $0xa8] sm:$0xff] %v2031
        %2036 = vst [vmem:[#allocation2 + $0xb0] sm:$0xff] %v2032
        %2037 = vst [vmem:[#allocation2 + $0xb8] sm:$0xff] %v2033
        %2038 = vrot.lane.b32.xlu0 %v1854, 113
        %v2039 = vpop.permute.xlu0 %2038
        %2040 = vrot.lane.b32.xlu0 %v1856, 113
        %v2041 = vpop.permute.xlu0 %2040
        %2042 = vrot.lane.b32.xlu0 %v1855, 113
        %v2043 = vpop.permute.xlu0 %2042
        %2044 = vrot.lane.b32.xlu0 %v1857, 113
        %v2045 = vpop.permute.xlu0 %2044
        %v2046 = vsel %vm794, %v2039, %v2043
        %v2047 = vsel %vm794, %v2041, %v2045
        %v2048 = vsel %vm794, %v2043, %v2039
        %v2049 = vsel %vm794, %v2045, %v2041
        %v2050 = vld [vmem:[%s799] ss:$8 sm:$0x3]
        %v2052 = vlaneseq
        %v2053 = vshrl.u32 %v2052, 7
        %v2054 = vsub.s32 0, %v2053
        %v2055 = vrot.slane %v2050, %v2054
        %v2056 = vlaneseq
        %v2057 = vshrl.u32 %v2056, 7
        %v2058 = vsub.s32 1, %v2057
        %v2059 = vrot.slane %v2050, %v2058
        %v2062 = vmul.f32 %v2046, %v2055
        %v2063 = vmul.f32 %v2048, %v2059
        %v2064 = vmul.f32 %v2047, %v2055
        %v2065 = vmul.f32 %v2049, %v2059
        %2066 = vst [vmem:[#allocation2 + $0xc0] sm:$0xff] %v2062
        %2067 = vst [vmem:[#allocation2 + $0xc8] sm:$0xff] %v2063
        %2068 = vst [vmem:[#allocation2 + $0xd0] sm:$0xff] %v2064
        %2069 = vst [vmem:[#allocation2 + $0xd8] sm:$0xff] %v2065
        %2070 = vrot.lane.b32.xlu0 %v1854, 112
        %v2071 = vpop.permute.xlu0 %2070
        %2072 = vrot.lane.b32.xlu0 %v1856, 112
        %v2073 = vpop.permute.xlu0 %2072
        %2074 = vrot.lane.b32.xlu0 %v1855, 112
        %v2075 = vpop.permute.xlu0 %2074
        %2076 = vrot.lane.b32.xlu0 %v1857, 112
        %v2077 = vpop.permute.xlu0 %2076
        %v2078 = vsel %vm828, %v2071, %v2075
        %v2079 = vsel %vm828, %v2073, %v2077
        %v2080 = vsel %vm828, %v2075, %v2071
        %v2081 = vsel %vm828, %v2077, %v2073
        %v2082 = vld [vmem:[%s833] ss:$8 sm:$0x3]
        %v2084 = vlaneseq
        %v2085 = vshrl.u32 %v2084, 7
        %v2086 = vsub.s32 0, %v2085
        %v2087 = vrot.slane %v2082, %v2086
        %v2088 = vlaneseq
        %v2089 = vshrl.u32 %v2088, 7
        %v2090 = vsub.s32 1, %v2089
        %v2091 = vrot.slane %v2082, %v2090
        %v2094 = vmul.f32 %v2078, %v2087
        %v2095 = vmul.f32 %v2080, %v2091
        %v2096 = vmul.f32 %v2079, %v2087
        %v2097 = vmul.f32 %v2081, %v2091
        %2098 = vst [vmem:[#allocation2 + $0xe0] sm:$0xff] %v2094
        %2099 = vst [vmem:[#allocation2 + $0xe8] sm:$0xff] %v2095
        %2100 = vst [vmem:[#allocation2 + $0xf0] sm:$0xff] %v2096
        %2101 = vst [vmem:[#allocation2 + $0xf8] sm:$0xff] %v2097
        %2102 = vrot.lane.b32.xlu0 %v1854, 111
        %v2103 = vpop.permute.xlu0 %2102
        %2104 = vrot.lane.b32.xlu0 %v1856, 111
        %v2105 = vpop.permute.xlu0 %2104
        %2106 = vrot.lane.b32.xlu0 %v1855, 111
        %v2107 = vpop.permute.xlu0 %2106
        %2108 = vrot.lane.b32.xlu0 %v1857, 111
        %v2109 = vpop.permute.xlu0 %2108
        %v2110 = vsel %vm862, %v2103, %v2107
        %v2111 = vsel %vm862, %v2105, %v2109
        %v2112 = vsel %vm862, %v2107, %v2103
        %v2113 = vsel %vm862, %v2109, %v2105
        %v2114 = vld [vmem:[%s867] ss:$8 sm:$0x3]
        %v2116 = vlaneseq
        %v2117 = vshrl.u32 %v2116, 7
        %v2118 = vsub.s32 0, %v2117
        %v2119 = vrot.slane %v2114, %v2118
        %v2120 = vlaneseq
        %v2121 = vshrl.u32 %v2120, 7
        %v2122 = vsub.s32 1, %v2121
        %v2123 = vrot.slane %v2114, %v2122
        %v2126 = vmul.f32 %v2110, %v2119
        %v2127 = vmul.f32 %v2112, %v2123
        %v2128 = vmul.f32 %v2111, %v2119
        %v2129 = vmul.f32 %v2113, %v2123
        %2130 = vst [vmem:[#allocation2 + $0x100] sm:$0xff] %v2126
        %2131 = vst [vmem:[#allocation2 + $0x108] sm:$0xff] %v2127
        %2132 = vst [vmem:[#allocation2 + $0x110] sm:$0xff] %v2128
        %2133 = vst [vmem:[#allocation2 + $0x118] sm:$0xff] %v2129
        %v2134 = vld [vmem:[#allocation2] sm:$0xff]
        %v2135 = vld [vmem:[#allocation2 + $0x8] sm:$0xff]
        %v2136 = vld [vmem:[#allocation2 + $0x10] sm:$0xff]
        %v2137 = vld [vmem:[#allocation2 + $0x18] sm:$0xff]
        %v2138 = vld [vmem:[#allocation2 + $0x20] sm:$0xff]
        %v2139 = vld [vmem:[#allocation2 + $0x28] sm:$0xff]
        %v2140 = vld [vmem:[#allocation2 + $0x30] sm:$0xff]
        %v2141 = vld [vmem:[#allocation2 + $0x38] sm:$0xff]
        %v2142 = vld [vmem:[#allocation2 + $0x40] sm:$0xff]
        %v2143 = vld [vmem:[#allocation2 + $0x48] sm:$0xff]
        %v2144 = vld [vmem:[#allocation2 + $0x50] sm:$0xff]
        %v2145 = vld [vmem:[#allocation2 + $0x58] sm:$0xff]
        %v2146 = vld [vmem:[#allocation2 + $0x60] sm:$0xff]
        %v2147 = vld [vmem:[#allocation2 + $0x68] sm:$0xff]
        %v2148 = vld [vmem:[#allocation2 + $0x70] sm:$0xff]
        %v2149 = vld [vmem:[#allocation2 + $0x78] sm:$0xff]
        %v2150 = vld [vmem:[#allocation2 + $0x80] sm:$0xff]
        %v2151 = vld [vmem:[#allocation2 + $0x88] sm:$0xff]
        %v2152 = vld [vmem:[#allocation2 + $0x90] sm:$0xff]
        %v2153 = vld [vmem:[#allocation2 + $0x98] sm:$0xff]
        %v2154 = vld [vmem:[#allocation2 + $0xa0] sm:$0xff]
        %v2155 = vld [vmem:[#allocation2 + $0xa8] sm:$0xff]
        %v2156 = vld [vmem:[#allocation2 + $0xb0] sm:$0xff]
        %v2157 = vld [vmem:[#allocation2 + $0xb8] sm:$0xff]
        %v2158 = vld [vmem:[#allocation2 + $0xc0] sm:$0xff]
        %v2159 = vld [vmem:[#allocation2 + $0xc8] sm:$0xff]
        %v2160 = vld [vmem:[#allocation2 + $0xd0] sm:$0xff]
        %v2161 = vld [vmem:[#allocation2 + $0xd8] sm:$0xff]
        %v2162 = vld [vmem:[#allocation2 + $0xe0] sm:$0xff]
        %v2163 = vld [vmem:[#allocation2 + $0xe8] sm:$0xff]
        %v2164 = vld [vmem:[#allocation2 + $0xf0] sm:$0xff]
        %v2165 = vld [vmem:[#allocation2 + $0xf8] sm:$0xff]
        %v2166 = vld [vmem:[#allocation2 + $0x100] sm:$0xff]
        %v2167 = vld [vmem:[#allocation2 + $0x108] sm:$0xff]
        %v2168 = vld [vmem:[#allocation2 + $0x110] sm:$0xff]
        %v2169 = vld [vmem:[#allocation2 + $0x118] sm:$0xff]
        %v2170 = vld [vmem:[%s11] sm:$0xff]
        %v2171 = vld [vmem:[%s11 + $0x8] sm:$0xff]
        %v2172 = vld [vmem:[%s11 + $0x10] sm:$0xff]
        %v2173 = vld [vmem:[%s11 + $0x18] sm:$0xff]
        %v2174 = vld [vmem:[%s11 + $0x20] sm:$0xff]
        %v2175 = vld [vmem:[%s11 + $0x28] sm:$0xff]
        %v2176 = vld [vmem:[%s11 + $0x30] sm:$0xff]
        %v2177 = vld [vmem:[%s11 + $0x38] sm:$0xff]
        %v2178 = vld [vmem:[%s11 + $0x40] sm:$0xff]
        %v2179 = vld [vmem:[%s11 + $0x48] sm:$0xff]
        %v2180 = vld [vmem:[%s11 + $0x50] sm:$0xff]
        %v2181 = vld [vmem:[%s11 + $0x58] sm:$0xff]
        %v2182 = vld [vmem:[%s11 + $0x60] sm:$0xff]
        %v2183 = vld [vmem:[%s11 + $0x68] sm:$0xff]
        %v2184 = vld [vmem:[%s11 + $0x70] sm:$0xff]
        %v2185 = vld [vmem:[%s11 + $0x78] sm:$0xff]
        %v2186 = vld [vmem:[%s11 + $0x80] sm:$0xff]
        %v2187 = vld [vmem:[%s11 + $0x88] sm:$0xff]
        %2189 = vset.pattern.permute.xlu0 0
        %2190 = vperm.xlu0 %2189, %v2170
        %v2191 = vpop.permute.xlu0 %2190
        %2194 = vset.pattern.permute.xlu0 0
        %2195 = vperm.xlu0 %2194, %v2171
        %v2196 = vpop.permute.xlu0 %2195
        %2199 = vset.pattern.permute.xlu0 0
        %2200 = vperm.xlu0 %2199, %v2172
        %v2201 = vpop.permute.xlu0 %2200
        %2204 = vset.pattern.permute.xlu0 0
        %2205 = vperm.xlu0 %2204, %v2173
        %v2206 = vpop.permute.xlu0 %2205
        %2209 = vset.pattern.permute.xlu0 0
        %2210 = vperm.xlu0 %2209, %v2174
        %v2211 = vpop.permute.xlu0 %2210
        %2214 = vset.pattern.permute.xlu0 0
        %2215 = vperm.xlu0 %2214, %v2175
        %v2216 = vpop.permute.xlu0 %2215
        %2219 = vset.pattern.permute.xlu0 0
        %2220 = vperm.xlu0 %2219, %v2176
        %v2221 = vpop.permute.xlu0 %2220
        %2224 = vset.pattern.permute.xlu0 0
        %2225 = vperm.xlu0 %2224, %v2177
        %v2226 = vpop.permute.xlu0 %2225
        %2229 = vset.pattern.permute.xlu0 0
        %2230 = vperm.xlu0 %2229, %v2178
        %v2231 = vpop.permute.xlu0 %2230
        %2234 = vset.pattern.permute.xlu0 0
        %2235 = vperm.xlu0 %2234, %v2179
        %v2236 = vpop.permute.xlu0 %2235
        %2239 = vset.pattern.permute.xlu0 0
        %2240 = vperm.xlu0 %2239, %v2180
        %v2241 = vpop.permute.xlu0 %2240
        %2244 = vset.pattern.permute.xlu0 0
        %2245 = vperm.xlu0 %2244, %v2181
        %v2246 = vpop.permute.xlu0 %2245
        %2249 = vset.pattern.permute.xlu0 0
        %2250 = vperm.xlu0 %2249, %v2182
        %v2251 = vpop.permute.xlu0 %2250
        %2254 = vset.pattern.permute.xlu0 0
        %2255 = vperm.xlu0 %2254, %v2183
        %v2256 = vpop.permute.xlu0 %2255
        %2259 = vset.pattern.permute.xlu0 0
        %2260 = vperm.xlu0 %2259, %v2184
        %v2261 = vpop.permute.xlu0 %2260
        %2264 = vset.pattern.permute.xlu0 0
        %2265 = vperm.xlu0 %2264, %v2185
        %v2266 = vpop.permute.xlu0 %2265
        %2269 = vset.pattern.permute.xlu0 0
        %2270 = vperm.xlu0 %2269, %v2186
        %v2271 = vpop.permute.xlu0 %2270
        %2274 = vset.pattern.permute.xlu0 0
        %2275 = vperm.xlu0 %2274, %v2187
        %v2276 = vpop.permute.xlu0 %2275
        %v2278 = vmul.f32 %v2134, %v2191
        %v2279 = vmul.f32 %v2135, %v2191
        %v2280 = vmul.f32 %v2136, %v2196
        %v2281 = vmul.f32 %v2137, %v2196
        %v2282 = vmul.f32 %v2138, %v2201
        %v2283 = vmul.f32 %v2139, %v2201
        %v2284 = vmul.f32 %v2140, %v2206
        %v2285 = vmul.f32 %v2141, %v2206
        %v2286 = vmul.f32 %v2142, %v2211
        %v2287 = vmul.f32 %v2143, %v2211
        %v2288 = vmul.f32 %v2144, %v2216
        %v2289 = vmul.f32 %v2145, %v2216
        %v2290 = vmul.f32 %v2146, %v2221
        %v2291 = vmul.f32 %v2147, %v2221
        %v2292 = vmul.f32 %v2148, %v2226
        %v2293 = vmul.f32 %v2149, %v2226
        %v2294 = vmul.f32 %v2150, %v2231
        %v2295 = vmul.f32 %v2151, %v2231
        %v2296 = vmul.f32 %v2152, %v2236
        %v2297 = vmul.f32 %v2153, %v2236
        %v2298 = vmul.f32 %v2154, %v2241
        %v2299 = vmul.f32 %v2155, %v2241
        %v2300 = vmul.f32 %v2156, %v2246
        %v2301 = vmul.f32 %v2157, %v2246
        %v2302 = vmul.f32 %v2158, %v2251
        %v2303 = vmul.f32 %v2159, %v2251
        %v2304 = vmul.f32 %v2160, %v2256
        %v2305 = vmul.f32 %v2161, %v2256
        %v2306 = vmul.f32 %v2162, %v2261
        %v2307 = vmul.f32 %v2163, %v2261
        %v2308 = vmul.f32 %v2164, %v2266
        %v2309 = vmul.f32 %v2165, %v2266
        %v2310 = vmul.f32 %v2166, %v2271
        %v2311 = vmul.f32 %v2167, %v2271
        %v2312 = vmul.f32 %v2168, %v2276
        %v2313 = vmul.f32 %v2169, %v2276
        %v2314 = vadd.f32 %v2278, %v2280
        %v2315 = vadd.f32 %v2314, %v2282
        %v2316 = vadd.f32 %v2315, %v2284
        %v2317 = vadd.f32 %v2316, %v2286
        %v2318 = vadd.f32 %v2317, %v2288
        %v2319 = vadd.f32 %v2318, %v2290
        %v2320 = vadd.f32 %v2319, %v2292
        %v2321 = vadd.f32 %v2320, %v2294
        %v2322 = vadd.f32 %v2321, %v2296
        %v2323 = vadd.f32 %v2322, %v2298
        %v2324 = vadd.f32 %v2323, %v2300
        %v2325 = vadd.f32 %v2324, %v2302
        %v2326 = vadd.f32 %v2325, %v2304
        %v2327 = vadd.f32 %v2326, %v2306
        %v2328 = vadd.f32 %v2327, %v2308
        %v2329 = vadd.f32 %v2328, %v2310
        %v2330 = vadd.f32 %v2329, %v2312
        %v2331 = vrot.slane %v2330, 4
        %v2332 = vadd.f32 %v2330, %v2331
        %v2333 = vrot.slane %v2332, 2
        %v2334 = vadd.f32 %v2332, %v2333
        %v2335 = vrot.slane %v2334, 1
        %v2336 = vadd.f32 %v2334, %v2335
        %v2337 = vadd.f32 %v2279, %v2281
        %v2338 = vadd.f32 %v2337, %v2283
        %v2339 = vadd.f32 %v2338, %v2285
        %v2340 = vadd.f32 %v2339, %v2287
        %v2341 = vadd.f32 %v2340, %v2289
        %v2342 = vadd.f32 %v2341, %v2291
        %v2343 = vadd.f32 %v2342, %v2293
        %v2344 = vadd.f32 %v2343, %v2295
        %v2345 = vadd.f32 %v2344, %v2297
        %v2346 = vadd.f32 %v2345, %v2299
        %v2347 = vadd.f32 %v2346, %v2301
        %v2348 = vadd.f32 %v2347, %v2303
        %v2349 = vadd.f32 %v2348, %v2305
        %v2350 = vadd.f32 %v2349, %v2307
        %v2351 = vadd.f32 %v2350, %v2309
        %v2352 = vadd.f32 %v2351, %v2311
        %v2353 = vadd.f32 %v2352, %v2313
        %v2354 = vrot.slane %v2353, 4
        %v2355 = vadd.f32 %v2353, %v2354
        %v2356 = vrot.slane %v2355, 2
        %v2357 = vadd.f32 %v2355, %v2356
        %v2358 = vrot.slane %v2357, 1
        %v2359 = vadd.f32 %v2357, %v2358
        %v2360 = vld [vmem:[#allocation3] sm:$0x1]
        %2362 = vset.pattern.permute.xlu0 0
        %2363 = vperm.xlu0 %2362, %v2360
        %v2364 = vpop.permute.xlu0 %2363
        %v2366 = vlaneseq
        %v2367 = vshrl.u32 %v2366, 7
        %v2368 = vsub.s32 0, %v2367
        %v2369 = vrot.slane %v2364, %v2368
        %v2370 = vadd.f32 %v2336, %v2369
        %v2371 = vadd.f32 %v2359, %v2369
        %v2374 = vcombine.low %v2370, %v2371
        %v2376 = vunpack.c.l.s4 1966171168
        %v2377 = vunpack.c.0.s8 %v2376
        %v2378 = vlaneseq
        %v2379 = vshrl.u32 %v2378, 7
        %v2380 = vsub.s32 %v2377, %v2379
        %v2381 = vrot.slane %v2374, %v2380
        %v2383 = vunpack.c.l.s4 1966171168
        %v2384 = vunpack.c.0.s8 %v2383
        %v2385 = vlaneseq
        %v2386 = vshrl.u32 %v2385, 7
        %v2387 = vsub.s32 %v2384, %v2386
        %v2388 = vrot.slane %v2381, %v2387
        %v2390 = vadd.f32 %v458, %v2388
        %v2391 = vlaneseq
        %vm2392 = vcmp.ge.s32.totalorder %v2391, 0
        %vm2393 = vcmp.lt.s32.totalorder %v2391, 256
        %vm2394 = vmand %vm2392, %vm2393
        %2395 = vst.msk [vmem:[%s448] sm:$0x3] %vm2394, %v2390
        %s2396 = sand.u32 %s320, 1
        %s2397 = scalar_lea.sflag [#allocation5], %s2396
        %s2398 = sand.u32 %s320, 1
        %s2399 = smul.addr %s2398, 2
        %s2400 = scalar_lea.vmem [#allocation4], %s2399
        // Predicated region
        $region73: #{tpu_custom_call.1} parent=71 // pred_check
          %p2401 = pneg %p330
        $region74: #{tpu_custom_call.1} parent=71 // pred_check_branch
          %2403 = sbr.rel (%p2401) target = $region76
        $region75: #{tpu_custom_call.1} parent=71 // pred_region
          %s2405 = ssub.s32 32, 32
          %2406 = vsyncadd %s2397, %s2405
          %s2407 = smul.addr %s29, 2
          %s2408 = smul.addr %s2407, 16
          %s2409 = scalar_lea.hbm %s13, %s2408
          %s2411 = sshll.u32 %s2400, 4
          %s2412 = int_to_ptr.vmem [resolvable:$true] %s2411
          %2414 = dma.vmem_to_hbm [thread:$0]  %s2412, 32, %s2409, %s2397
        $region76: #{tpu_custom_call.1} parent=71 // pred_fallthru
          _
      $region72: #{tpu_custom_call.1} parent=5 // pred_fallthru
        _
      %p2415 = scmp.le.s32.totalorder 2, %s24
      // Predicated region
      $region77: #{tpu_custom_call.1} parent=5 // pred_check
        %p2416 = pneg %p2415
      $region78: #{tpu_custom_call.1} parent=5 // pred_check_branch
        %2418 = sbr.rel (%p2416) target = $region80
      $region79: #{tpu_custom_call.1} parent=5 // pred_region
        %s2419 = ssub.s32 %s24, 2
        // Predicated region
        $region81: #{tpu_custom_call.1} parent=79 // pred_check
          %p2420 = pneg %p336
        $region82: #{tpu_custom_call.1} parent=79 // pred_check_branch
          %2422 = sbr.rel (%p2420) target = $region84
        $region83: #{tpu_custom_call.1} parent=79 // pred_region
          %s2423 = sand.u32 %s321, 1
          %s2424 = scalar_lea.sflag [#allocation5], %s2423
          %s2425 = sand.u32 %s321, 1
          %s2426 = smul.addr %s2425, 2
          %s2427 = scalar_lea.vmem [#allocation4], %s2426
          %2428 = dma.done %s2424, 32
        $region84: #{tpu_custom_call.1} parent=79 // pred_fallthru
          _
      $region80: #{tpu_custom_call.1} parent=5 // pred_fallthru
        _
    $region6: #{tpu_custom_call.1} parent=1 // loop_footer
      %s28 = sadd.s32 1, %s24
    $region7: #{tpu_custom_call.1} parent=1 // loop_footer_branch
      %23 = sbr.rel target = $region3
    $region8: #{tpu_custom_call.1} parent=1 // loop_exit
      _
    %2429 = vsyncpa [#allocation5], 1
    %s2430 = scalar_lea.sflag [#allocation5], 1
    %2431 = vsyncpa %s2430, 1

</llo_original>
